<compile_context>
chip_gen: v6e
topology: v6e:2x2x1
jax: 0.10.0
libtpu: 0.0.40
codegen_flags: <defaults>
</compile_context>

<pallas_src>
import functools

import jax
import jax.numpy as jnp
from jax import lax
from jax.experimental import pallas as pl
from jax.experimental.pallas import tpu as pltpu


# --------------------------------------------------------------------------
# Conv2d (+folded BN) (+optional SE input gate) (+optional residual) (+ReLU)
# --------------------------------------------------------------------------

def _conv_tap_kernel(x_ref, w_ref, g_ref, b_ref, *rest,
                     kw, stride, ow, relu, has_residual):
    if has_residual:
        res_ref, o_ref, acc_ref = rest
    else:
        o_ref, acc_ref = rest
        res_ref = None

    i = pl.program_id(2)                      # tap row index (reduction axis)

    @pl.when(i == 0)
    def _():
        acc_ref[...] = jnp.zeros_like(acc_ref)

    # One padded input row, phase-split over W:  (stride, Wq, Cin).
    # Apply the per-(batch, input-channel) SE gate (ones when ungated) in f32,
    # round back to bf16 so the MXU runs its native bf16 path.
    xb = x_ref[0, 0].astype(jnp.float32) * g_ref[0]          # (s, Wq, Cin) f32

    total = jnp.zeros(acc_ref.shape, jnp.float32)
    for j in range(kw):                                       # static unroll (kw <= 7)
        d, ph = j // stride, j % stride
        seg = xb[ph, d:d + ow, :].astype(jnp.bfloat16)        # (OW, Cin)
        wt = w_ref[i * kw + j]                                # (Cin, Cout) bf16
        total = total + jnp.dot(seg, wt, preferred_element_type=jnp.float32)
    acc_ref[...] += total

    @pl.when(i == pl.num_programs(2) - 1)
    def _():
        r = acc_ref[...] + b_ref[0]                           # folded BN bias
        if has_residual:
            r = r + res_ref[0, 0].astype(jnp.float32)         # fused resblk shortcut
        if relu:
            r = jnp.maximum(r, 0.0)
        o_ref[0, 0] = r.astype(o_ref.dtype)


def conv_bn_act(x, w_taps, bias, *, kh, kw, stride, pad,
                gate=None, residual=None, relu=True):
    """x: (N,H,W,Cin) bf16.  w_taps: (kh*kw, Cin, Cout) bf16 (BN folded).
    bias: (1,1,Cout) f32 (BN folded).  gate: (N,1,Cin) f32 SE gate or None.
    residual: (N,OH,OW,Cout) bf16 or None.  Returns (N,OH,OW,Cout) bf16."""
    N, H, W, Cin = x.shape
    Cout = w_taps.shape[-1]
    OH = (H + 2 * pad - kh) // stride + 1
    OW = (W + 2 * pad - kw) // stride + 1
    Hp = H + 2 * pad
    Wq = -(-(W + 2 * pad) // stride)
    extra_w = Wq * stride - (W + 2 * pad)

    # Spatial zero-pad + split W into (phase, Wq) so every tap inside the kernel is
    # a *static contiguous* slice (no strided loads, no HBM im2col).
    xp = jnp.pad(x, ((0, 0), (pad, pad), (pad, pad + extra_w), (0, 0)))
    xr = xp.reshape(N, Hp, Wq, stride, Cin).transpose(0, 1, 3, 2, 4)  # (N,Hp,s,Wq,Cin)

    if gate is None:
        gate = jnp.ones((N, 1, Cin), jnp.float32)

    in_specs = [
        pl.BlockSpec((1, 1, stride, Wq, Cin),
                     lambda n, oh, i: (n, oh * stride + i, 0, 0, 0)),
        pl.BlockSpec((kh * kw, Cin, Cout), lambda n, oh, i: (0, 0, 0)),
        pl.BlockSpec((1, 1, Cin), lambda n, oh, i: (n, 0, 0)),
        pl.BlockSpec((1, 1, Cout), lambda n, oh, i: (0, 0, 0)),
    ]
    args = [xr, w_taps, gate, bias]
    if residual is not None:
        in_specs.append(pl.BlockSpec((1, 1, OW, Cout), lambda n, oh, i: (n, oh, 0, 0)))
        args.append(residual)

    kernel = functools.partial(_conv_tap_kernel, kw=kw, stride=stride, ow=OW,
                               relu=relu, has_residual=residual is not None)
    return pl.pallas_call(
        kernel,
        out_shape=jax.ShapeDtypeStruct((N, OH, OW, Cout), jnp.bfloat16),
        grid=(N, OH, kh),
        in_specs=in_specs,
        out_specs=pl.BlockSpec((1, 1, OW, Cout), lambda n, oh, i: (n, oh, 0, 0)),
        scratch_shapes=[pltpu.VMEM((OW, Cout), jnp.float32)],
        compiler_params=pltpu.CompilerParams(
            dimension_semantics=("parallel", "parallel", "arbitrary")),
    )(*args)


# --------------------------------------------------------------------------
# SE block: tiled global-avg-pool + fc1/ReLU/fc2/sigmoid -> (N,1,C) gate
# (the x*gate multiply is fused into the consumer kernel)
# --------------------------------------------------------------------------

def _se_gate_kernel(y_ref, w1_ref, w2_ref, g_ref, acc_ref, *, hw, thw):
    t = pl.program_id(1)

    @pl.when(t == 0)
    def _():
        acc_ref[...] = jnp.zeros_like(acc_ref)

    y = y_ref[0].astype(jnp.float32)                                   # (thw, C)
    rows = t * thw + lax.broadcasted_iota(jnp.int32, (thw, 1), 0)
    acc_ref[...] += jnp.sum(jnp.where(rows < hw, y, 0.0), axis=0, keepdims=True)

    @pl.when(t == pl.num_programs(1) - 1)
    def _():
        m = acc_ref[...] * (1.0 / hw)                                  # (1, C)
        h = jnp.maximum(jnp.dot(m, w1_ref[...],
                                preferred_element_type=jnp.float32), 0.0)
        g_ref[0] = jax.nn.sigmoid(jnp.dot(h, w2_ref[...],
                                          preferred_element_type=jnp.float32))


def se_gate(y, w1, w2, thw_max=1024):
    """y: (N,OH,OW,C) bf16 -> SE gate (N,1,C) f32."""
    N, OH, OW, C = y.shape
    HW = OH * OW
    thw = HW if HW <= thw_max else thw_max
    Cr = w1.shape[1]
    return pl.pallas_call(
        functools.partial(_se_gate_kernel, hw=HW, thw=thw),
        out_shape=jax.ShapeDtypeStruct((N, 1, C), jnp.float32),
        grid=(N, pl.cdiv(HW, thw)),
        in_specs=[pl.BlockSpec((1, thw, C), lambda n, t: (n, t, 0)),
                  pl.BlockSpec((C, Cr), lambda n, t: (0, 0)),
                  pl.BlockSpec((Cr, C), lambda n, t: (0, 0))],
        out_specs=pl.BlockSpec((1, 1, C), lambda n, t: (n, 0, 0)),
        scratch_shapes=[pltpu.VMEM((1, C), jnp.float32)],
        compiler_params=pltpu.CompilerParams(
            dimension_semantics=("parallel", "arbitrary")),
    )(y.reshape(N, HW, C), w1, w2)


# --------------------------------------------------------------------------
# Fused tail: SE(64) + Flatten + Linear(flat,64) + Dropout + Linear(64,1)
# fc1@fc2 is pre-folded to wf:(HW,C); kernel does one pass over y accumulating
# sum(y) and sum(y*wf) per channel, then applies the SE gate algebraically.
# --------------------------------------------------------------------------

def _se_fc_tail_kernel(y_ref, wf_ref, w1_ref, w2_ref, o_ref,
                       sum_ref, dot_ref, *, hw, thw):
    t = pl.program_id(1)

    @pl.when(t == 0)
    def _():
        sum_ref[...] = jnp.zeros_like(sum_ref)
        dot_ref[...] = jnp.zeros_like(dot_ref)

    y = y_ref[0].astype(jnp.float32)                                   # (thw, C)
    wf = wf_ref[...].astype(jnp.float32)                               # (thw, C)
    rows = t * thw + lax.broadcasted_iota(jnp.int32, (thw, 1), 0)
    valid = rows < hw
    sum_ref[...] += jnp.sum(jnp.where(valid, y, 0.0), axis=0, keepdims=True)
    dot_ref[...] += jnp.sum(jnp.where(valid, y * wf, 0.0), axis=0, keepdims=True)

    @pl.when(t == pl.num_programs(1) - 1)
    def _():
        m = sum_ref[...] * (1.0 / hw)
        h = jnp.maximum(jnp.dot(m, w1_ref[...],
                                preferred_element_type=jnp.float32), 0.0)
        g = jax.nn.sigmoid(jnp.dot(h, w2_ref[...],
                                   preferred_element_type=jnp.float32))
        o_ref[0] = dot_ref[...] * g                                    # (1, C)


def se_fc_tail(y, wf, w1, w2, thw_max=1024):
    """y: (N,OH,OW,C) bf16, wf: (OH*OW,C) bf16 -> per-channel contributions (N,1,C)."""
    N, OH, OW, C = y.shape
    HW = OH * OW
    thw = HW if HW <= thw_max else thw_max
    Cr = w1.shape[1]
    return pl.pallas_call(
        functools.partial(_se_fc_tail_kernel, hw=HW, thw=thw),
        out_shape=jax.ShapeDtypeStruct((N, 1, C), jnp.float32),
        grid=(N, pl.cdiv(HW, thw)),
        in_specs=[pl.BlockSpec((1, thw, C), lambda n, t: (n, t, 0)),
                  pl.BlockSpec((thw, C), lambda n, t: (t, 0)),
                  pl.BlockSpec((C, Cr), lambda n, t: (0, 0)),
                  pl.BlockSpec((Cr, C), lambda n, t: (0, 0))],
        out_specs=pl.BlockSpec((1, 1, C), lambda n, t: (n, 0, 0)),
        scratch_shapes=[pltpu.VMEM((1, C), jnp.float32),
                        pltpu.VMEM((1, C), jnp.float32)],
        compiler_params=pltpu.CompilerParams(
            dimension_semantics=("parallel", "arbitrary")),
    )(y.reshape(N, HW, C), wf, w1, w2)


# ------------------------------ param prep ---------------------------------

def bn_fold(bn, eps=1e-5):
    gamma, beta, mean, var = bn
    scale = gamma / jnp.sqrt(var + eps)
    shift = beta - mean * scale
    return scale, shift


def prep_conv(w_oihw, bias, bn):
    """Fold BN into the conv; lay weights out as (kh*kw taps, Cin, Cout) bf16."""
    scale, shift = bn_fold(bn)
    cout, cin, kh, kw = w_oihw.shape
    w = jnp.transpose(w_oihw, (2, 3, 1, 0)).reshape(kh * kw, cin, cout)
    w = (w * scale).astype(jnp.bfloat16)
    b = shift if bias is None else bias * scale + shift
    return w, b.reshape(1, 1, cout).astype(jnp.float32)


def prepare_params(raw, oh, ow):
    p = {}
    p["conv1_w"], p["conv1_b"] = prep_conv(raw["conv1_w"], raw["conv1_b"], raw["bn1"])
    p["conv2_w"], p["conv2_b"] = prep_conv(raw["conv2_w"], raw["conv2_b"], raw["bn2"])
    p["rb1_w"], p["rb1_b"] = prep_conv(raw["rb_conv1_w"], None, raw["rb_bn1"])
    p["rb2_w"], p["rb2_b"] = prep_conv(raw["rb_conv2_w"], None, raw["rb_bn2"])
    p["se1_w1"], p["se1_w2"] = raw["se1_w1"], raw["se1_w2"]
    p["se2_w1"], p["se2_w2"] = raw["se2_w1"], raw["se2_w2"]
    # fc1(flat,64) -> Dropout(identity) -> fc2(64,1): fold to one (flat,1) weight and a
    # scalar bias; permute rows from torch's (C,H,W) flatten order to NHWC (H,W,C).
    w1 = raw["fc1_w"].T                       # (flat, 64)
    w2 = raw["fc2_w"].T                       # (64, 1)
    wfold = w1 @ w2                           # (flat, 1) in CHW order
    c = 64
    p["fc_w"] = (wfold.reshape(c, oh, ow).transpose(1, 2, 0)
                 .reshape(oh * ow, c).astype(jnp.bfloat16))
    p["fc_b"] = raw["fc1_b"] @ w2 + raw["fc2_b"]          # (1,)
    return p


# ------------------------------ forward pass --------------------------------

def tudu_forward(x_nchw, p):
    x = jnp.transpose(x_nchw, (0, 2, 3, 1)).astype(jnp.bfloat16)       # NCHW -> NHWC

    # Conv(3,64,7,s2,p3) + folded BN + ReLU (Dropout = identity in eval)
    y1 = conv_bn_act(x, p["conv1_w"], p["conv1_b"], kh=7, kw=7, stride=2, pad=3)
    # SE(64): compute gate; the x*gate multiply is fused into the next conv
    g1 = se_gate(y1, p["se1_w1"], p["se1_w2"])
    # Conv(64,64,5,s2,p3) + folded BN + ReLU, with fused SE1 input gate
    y2 = conv_bn_act(y1, p["conv2_w"], p["conv2_b"], kh=5, kw=5, stride=2, pad=3,
                     gate=g1)
    # resblk(64,64,1): identity shortcut; residual add + ReLU fused into 2nd conv
    z = conv_bn_act(y2, p["rb1_w"], p["rb1_b"], kh=3, kw=3, stride=1, pad=1)
    y3 = conv_bn_act(z, p["rb2_w"], p["rb2_b"], kh=3, kw=3, stride=1, pad=1,
                     residual=y2, relu=True)
    # SE(64) + Flatten + Linear(flat,64) + Dropout + Linear(64,1) -- one fused kernel
    contrib = se_fc_tail(y3, p["fc_w"], p["se2_w1"], p["se2_w2"])      # (N,1,C)
    return jnp.sum(contrib, axis=2) + p["fc_b"]                        # (N,1)


# -------------------------- deterministic params ----------------------------

def init_params(key, flat_dim):
    ks = iter(jax.random.split(key, 40))

    def nrm(shape, scale=0.05):
        return scale * jax.random.normal(next(ks), shape, jnp.float32)

    def bn_params():
        gamma = 1.0 + 0.1 * jax.random.normal(next(ks), (64,), jnp.float32)
        beta = 0.1 * jax.random.normal(next(ks), (64,), jnp.float32)
        mean = 0.1 * jax.random.normal(next(ks), (64,), jnp.float32)
        var = 1.0 + 0.1 * jnp.abs(jax.random.normal(next(ks), (64,), jnp.float32))
        return (gamma, beta, mean, var)

    p = {}
    p["conv1_w"] = nrm((64, 3, 7, 7))
    p["conv1_b"] = nrm((64,))
    p["bn1"] = bn_params()
    p["se1_w1"] = nrm((64, 4))           # torch Linear(64,4).weight.T
    p["se1_w2"] = nrm((4, 64))           # torch Linear(4,64).weight.T
    p["conv2_w"] = nrm((64, 64, 5, 5))
    p["conv2_b"] = nrm((64,))
    p["bn2"] = bn_params()
    p["rb_conv1_w"] = nrm((64, 64, 3, 3))
    p["rb_bn1"] = bn_params()
    p["rb_conv2_w"] = nrm((64, 64, 3, 3))
    p["rb_bn2"] = bn_params()
    p["se2_w1"] = nrm((64, 4))
    p["se2_w2"] = nrm((4, 64))
    p["fc1_w"] = nrm((64, flat_dim))     # Linear(flat_dim,64).weight
    p["fc1_b"] = nrm((64,))
    p["fc2_w"] = nrm((1, 64))            # Linear(64,1).weight
    p["fc2_b"] = nrm((1,))
    return p


# --------------------------- pure-JAX reference -----------------------------
# lax.conv-based reference at matched bf16 storage precision.  It does its own BN
# folding / weight layouts / fc folding from the RAW params, so it independently
# exercises the layout transforms and the Pallas data paths; remaining differences
# are f32 accumulation order only.

def ref_forward(x_nchw, raw):
    f32, bf16 = jnp.float32, jnp.bfloat16
    x = jnp.transpose(x_nchw, (0, 2, 3, 1)).astype(bf16)

    def conv(xb, w_oihw, bias, bn, stride, pad, residual=None, relu=True):
        scale, shift = bn_fold(bn)
        w = (jnp.transpose(w_oihw, (2, 3, 1, 0)) * scale).astype(bf16)   # HWIO, folded
        b = shift if bias is None else bias * scale + shift
        y = lax.conv_general_dilated(
            xb, w, (stride, stride), [(pad, pad), (pad, pad)],
            dimension_numbers=("NHWC", "HWIO", "NHWC"),
            preferred_element_type=f32) + b
        if residual is not None:
            y = y + residual.astype(f32)
        if relu:
            y = jnp.maximum(y, 0.0)
        return y.astype(bf16)

    def gate(yb, w1, w2):
        m = jnp.mean(yb.astype(f32), axis=(1, 2))
        h = jnp.maximum(m @ w1, 0.0)
        return jax.nn.sigmoid(h @ w2)                                    # (N, C) f32

    y1 = conv(x, raw["conv1_w"], raw["conv1_b"], raw["bn1"], 2, 3)
    g1 = gate(y1, raw["se1_w1"], raw["se1_w2"])
    y1g = (y1.astype(f32) * g1[:, None, None, :]).astype(bf16)
    y2 = conv(y1g, raw["conv2_w"], raw["conv2_b"], raw["bn2"], 2, 3)
    z = conv(y2, raw["rb_conv1_w"], None, raw["rb_bn1"], 1, 1)
    y3 = conv(z, raw["rb_conv2_w"], None, raw["rb_bn2"], 1, 1, residual=y2)
    g2 = gate(y3, raw["se2_w1"], raw["se2_w2"])
    yg = y3.astype(f32) * g2[:, None, None, :]
    # torch Flatten is over (C,H,W); fc1/fc2 fold to one (flat,1) weight
    wfold = (raw["fc1_w"].T @ raw["fc2_w"].T).astype(bf16).astype(f32)   # (flat, 1)
    bfold = raw["fc1_b"] @ raw["fc2_w"].T + raw["fc2_b"]                 # (1,)
    flat = jnp.transpose(yg, (0, 3, 1, 2)).reshape(x.shape[0], -1)
    return flat @ wfold + bfold


# ----------------------------------- main ------------------------------------

if __name__ == "__main__":
    key = jax.random.PRNGKey(0)
    kx, kp = jax.random.split(key)

    # Toy input; spatial trace: 16 -> 8 (conv1 s2) -> 5 (conv2 s2) -> 5 (resblk s1)
    x = jax.random.normal(kx, (2, 3, 16, 16), jnp.float32)
    flat_dim = 64 * 5 * 5   # stands in for Linear(2334784,64) of the full 760x760 input
    raw = init_params(kp, flat_dim)
    params = prepare_params(raw, oh=5, ow=5)

    fwd = jax.jit(tudu_forward)
    out = jax.block_until_ready(fwd(x, params))
    assert out.shape == (2, 1), out.shape

    ref = ref_forward(x, raw)
    # bf16 storage precision on both paths; tolerance covers accumulation-order and
    # transcendental-implementation differences only.
    if not jnp.allclose(out, ref, rtol=2e-2, atol=2e-2):
        raise AssertionError(f"mismatch vs reference: {out} vs {ref}")

    print("KERNEL_OK")
</pallas_src>

<mosaic_0001>
module attributes {stable_mosaic.version = 11 : i64} {
  func.func @_conv_tap_kernel(%arg0: i32, %arg1: i32, %arg2: i32, %arg3: memref<1x1x2x11x3xbf16, #tpu.memory_space<vmem>>, %arg4: memref<49x3x64xbf16, #tpu.memory_space<vmem>>, %arg5: memref<1x1x3xf32, #tpu.memory_space<vmem>>, %arg6: memref<1x1x64xf32, #tpu.memory_space<vmem>>, %arg7: memref<1x1x8x64xbf16, #tpu.memory_space<vmem>>, %arg8: memref<8x64xf32, #tpu.memory_space<vmem>>) attributes {dimension_semantics = [#tpu.dimension_semantics<parallel>, #tpu.dimension_semantics<parallel>, #tpu.dimension_semantics<arbitrary>], iteration_bounds = array<i64: 2, 8, 7>, scalar_prefetch = 0 : i64, scratch_operands = 1 : i64, tpu.core_type = #tpu.core_type<tc>, window_params = [{transform_indices = @transform_0, window_bounds = array<i64: 1, 1, 2, 11, 3>}, {pipeline_mode = #tpu.pipeline_mode<synchronous>, transform_indices = @transform_1, window_bounds = array<i64: 49, 3, 64>}, {transform_indices = @transform_2, window_bounds = array<i64: 1, 1, 3>}, {pipeline_mode = #tpu.pipeline_mode<synchronous>, transform_indices = @transform_3, window_bounds = array<i64: 1, 1, 64>}, {transform_indices = @transform_4, window_bounds = array<i64: 1, 1, 8, 64>}]} {
    %c0_i32 = arith.constant 0 : i32
    %0 = arith.cmpi eq, %arg2, %c0_i32 : i32
    %1 = arith.extui %0 : i1 to i32
    %c0_i32_0 = arith.constant 0 : i32
    %2 = arith.cmpi ne, %1, %c0_i32_0 : i32
    scf.if %2 {
      %cst_42 = arith.constant 0.000000e+00 : f32
      %88 = vector.broadcast %cst_42 : f32 to vector<8x64xf32>
      %c0_43 = arith.constant 0 : index
      %c0_44 = arith.constant 0 : index
      %89 = vector.load %arg8[%c0_43, %c0_44] : memref<8x64xf32, #tpu.memory_space<vmem>>, vector<8x64xf32>
      tpu.vector_store %arg8[%c0_43, %c0_44], %88 {strides = array<i32>} : memref<8x64xf32, #tpu.memory_space<vmem>>, vector<8x64xf32>,
    } else {
    }
    %c0 = arith.constant 0 : index
    %c0_1 = arith.constant 0 : index
    %c0_2 = arith.constant 0 : index
    %c0_3 = arith.constant 0 : index
    %c0_4 = arith.constant 0 : index
    %3 = vector.load %arg3[%c0, %c0_1, %c0_2, %c0_3, %c0_4] : memref<1x1x2x11x3xbf16, #tpu.memory_space<vmem>>, vector<1x1x2x11x3xbf16>
    %4 = vector.shape_cast %3 : vector<1x1x2x11x3xbf16> to vector<2x11x3xbf16>
    %5 = arith.extf %4 : vector<2x11x3xbf16> to vector<2x11x3xf32>
    %c0_5 = arith.constant 0 : index
    %c0_6 = arith.constant 0 : index
    %c0_7 = arith.constant 0 : index
    %6 = vector.load %arg5[%c0_5, %c0_6, %c0_7] : memref<1x1x3xf32, #tpu.memory_space<vmem>>, vector<1x1x3xf32>
    %7 = vector.shape_cast %6 : vector<1x1x3xf32> to vector<1x3xf32>
    %8 = vector.shape_cast %7 : vector<1x3xf32> to vector<1x1x3xf32>
    %9 = vector.broadcast %8 : vector<1x1x3xf32> to vector<2x11x3xf32>
    %10 = arith.mulf %5, %9 : vector<2x11x3xf32>
    %cst = arith.constant 0.000000e+00 : f32
    %11 = vector.broadcast %cst : f32 to vector<8x64xf32>
    %12 = vector.extract_strided_slice %10 {offsets = [0, 0, 0], sizes = [1, 8, 3], strides = [1, 1, 1]} : vector<2x11x3xf32> to vector<1x8x3xf32>
    %13 = vector.shape_cast %12 : vector<1x8x3xf32> to vector<8x3xf32>
    %14 = arith.truncf %13 : vector<8x3xf32> to vector<8x3xbf16>
    %c7_i32 = arith.constant 7 : i32
    %15 = arith.muli %arg2, %c7_i32 : i32
    %c0_i32_8 = arith.constant 0 : i32
    %16 = arith.addi %15, %c0_i32_8 : i32
    %17 = arith.index_cast %16 : i32 to index
    %c0_9 = arith.constant 0 : index
    %c0_10 = arith.constant 0 : index
    %18 = vector.load %arg4[%17, %c0_9, %c0_10] : memref<49x3x64xbf16, #tpu.memory_space<vmem>>, vector<1x3x64xbf16>
    %19 = vector.shape_cast %18 : vector<1x3x64xbf16> to vector<3x64xbf16>
    %cst_11 = arith.constant dense<0.000000e+00> : vector<8x64xf32>
    %20 = tpu.matmul %14, %19, %cst_11 {dimension_numbers = #tpu.dot_dimension_numbers<[1], [0], [0], [1], [0, 0, 1, 1], [], []>} : vector<8x3xbf16>, vector<3x64xbf16>, vector<8x64xf32> -> vector<8x64xf32>
    %21 = arith.addf %11, %20 : vector<8x64xf32>
    %22 = vector.extract_strided_slice %10 {offsets = [1, 0, 0], sizes = [1, 8, 3], strides = [1, 1, 1]} : vector<2x11x3xf32> to vector<1x8x3xf32>
    %23 = vector.shape_cast %22 : vector<1x8x3xf32> to vector<8x3xf32>
    %24 = arith.truncf %23 : vector<8x3xf32> to vector<8x3xbf16>
    %c7_i32_12 = arith.constant 7 : i32
    %25 = arith.muli %arg2, %c7_i32_12 : i32
    %c1_i32 = arith.constant 1 : i32
    %26 = arith.addi %25, %c1_i32 : i32
    %27 = arith.index_cast %26 : i32 to index
    %c0_13 = arith.constant 0 : index
    %c0_14 = arith.constant 0 : index
    %28 = vector.load %arg4[%27, %c0_13, %c0_14] : memref<49x3x64xbf16, #tpu.memory_space<vmem>>, vector<1x3x64xbf16>
    %29 = vector.shape_cast %28 : vector<1x3x64xbf16> to vector<3x64xbf16>
    %cst_15 = arith.constant dense<0.000000e+00> : vector<8x64xf32>
    %30 = tpu.matmul %24, %29, %cst_15 {dimension_numbers = #tpu.dot_dimension_numbers<[1], [0], [0], [1], [0, 0, 1, 1], [], []>} : vector<8x3xbf16>, vector<3x64xbf16>, vector<8x64xf32> -> vector<8x64xf32>
    %31 = arith.addf %21, %30 : vector<8x64xf32>
    %32 = vector.extract_strided_slice %10 {offsets = [0, 1, 0], sizes = [1, 8, 3], strides = [1, 1, 1]} : vector<2x11x3xf32> to vector<1x8x3xf32>
    %33 = vector.shape_cast %32 : vector<1x8x3xf32> to vector<8x3xf32>
    %34 = arith.truncf %33 : vector<8x3xf32> to vector<8x3xbf16>
    %c7_i32_16 = arith.constant 7 : i32
    %35 = arith.muli %arg2, %c7_i32_16 : i32
    %c2_i32 = arith.constant 2 : i32
    %36 = arith.addi %35, %c2_i32 : i32
    %37 = arith.index_cast %36 : i32 to index
    %c0_17 = arith.constant 0 : index
    %c0_18 = arith.constant 0 : index
    %38 = vector.load %arg4[%37, %c0_17, %c0_18] : memref<49x3x64xbf16, #tpu.memory_space<vmem>>, vector<1x3x64xbf16>
    %39 = vector.shape_cast %38 : vector<1x3x64xbf16> to vector<3x64xbf16>
    %cst_19 = arith.constant dense<0.000000e+00> : vector<8x64xf32>
    %40 = tpu.matmul %34, %39, %cst_19 {dimension_numbers = #tpu.dot_dimension_numbers<[1], [0], [0], [1], [0, 0, 1, 1], [], []>} : vector<8x3xbf16>, vector<3x64xbf16>, vector<8x64xf32> -> vector<8x64xf32>
    %41 = arith.addf %31, %40 : vector<8x64xf32>
    %42 = vector.extract_strided_slice %10 {offsets = [1, 1, 0], sizes = [1, 8, 3], strides = [1, 1, 1]} : vector<2x11x3xf32> to vector<1x8x3xf32>
    %43 = vector.shape_cast %42 : vector<1x8x3xf32> to vector<8x3xf32>
    %44 = arith.truncf %43 : vector<8x3xf32> to vector<8x3xbf16>
    %c7_i32_20 = arith.constant 7 : i32
    %45 = arith.muli %arg2, %c7_i32_20 : i32
    %c3_i32 = arith.constant 3 : i32
    %46 = arith.addi %45, %c3_i32 : i32
    %47 = arith.index_cast %46 : i32 to index
    %c0_21 = arith.constant 0 : index
    %c0_22 = arith.constant 0 : index
    %48 = vector.load %arg4[%47, %c0_21, %c0_22] : memref<49x3x64xbf16, #tpu.memory_space<vmem>>, vector<1x3x64xbf16>
    %49 = vector.shape_cast %48 : vector<1x3x64xbf16> to vector<3x64xbf16>
    %cst_23 = arith.constant dense<0.000000e+00> : vector<8x64xf32>
    %50 = tpu.matmul %44, %49, %cst_23 {dimension_numbers = #tpu.dot_dimension_numbers<[1], [0], [0], [1], [0, 0, 1, 1], [], []>} : vector<8x3xbf16>, vector<3x64xbf16>, vector<8x64xf32> -> vector<8x64xf32>
    %51 = arith.addf %41, %50 : vector<8x64xf32>
    %52 = vector.extract_strided_slice %10 {offsets = [0, 2, 0], sizes = [1, 8, 3], strides = [1, 1, 1]} : vector<2x11x3xf32> to vector<1x8x3xf32>
    %53 = vector.shape_cast %52 : vector<1x8x3xf32> to vector<8x3xf32>
    %54 = arith.truncf %53 : vector<8x3xf32> to vector<8x3xbf16>
    %c7_i32_24 = arith.constant 7 : i32
    %55 = arith.muli %arg2, %c7_i32_24 : i32
    %c4_i32 = arith.constant 4 : i32
    %56 = arith.addi %55, %c4_i32 : i32
    %57 = arith.index_cast %56 : i32 to index
    %c0_25 = arith.constant 0 : index
    %c0_26 = arith.constant 0 : index
    %58 = vector.load %arg4[%57, %c0_25, %c0_26] : memref<49x3x64xbf16, #tpu.memory_space<vmem>>, vector<1x3x64xbf16>
    %59 = vector.shape_cast %58 : vector<1x3x64xbf16> to vector<3x64xbf16>
    %cst_27 = arith.constant dense<0.000000e+00> : vector<8x64xf32>
    %60 = tpu.matmul %54, %59, %cst_27 {dimension_numbers = #tpu.dot_dimension_numbers<[1], [0], [0], [1], [0, 0, 1, 1], [], []>} : vector<8x3xbf16>, vector<3x64xbf16>, vector<8x64xf32> -> vector<8x64xf32>
    %61 = arith.addf %51, %60 : vector<8x64xf32>
    %62 = vector.extract_strided_slice %10 {offsets = [1, 2, 0], sizes = [1, 8, 3], strides = [1, 1, 1]} : vector<2x11x3xf32> to vector<1x8x3xf32>
    %63 = vector.shape_cast %62 : vector<1x8x3xf32> to vector<8x3xf32>
    %64 = arith.truncf %63 : vector<8x3xf32> to vector<8x3xbf16>
    %c7_i32_28 = arith.constant 7 : i32
    %65 = arith.muli %arg2, %c7_i32_28 : i32
    %c5_i32 = arith.constant 5 : i32
    %66 = arith.addi %65, %c5_i32 : i32
    %67 = arith.index_cast %66 : i32 to index
    %c0_29 = arith.constant 0 : index
    %c0_30 = arith.constant 0 : index
    %68 = vector.load %arg4[%67, %c0_29, %c0_30] : memref<49x3x64xbf16, #tpu.memory_space<vmem>>, vector<1x3x64xbf16>
    %69 = vector.shape_cast %68 : vector<1x3x64xbf16> to vector<3x64xbf16>
    %cst_31 = arith.constant dense<0.000000e+00> : vector<8x64xf32>
    %70 = tpu.matmul %64, %69, %cst_31 {dimension_numbers = #tpu.dot_dimension_numbers<[1], [0], [0], [1], [0, 0, 1, 1], [], []>} : vector<8x3xbf16>, vector<3x64xbf16>, vector<8x64xf32> -> vector<8x64xf32>
    %71 = arith.addf %61, %70 : vector<8x64xf32>
    %72 = vector.extract_strided_slice %10 {offsets = [0, 3, 0], sizes = [1, 8, 3], strides = [1, 1, 1]} : vector<2x11x3xf32> to vector<1x8x3xf32>
    %73 = vector.shape_cast %72 : vector<1x8x3xf32> to vector<8x3xf32>
    %74 = arith.truncf %73 : vector<8x3xf32> to vector<8x3xbf16>
    %c7_i32_32 = arith.constant 7 : i32
    %75 = arith.muli %arg2, %c7_i32_32 : i32
    %c6_i32 = arith.constant 6 : i32
    %76 = arith.addi %75, %c6_i32 : i32
    %77 = arith.index_cast %76 : i32 to index
    %c0_33 = arith.constant 0 : index
    %c0_34 = arith.constant 0 : index
    %78 = vector.load %arg4[%77, %c0_33, %c0_34] : memref<49x3x64xbf16, #tpu.memory_space<vmem>>, vector<1x3x64xbf16>
    %79 = vector.shape_cast %78 : vector<1x3x64xbf16> to vector<3x64xbf16>
    %cst_35 = arith.constant dense<0.000000e+00> : vector<8x64xf32>
    %80 = tpu.matmul %74, %79, %cst_35 {dimension_numbers = #tpu.dot_dimension_numbers<[1], [0], [0], [1], [0, 0, 1, 1], [], []>} : vector<8x3xbf16>, vector<3x64xbf16>, vector<8x64xf32> -> vector<8x64xf32>
    %81 = arith.addf %71, %80 : vector<8x64xf32>
    %c0_36 = arith.constant 0 : index
    %c0_37 = arith.constant 0 : index
    %82 = vector.load %arg8[%c0_36, %c0_37] : memref<8x64xf32, #tpu.memory_space<vmem>>, vector<8x64xf32>
    %83 = arith.addf %82, %81 : vector<8x64xf32>
    %c0_38 = arith.constant 0 : index
    %c0_39 = arith.constant 0 : index
    %84 = vector.load %arg8[%c0_38, %c0_39] : memref<8x64xf32, #tpu.memory_space<vmem>>, vector<8x64xf32>
    tpu.vector_store %arg8[%c0_38, %c0_39], %83 {strides = array<i32>} : memref<8x64xf32, #tpu.memory_space<vmem>>, vector<8x64xf32>,
    %c6_i32_40 = arith.constant 6 : i32
    %85 = arith.cmpi eq, %arg2, %c6_i32_40 : i32
    %86 = arith.extui %85 : i1 to i32
    %c0_i32_41 = arith.constant 0 : i32
    %87 = arith.cmpi ne, %86, %c0_i32_41 : i32
    scf.if %87 {
      %c0_42 = arith.constant 0 : index
      %c0_43 = arith.constant 0 : index
      %88 = vector.load %arg8[%c0_42, %c0_43] : memref<8x64xf32, #tpu.memory_space<vmem>>, vector<8x64xf32>
      %c0_44 = arith.constant 0 : index
      %c0_45 = arith.constant 0 : index
      %c0_46 = arith.constant 0 : index
      %89 = vector.load %arg6[%c0_44, %c0_45, %c0_46] : memref<1x1x64xf32, #tpu.memory_space<vmem>>, vector<1x1x64xf32>
      %90 = vector.shape_cast %89 : vector<1x1x64xf32> to vector<1x64xf32>
      %91 = vector.broadcast %90 : vector<1x64xf32> to vector<8x64xf32>
      %92 = arith.addf %88, %91 : vector<8x64xf32>
      %cst_47 = arith.constant 0.000000e+00 : f32
      %93 = vector.broadcast %cst_47 : f32 to vector<8x64xf32>
      %94 = arith.maximumf %92, %93 : vector<8x64xf32>
      %95 = arith.truncf %94 : vector<8x64xf32> to vector<8x64xbf16>
      %c0_48 = arith.constant 0 : index
      %c0_49 = arith.constant 0 : index
      %c0_50 = arith.constant 0 : index
      %c0_51 = arith.constant 0 : index
      %96 = vector.load %arg7[%c0_48, %c0_49, %c0_50, %c0_51] : memref<1x1x8x64xbf16, #tpu.memory_space<vmem>>, vector<1x1x8x64xbf16>
      %97 = vector.shape_cast %96 : vector<1x1x8x64xbf16> to vector<8x64xbf16>
      %98 = vector.shape_cast %95 : vector<8x64xbf16> to vector<1x1x8x64xbf16>
      tpu.vector_store %arg7[%c0_48, %c0_49, %c0_50, %c0_51], %98 {strides = array<i32>} : memref<1x1x8x64xbf16, #tpu.memory_space<vmem>>, vector<1x1x8x64xbf16>,
    } else {
    }
    return
  }
  func.func @transform_0(%arg0: i32, %arg1: i32, %arg2: i32) -> (i32, i32, i32, i32, i32) {
    %c2_i32 = arith.constant 2 : i32
    %0 = arith.muli %arg1, %c2_i32 : i32
    %1 = arith.addi %0, %arg2 : i32
    %c0_i32 = arith.constant 0 : i32
    %c0_i32_0 = arith.constant 0 : i32
    %c0_i32_1 = arith.constant 0 : i32
    %c0_i32_2 = arith.constant 0 : i32
    return %arg0, %1, %c0_i32, %c0_i32_0, %c0_i32_1 : i32, i32, i32, i32, i32
  }
  func.func @transform_1(%arg0: i32, %arg1: i32, %arg2: i32) -> (i32, i32, i32) {
    %c0_i32 = arith.constant 0 : i32
    %c0_i32_0 = arith.constant 0 : i32
    %c0_i32_1 = arith.constant 0 : i32
    %c0_i32_2 = arith.constant 0 : i32
    return %c0_i32, %c0_i32_0, %c0_i32_1 : i32, i32, i32
  }
  func.func @transform_2(%arg0: i32, %arg1: i32, %arg2: i32) -> (i32, i32, i32) {
    %c0_i32 = arith.constant 0 : i32
    %c0_i32_0 = arith.constant 0 : i32
    %c0_i32_1 = arith.constant 0 : i32
    return %arg0, %c0_i32, %c0_i32_0 : i32, i32, i32
  }
  func.func @transform_3(%arg0: i32, %arg1: i32, %arg2: i32) -> (i32, i32, i32) {
    %c0_i32 = arith.constant 0 : i32
    %c0_i32_0 = arith.constant 0 : i32
    %c0_i32_1 = arith.constant 0 : i32
    %c0_i32_2 = arith.constant 0 : i32
    return %c0_i32, %c0_i32_0, %c0_i32_1 : i32, i32, i32
  }
  func.func @transform_4(%arg0: i32, %arg1: i32, %arg2: i32) -> (i32, i32, i32, i32) {
    %c0_i32 = arith.constant 0 : i32
    %c0_i32_0 = arith.constant 0 : i32
    %c0_i32_1 = arith.constant 0 : i32
    return %arg0, %arg1, %c0_i32, %c0_i32_0 : i32, i32, i32, i32
  }
}

module attributes {stable_mosaic.version = 11 : i64} {
  func.func @_se_gate_kernel(%arg0: i32, %arg1: i32, %arg2: memref<1x64x64xbf16, #tpu.memory_space<vmem>>, %arg3: memref<64x4xf32, #tpu.memory_space<vmem>>, %arg4: memref<4x64xf32, #tpu.memory_space<vmem>>, %arg5: memref<1x1x64xf32, #tpu.memory_space<vmem>>, %arg6: memref<1x64xf32, #tpu.memory_space<vmem>>) attributes {dimension_semantics = [#tpu.dimension_semantics<parallel>, #tpu.dimension_semantics<arbitrary>], iteration_bounds = array<i64: 2, 1>, scalar_prefetch = 0 : i64, scratch_operands = 1 : i64, tpu.core_type = #tpu.core_type<tc>, window_params = [{transform_indices = @transform_0, window_bounds = array<i64: 1, 64, 64>}, {pipeline_mode = #tpu.pipeline_mode<synchronous>, transform_indices = @transform_1, window_bounds = array<i64: 64, 4>}, {pipeline_mode = #tpu.pipeline_mode<synchronous>, transform_indices = @transform_2, window_bounds = array<i64: 4, 64>}, {transform_indices = @transform_3, window_bounds = array<i64: 1, 1, 64>}]} {
    %c0_i32 = arith.constant 0 : i32
    %0 = arith.cmpi eq, %arg1, %c0_i32 : i32
    %1 = arith.extui %0 : i1 to i32
    %c0_i32_0 = arith.constant 0 : i32
    %2 = arith.cmpi ne, %1, %c0_i32_0 : i32
    scf.if %2 {
      %cst_11 = arith.constant 0.000000e+00 : f32
      %24 = vector.broadcast %cst_11 : f32 to vector<1x64xf32>
      %c0_12 = arith.constant 0 : index
      %c0_13 = arith.constant 0 : index
      %25 = vector.load %arg6[%c0_12, %c0_13] : memref<1x64xf32, #tpu.memory_space<vmem>>, vector<1x64xf32>
      tpu.vector_store %arg6[%c0_12, %c0_13], %24 {strides = array<i32>} : memref<1x64xf32, #tpu.memory_space<vmem>>, vector<1x64xf32>,
    } else {
    }
    %c0 = arith.constant 0 : index
    %c0_1 = arith.constant 0 : index
    %c0_2 = arith.constant 0 : index
    %3 = vector.load %arg2[%c0, %c0_1, %c0_2] : memref<1x64x64xbf16, #tpu.memory_space<vmem>>, vector<1x64x64xbf16>
    %4 = vector.shape_cast %3 : vector<1x64x64xbf16> to vector<64x64xbf16>
    %5 = arith.extf %4 : vector<64x64xbf16> to vector<64x64xf32>
    %c64_i32 = arith.constant 64 : i32
    %6 = arith.muli %arg1, %c64_i32 : i32
    %7 = tpu.iota {dimensions = array<i32: 0>} : vector<64x1xi32>
    %8 = vector.broadcast %6 : i32 to vector<64x1xi32>
    %9 = arith.addi %8, %7 : vector<64x1xi32>
    %c0_3 = arith.constant 0 : index
    %c0_4 = arith.constant 0 : index
    %10 = vector.load %arg6[%c0_3, %c0_4] : memref<1x64xf32, #tpu.memory_space<vmem>>, vector<1x64xf32>
    %c64_i32_5 = arith.constant 64 : i32
    %11 = vector.broadcast %c64_i32_5 : i32 to vector<64x1xi32>
    %12 = arith.cmpi slt, %9, %11 : vector<64x1xi32>
    %cst = arith.constant 0.000000e+00 : f32
    %13 = vector.shape_cast %12 : vector<64x1xi1> to vector<64x1xi1>
    %14 = vector.broadcast %13 : vector<64x1xi1> to vector<64x64xi1>
    %15 = vector.broadcast %cst : f32 to vector<64x64xf32>
    %16 = arith.select %14, %5, %15 : vector<64x64xi1>, vector<64x64xf32>
    %cst_6 = arith.constant dense<0.000000e+00> : vector<64xf32>
    %17 = vector.multi_reduction <add>, %16, %cst_6 [0] : vector<64x64xf32> to vector<64xf32>
    %18 = vector.shape_cast %17 : vector<64xf32> to vector<1x64xf32>
    %19 = arith.addf %10, %18 : vector<1x64xf32>
    %c0_7 = arith.constant 0 : index
    %c0_8 = arith.constant 0 : index
    %20 = vector.load %arg6[%c0_7, %c0_8] : memref<1x64xf32, #tpu.memory_space<vmem>>, vector<1x64xf32>
    tpu.vector_store %arg6[%c0_7, %c0_8], %19 {strides = array<i32>} : memref<1x64xf32, #tpu.memory_space<vmem>>, vector<1x64xf32>,
    %c0_i32_9 = arith.constant 0 : i32
    %21 = arith.cmpi eq, %arg1, %c0_i32_9 : i32
    %22 = arith.extui %21 : i1 to i32
    %c0_i32_10 = arith.constant 0 : i32
    %23 = arith.cmpi ne, %22, %c0_i32_10 : i32
    scf.if %23 {
      %c0_11 = arith.constant 0 : index
      %c0_12 = arith.constant 0 : index
      %24 = vector.load %arg6[%c0_11, %c0_12] : memref<1x64xf32, #tpu.memory_space<vmem>>, vector<1x64xf32>
      %cst_13 = arith.constant 1.562500e-02 : f32
      %25 = vector.broadcast %cst_13 : f32 to vector<1x64xf32>
      %26 = arith.mulf %24, %25 : vector<1x64xf32>
      %c0_14 = arith.constant 0 : index
      %c0_15 = arith.constant 0 : index
      %27 = vector.load %arg3[%c0_14, %c0_15] : memref<64x4xf32, #tpu.memory_space<vmem>>, vector<64x4xf32>
      %cst_16 = arith.constant dense<0.000000e+00> : vector<1x4xf32>
      %28 = tpu.matmul %26, %27, %cst_16 {dimension_numbers = #tpu.dot_dimension_numbers<[1], [0], [0], [1], [0, 0, 1, 1], [], []>} : vector<1x64xf32>, vector<64x4xf32>, vector<1x4xf32> -> vector<1x4xf32>
      %cst_17 = arith.constant 0.000000e+00 : f32
      %29 = vector.broadcast %cst_17 : f32 to vector<1x4xf32>
      %30 = arith.maximumf %28, %29 : vector<1x4xf32>
      %c0_18 = arith.constant 0 : index
      %c0_19 = arith.constant 0 : index
      %31 = vector.load %arg4[%c0_18, %c0_19] : memref<4x64xf32, #tpu.memory_space<vmem>>, vector<4x64xf32>
      %cst_20 = arith.constant dense<0.000000e+00> : vector<1x64xf32>
      %32 = tpu.matmul %30, %31, %cst_20 {dimension_numbers = #tpu.dot_dimension_numbers<[1], [0], [0], [1], [0, 0, 1, 1], [], []>} : vector<1x4xf32>, vector<4x64xf32>, vector<1x64xf32> -> vector<1x64xf32>
      %33 = arith.negf %32 : vector<1x64xf32>
      %34 = math.exp %33 : vector<1x64xf32>
      %cst_21 = arith.constant 1.000000e+00 : f32
      %35 = vector.broadcast %cst_21 : f32 to vector<1x64xf32>
      %36 = arith.addf %35, %34 : vector<1x64xf32>
      %37 = arith.divf %35, %36 : vector<1x64xf32>
      %c0_22 = arith.constant 0 : index
      %c0_23 = arith.constant 0 : index
      %c0_24 = arith.constant 0 : index
      %38 = vector.load %arg5[%c0_22, %c0_23, %c0_24] : memref<1x1x64xf32, #tpu.memory_space<vmem>>, vector<1x1x64xf32>
      %39 = vector.shape_cast %38 : vector<1x1x64xf32> to vector<1x64xf32>
      %40 = vector.shape_cast %37 : vector<1x64xf32> to vector<1x1x64xf32>
      tpu.vector_store %arg5[%c0_22, %c0_23, %c0_24], %40 {strides = array<i32>} : memref<1x1x64xf32, #tpu.memory_space<vmem>>, vector<1x1x64xf32>,
    } else {
    }
    return
  }
  func.func @transform_0(%arg0: i32, %arg1: i32) -> (i32, i32, i32) {
    %c0_i32 = arith.constant 0 : i32
    %c0_i32_0 = arith.constant 0 : i32
    return %arg0, %arg1, %c0_i32 : i32, i32, i32
  }
  func.func @transform_1(%arg0: i32, %arg1: i32) -> (i32, i32) {
    %c0_i32 = arith.constant 0 : i32
    %c0_i32_0 = arith.constant 0 : i32
    %c0_i32_1 = arith.constant 0 : i32
    return %c0_i32, %c0_i32_0 : i32, i32
  }
  func.func @transform_2(%arg0: i32, %arg1: i32) -> (i32, i32) {
    %c0_i32 = arith.constant 0 : i32
    %c0_i32_0 = arith.constant 0 : i32
    %c0_i32_1 = arith.constant 0 : i32
    return %c0_i32, %c0_i32_0 : i32, i32
  }
  func.func @transform_3(%arg0: i32, %arg1: i32) -> (i32, i32, i32) {
    %c0_i32 = arith.constant 0 : i32
    %c0_i32_0 = arith.constant 0 : i32
    %c0_i32_1 = arith.constant 0 : i32
    return %arg0, %c0_i32, %c0_i32_0 : i32, i32, i32
  }
}

module attributes {stable_mosaic.version = 11 : i64} {
  func.func @_conv_tap_kernel(%arg0: i32, %arg1: i32, %arg2: i32, %arg3: memref<1x1x2x7x64xbf16, #tpu.memory_space<vmem>>, %arg4: memref<25x64x64xbf16, #tpu.memory_space<vmem>>, %arg5: memref<1x1x64xf32, #tpu.memory_space<vmem>>, %arg6: memref<1x1x64xf32, #tpu.memory_space<vmem>>, %arg7: memref<1x1x5x64xbf16, #tpu.memory_space<vmem>>, %arg8: memref<5x64xf32, #tpu.memory_space<vmem>>) attributes {dimension_semantics = [#tpu.dimension_semantics<parallel>, #tpu.dimension_semantics<parallel>, #tpu.dimension_semantics<arbitrary>], iteration_bounds = array<i64: 2, 5, 5>, scalar_prefetch = 0 : i64, scratch_operands = 1 : i64, tpu.core_type = #tpu.core_type<tc>, window_params = [{transform_indices = @transform_0, window_bounds = array<i64: 1, 1, 2, 7, 64>}, {pipeline_mode = #tpu.pipeline_mode<synchronous>, transform_indices = @transform_1, window_bounds = array<i64: 25, 64, 64>}, {transform_indices = @transform_2, window_bounds = array<i64: 1, 1, 64>}, {pipeline_mode = #tpu.pipeline_mode<synchronous>, transform_indices = @transform_3, window_bounds = array<i64: 1, 1, 64>}, {transform_indices = @transform_4, window_bounds = array<i64: 1, 1, 5, 64>}]} {
    %c0_i32 = arith.constant 0 : i32
    %0 = arith.cmpi eq, %arg2, %c0_i32 : i32
    %1 = arith.extui %0 : i1 to i32
    %c0_i32_0 = arith.constant 0 : i32
    %2 = arith.cmpi ne, %1, %c0_i32_0 : i32
    scf.if %2 {
      %cst_34 = arith.constant 0.000000e+00 : f32
      %68 = vector.broadcast %cst_34 : f32 to vector<5x64xf32>
      %c0_35 = arith.constant 0 : index
      %c0_36 = arith.constant 0 : index
      %69 = vector.load %arg8[%c0_35, %c0_36] : memref<5x64xf32, #tpu.memory_space<vmem>>, vector<5x64xf32>
      tpu.vector_store %arg8[%c0_35, %c0_36], %68 {strides = array<i32>} : memref<5x64xf32, #tpu.memory_space<vmem>>, vector<5x64xf32>,
    } else {
    }
    %c0 = arith.constant 0 : index
    %c0_1 = arith.constant 0 : index
    %c0_2 = arith.constant 0 : index
    %c0_3 = arith.constant 0 : index
    %c0_4 = arith.constant 0 : index
    %3 = vector.load %arg3[%c0, %c0_1, %c0_2, %c0_3, %c0_4] : memref<1x1x2x7x64xbf16, #tpu.memory_space<vmem>>, vector<1x1x2x7x64xbf16>
    %4 = vector.shape_cast %3 : vector<1x1x2x7x64xbf16> to vector<2x7x64xbf16>
    %5 = arith.extf %4 : vector<2x7x64xbf16> to vector<2x7x64xf32>
    %c0_5 = arith.constant 0 : index
    %c0_6 = arith.constant 0 : index
    %c0_7 = arith.constant 0 : index
    %6 = vector.load %arg5[%c0_5, %c0_6, %c0_7] : memref<1x1x64xf32, #tpu.memory_space<vmem>>, vector<1x1x64xf32>
    %7 = vector.shape_cast %6 : vector<1x1x64xf32> to vector<1x64xf32>
    %8 = vector.shape_cast %7 : vector<1x64xf32> to vector<1x1x64xf32>
    %9 = vector.broadcast %8 : vector<1x1x64xf32> to vector<2x7x64xf32>
    %10 = arith.mulf %5, %9 : vector<2x7x64xf32>
    %cst = arith.constant 0.000000e+00 : f32
    %11 = vector.broadcast %cst : f32 to vector<5x64xf32>
    %12 = vector.extract_strided_slice %10 {offsets = [0, 0, 0], sizes = [1, 5, 64], strides = [1, 1, 1]} : vector<2x7x64xf32> to vector<1x5x64xf32>
    %13 = vector.shape_cast %12 : vector<1x5x64xf32> to vector<5x64xf32>
    %14 = arith.truncf %13 : vector<5x64xf32> to vector<5x64xbf16>
    %c5_i32 = arith.constant 5 : i32
    %15 = arith.muli %arg2, %c5_i32 : i32
    %c0_i32_8 = arith.constant 0 : i32
    %16 = arith.addi %15, %c0_i32_8 : i32
    %17 = arith.index_cast %16 : i32 to index
    %c0_9 = arith.constant 0 : index
    %c0_10 = arith.constant 0 : index
    %18 = vector.load %arg4[%17, %c0_9, %c0_10] : memref<25x64x64xbf16, #tpu.memory_space<vmem>>, vector<1x64x64xbf16>
    %19 = vector.shape_cast %18 : vector<1x64x64xbf16> to vector<64x64xbf16>
    %cst_11 = arith.constant dense<0.000000e+00> : vector<5x64xf32>
    %20 = tpu.matmul %14, %19, %cst_11 {dimension_numbers = #tpu.dot_dimension_numbers<[1], [0], [0], [1], [0, 0, 1, 1], [], []>} : vector<5x64xbf16>, vector<64x64xbf16>, vector<5x64xf32> -> vector<5x64xf32>
    %21 = arith.addf %11, %20 : vector<5x64xf32>
    %22 = vector.extract_strided_slice %10 {offsets = [1, 0, 0], sizes = [1, 5, 64], strides = [1, 1, 1]} : vector<2x7x64xf32> to vector<1x5x64xf32>
    %23 = vector.shape_cast %22 : vector<1x5x64xf32> to vector<5x64xf32>
    %24 = arith.truncf %23 : vector<5x64xf32> to vector<5x64xbf16>
    %c5_i32_12 = arith.constant 5 : i32
    %25 = arith.muli %arg2, %c5_i32_12 : i32
    %c1_i32 = arith.constant 1 : i32
    %26 = arith.addi %25, %c1_i32 : i32
    %27 = arith.index_cast %26 : i32 to index
    %c0_13 = arith.constant 0 : index
    %c0_14 = arith.constant 0 : index
    %28 = vector.load %arg4[%27, %c0_13, %c0_14] : memref<25x64x64xbf16, #tpu.memory_space<vmem>>, vector<1x64x64xbf16>
    %29 = vector.shape_cast %28 : vector<1x64x64xbf16> to vector<64x64xbf16>
    %cst_15 = arith.constant dense<0.000000e+00> : vector<5x64xf32>
    %30 = tpu.matmul %24, %29, %cst_15 {dimension_numbers = #tpu.dot_dimension_numbers<[1], [0], [0], [1], [0, 0, 1, 1], [], []>} : vector<5x64xbf16>, vector<64x64xbf16>, vector<5x64xf32> -> vector<5x64xf32>
    %31 = arith.addf %21, %30 : vector<5x64xf32>
    %32 = vector.extract_strided_slice %10 {offsets = [0, 1, 0], sizes = [1, 5, 64], strides = [1, 1, 1]} : vector<2x7x64xf32> to vector<1x5x64xf32>
    %33 = vector.shape_cast %32 : vector<1x5x64xf32> to vector<5x64xf32>
    %34 = arith.truncf %33 : vector<5x64xf32> to vector<5x64xbf16>
    %c5_i32_16 = arith.constant 5 : i32
    %35 = arith.muli %arg2, %c5_i32_16 : i32
    %c2_i32 = arith.constant 2 : i32
    %36 = arith.addi %35, %c2_i32 : i32
    %37 = arith.index_cast %36 : i32 to index
    %c0_17 = arith.constant 0 : index
    %c0_18 = arith.constant 0 : index
    %38 = vector.load %arg4[%37, %c0_17, %c0_18] : memref<25x64x64xbf16, #tpu.memory_space<vmem>>, vector<1x64x64xbf16>
    %39 = vector.shape_cast %38 : vector<1x64x64xbf16> to vector<64x64xbf16>
    %cst_19 = arith.constant dense<0.000000e+00> : vector<5x64xf32>
    %40 = tpu.matmul %34, %39, %cst_19 {dimension_numbers = #tpu.dot_dimension_numbers<[1], [0], [0], [1], [0, 0, 1, 1], [], []>} : vector<5x64xbf16>, vector<64x64xbf16>, vector<5x64xf32> -> vector<5x64xf32>
    %41 = arith.addf %31, %40 : vector<5x64xf32>
    %42 = vector.extract_strided_slice %10 {offsets = [1, 1, 0], sizes = [1, 5, 64], strides = [1, 1, 1]} : vector<2x7x64xf32> to vector<1x5x64xf32>
    %43 = vector.shape_cast %42 : vector<1x5x64xf32> to vector<5x64xf32>
    %44 = arith.truncf %43 : vector<5x64xf32> to vector<5x64xbf16>
    %c5_i32_20 = arith.constant 5 : i32
    %45 = arith.muli %arg2, %c5_i32_20 : i32
    %c3_i32 = arith.constant 3 : i32
    %46 = arith.addi %45, %c3_i32 : i32
    %47 = arith.index_cast %46 : i32 to index
    %c0_21 = arith.constant 0 : index
    %c0_22 = arith.constant 0 : index
    %48 = vector.load %arg4[%47, %c0_21, %c0_22] : memref<25x64x64xbf16, #tpu.memory_space<vmem>>, vector<1x64x64xbf16>
    %49 = vector.shape_cast %48 : vector<1x64x64xbf16> to vector<64x64xbf16>
    %cst_23 = arith.constant dense<0.000000e+00> : vector<5x64xf32>
    %50 = tpu.matmul %44, %49, %cst_23 {dimension_numbers = #tpu.dot_dimension_numbers<[1], [0], [0], [1], [0, 0, 1, 1], [], []>} : vector<5x64xbf16>, vector<64x64xbf16>, vector<5x64xf32> -> vector<5x64xf32>
    %51 = arith.addf %41, %50 : vector<5x64xf32>
    %52 = vector.extract_strided_slice %10 {offsets = [0, 2, 0], sizes = [1, 5, 64], strides = [1, 1, 1]} : vector<2x7x64xf32> to vector<1x5x64xf32>
    %53 = vector.shape_cast %52 : vector<1x5x64xf32> to vector<5x64xf32>
    %54 = arith.truncf %53 : vector<5x64xf32> to vector<5x64xbf16>
    %c5_i32_24 = arith.constant 5 : i32
    %55 = arith.muli %arg2, %c5_i32_24 : i32
    %c4_i32 = arith.constant 4 : i32
    %56 = arith.addi %55, %c4_i32 : i32
    %57 = arith.index_cast %56 : i32 to index
    %c0_25 = arith.constant 0 : index
    %c0_26 = arith.constant 0 : index
    %58 = vector.load %arg4[%57, %c0_25, %c0_26] : memref<25x64x64xbf16, #tpu.memory_space<vmem>>, vector<1x64x64xbf16>
    %59 = vector.shape_cast %58 : vector<1x64x64xbf16> to vector<64x64xbf16>
    %cst_27 = arith.constant dense<0.000000e+00> : vector<5x64xf32>
    %60 = tpu.matmul %54, %59, %cst_27 {dimension_numbers = #tpu.dot_dimension_numbers<[1], [0], [0], [1], [0, 0, 1, 1], [], []>} : vector<5x64xbf16>, vector<64x64xbf16>, vector<5x64xf32> -> vector<5x64xf32>
    %61 = arith.addf %51, %60 : vector<5x64xf32>
    %c0_28 = arith.constant 0 : index
    %c0_29 = arith.constant 0 : index
    %62 = vector.load %arg8[%c0_28, %c0_29] : memref<5x64xf32, #tpu.memory_space<vmem>>, vector<5x64xf32>
    %63 = arith.addf %62, %61 : vector<5x64xf32>
    %c0_30 = arith.constant 0 : index
    %c0_31 = arith.constant 0 : index
    %64 = vector.load %arg8[%c0_30, %c0_31] : memref<5x64xf32, #tpu.memory_space<vmem>>, vector<5x64xf32>
    tpu.vector_store %arg8[%c0_30, %c0_31], %63 {strides = array<i32>} : memref<5x64xf32, #tpu.memory_space<vmem>>, vector<5x64xf32>,
    %c4_i32_32 = arith.constant 4 : i32
    %65 = arith.cmpi eq, %arg2, %c4_i32_32 : i32
    %66 = arith.extui %65 : i1 to i32
    %c0_i32_33 = arith.constant 0 : i32
    %67 = arith.cmpi ne, %66, %c0_i32_33 : i32
    scf.if %67 {
      %c0_34 = arith.constant 0 : index
      %c0_35 = arith.constant 0 : index
      %68 = vector.load %arg8[%c0_34, %c0_35] : memref<5x64xf32, #tpu.memory_space<vmem>>, vector<5x64xf32>
      %c0_36 = arith.constant 0 : index
      %c0_37 = arith.constant 0 : index
      %c0_38 = arith.constant 0 : index
      %69 = vector.load %arg6[%c0_36, %c0_37, %c0_38] : memref<1x1x64xf32, #tpu.memory_space<vmem>>, vector<1x1x64xf32>
      %70 = vector.shape_cast %69 : vector<1x1x64xf32> to vector<1x64xf32>
      %71 = vector.broadcast %70 : vector<1x64xf32> to vector<5x64xf32>
      %72 = arith.addf %68, %71 : vector<5x64xf32>
      %cst_39 = arith.constant 0.000000e+00 : f32
      %73 = vector.broadcast %cst_39 : f32 to vector<5x64xf32>
      %74 = arith.maximumf %72, %73 : vector<5x64xf32>
      %75 = arith.truncf %74 : vector<5x64xf32> to vector<5x64xbf16>
      %c0_40 = arith.constant 0 : index
      %c0_41 = arith.constant 0 : index
      %c0_42 = arith.constant 0 : index
      %c0_43 = arith.constant 0 : index
      %76 = vector.load %arg7[%c0_40, %c0_41, %c0_42, %c0_43] : memref<1x1x5x64xbf16, #tpu.memory_space<vmem>>, vector<1x1x5x64xbf16>
      %77 = vector.shape_cast %76 : vector<1x1x5x64xbf16> to vector<5x64xbf16>
      %78 = vector.shape_cast %75 : vector<5x64xbf16> to vector<1x1x5x64xbf16>
      tpu.vector_store %arg7[%c0_40, %c0_41, %c0_42, %c0_43], %78 {strides = array<i32>} : memref<1x1x5x64xbf16, #tpu.memory_space<vmem>>, vector<1x1x5x64xbf16>,
    } else {
    }
    return
  }
  func.func @transform_0(%arg0: i32, %arg1: i32, %arg2: i32) -> (i32, i32, i32, i32, i32) {
    %c2_i32 = arith.constant 2 : i32
    %0 = arith.muli %arg1, %c2_i32 : i32
    %1 = arith.addi %0, %arg2 : i32
    %c0_i32 = arith.constant 0 : i32
    %c0_i32_0 = arith.constant 0 : i32
    %c0_i32_1 = arith.constant 0 : i32
    %c0_i32_2 = arith.constant 0 : i32
    return %arg0, %1, %c0_i32, %c0_i32_0, %c0_i32_1 : i32, i32, i32, i32, i32
  }
  func.func @transform_1(%arg0: i32, %arg1: i32, %arg2: i32) -> (i32, i32, i32) {
    %c0_i32 = arith.constant 0 : i32
    %c0_i32_0 = arith.constant 0 : i32
    %c0_i32_1 = arith.constant 0 : i32
    %c0_i32_2 = arith.constant 0 : i32
    return %c0_i32, %c0_i32_0, %c0_i32_1 : i32, i32, i32
  }
  func.func @transform_2(%arg0: i32, %arg1: i32, %arg2: i32) -> (i32, i32, i32) {
    %c0_i32 = arith.constant 0 : i32
    %c0_i32_0 = arith.constant 0 : i32
    %c0_i32_1 = arith.constant 0 : i32
    return %arg0, %c0_i32, %c0_i32_0 : i32, i32, i32
  }
  func.func @transform_3(%arg0: i32, %arg1: i32, %arg2: i32) -> (i32, i32, i32) {
    %c0_i32 = arith.constant 0 : i32
    %c0_i32_0 = arith.constant 0 : i32
    %c0_i32_1 = arith.constant 0 : i32
    %c0_i32_2 = arith.constant 0 : i32
    return %c0_i32, %c0_i32_0, %c0_i32_1 : i32, i32, i32
  }
  func.func @transform_4(%arg0: i32, %arg1: i32, %arg2: i32) -> (i32, i32, i32, i32) {
    %c0_i32 = arith.constant 0 : i32
    %c0_i32_0 = arith.constant 0 : i32
    %c0_i32_1 = arith.constant 0 : i32
    return %arg0, %arg1, %c0_i32, %c0_i32_0 : i32, i32, i32, i32
  }
}

module attributes {stable_mosaic.version = 11 : i64} {
  func.func @_conv_tap_kernel(%arg0: i32, %arg1: i32, %arg2: i32, %arg3: memref<1x1x1x7x64xbf16, #tpu.memory_space<vmem>>, %arg4: memref<9x64x64xbf16, #tpu.memory_space<vmem>>, %arg5: memref<1x1x64xf32, #tpu.memory_space<vmem>>, %arg6: memref<1x1x64xf32, #tpu.memory_space<vmem>>, %arg7: memref<1x1x5x64xbf16, #tpu.memory_space<vmem>>, %arg8: memref<5x64xf32, #tpu.memory_space<vmem>>) attributes {dimension_semantics = [#tpu.dimension_semantics<parallel>, #tpu.dimension_semantics<parallel>, #tpu.dimension_semantics<arbitrary>], iteration_bounds = array<i64: 2, 5, 3>, scalar_prefetch = 0 : i64, scratch_operands = 1 : i64, tpu.core_type = #tpu.core_type<tc>, window_params = [{transform_indices = @transform_0, window_bounds = array<i64: 1, 1, 1, 7, 64>}, {pipeline_mode = #tpu.pipeline_mode<synchronous>, transform_indices = @transform_1, window_bounds = array<i64: 9, 64, 64>}, {transform_indices = @transform_2, window_bounds = array<i64: 1, 1, 64>}, {pipeline_mode = #tpu.pipeline_mode<synchronous>, transform_indices = @transform_3, window_bounds = array<i64: 1, 1, 64>}, {transform_indices = @transform_4, window_bounds = array<i64: 1, 1, 5, 64>}]} {
    %c0_i32 = arith.constant 0 : i32
    %0 = arith.cmpi eq, %arg2, %c0_i32 : i32
    %1 = arith.extui %0 : i1 to i32
    %c0_i32_0 = arith.constant 0 : i32
    %2 = arith.cmpi ne, %1, %c0_i32_0 : i32
    scf.if %2 {
      %cst_26 = arith.constant 0.000000e+00 : f32
      %48 = vector.broadcast %cst_26 : f32 to vector<5x64xf32>
      %c0_27 = arith.constant 0 : index
      %c0_28 = arith.constant 0 : index
      %49 = vector.load %arg8[%c0_27, %c0_28] : memref<5x64xf32, #tpu.memory_space<vmem>>, vector<5x64xf32>
      tpu.vector_store %arg8[%c0_27, %c0_28], %48 {strides = array<i32>} : memref<5x64xf32, #tpu.memory_space<vmem>>, vector<5x64xf32>,
    } else {
    }
    %c0 = arith.constant 0 : index
    %c0_1 = arith.constant 0 : index
    %c0_2 = arith.constant 0 : index
    %c0_3 = arith.constant 0 : index
    %c0_4 = arith.constant 0 : index
    %3 = vector.load %arg3[%c0, %c0_1, %c0_2, %c0_3, %c0_4] : memref<1x1x1x7x64xbf16, #tpu.memory_space<vmem>>, vector<1x1x1x7x64xbf16>
    %4 = vector.shape_cast %3 : vector<1x1x1x7x64xbf16> to vector<1x7x64xbf16>
    %5 = arith.extf %4 : vector<1x7x64xbf16> to vector<1x7x64xf32>
    %c0_5 = arith.constant 0 : index
    %c0_6 = arith.constant 0 : index
    %c0_7 = arith.constant 0 : index
    %6 = vector.load %arg5[%c0_5, %c0_6, %c0_7] : memref<1x1x64xf32, #tpu.memory_space<vmem>>, vector<1x1x64xf32>
    %7 = vector.shape_cast %6 : vector<1x1x64xf32> to vector<1x64xf32>
    %8 = vector.shape_cast %7 : vector<1x64xf32> to vector<1x1x64xf32>
    %9 = vector.broadcast %8 : vector<1x1x64xf32> to vector<1x7x64xf32>
    %10 = arith.mulf %5, %9 : vector<1x7x64xf32>
    %cst = arith.constant 0.000000e+00 : f32
    %11 = vector.broadcast %cst : f32 to vector<5x64xf32>
    %12 = vector.extract_strided_slice %10 {offsets = [0, 0, 0], sizes = [1, 5, 64], strides = [1, 1, 1]} : vector<1x7x64xf32> to vector<1x5x64xf32>
    %13 = vector.shape_cast %12 : vector<1x5x64xf32> to vector<5x64xf32>
    %14 = arith.truncf %13 : vector<5x64xf32> to vector<5x64xbf16>
    %c3_i32 = arith.constant 3 : i32
    %15 = arith.muli %arg2, %c3_i32 : i32
    %c0_i32_8 = arith.constant 0 : i32
    %16 = arith.addi %15, %c0_i32_8 : i32
    %17 = arith.index_cast %16 : i32 to index
    %c0_9 = arith.constant 0 : index
    %c0_10 = arith.constant 0 : index
    %18 = vector.load %arg4[%17, %c0_9, %c0_10] : memref<9x64x64xbf16, #tpu.memory_space<vmem>>, vector<1x64x64xbf16>
    %19 = vector.shape_cast %18 : vector<1x64x64xbf16> to vector<64x64xbf16>
    %cst_11 = arith.constant dense<0.000000e+00> : vector<5x64xf32>
    %20 = tpu.matmul %14, %19, %cst_11 {dimension_numbers = #tpu.dot_dimension_numbers<[1], [0], [0], [1], [0, 0, 1, 1], [], []>} : vector<5x64xbf16>, vector<64x64xbf16>, vector<5x64xf32> -> vector<5x64xf32>
    %21 = arith.addf %11, %20 : vector<5x64xf32>
    %22 = vector.extract_strided_slice %10 {offsets = [0, 1, 0], sizes = [1, 5, 64], strides = [1, 1, 1]} : vector<1x7x64xf32> to vector<1x5x64xf32>
    %23 = vector.shape_cast %22 : vector<1x5x64xf32> to vector<5x64xf32>
    %24 = arith.truncf %23 : vector<5x64xf32> to vector<5x64xbf16>
    %c3_i32_12 = arith.constant 3 : i32
    %25 = arith.muli %arg2, %c3_i32_12 : i32
    %c1_i32 = arith.constant 1 : i32
    %26 = arith.addi %25, %c1_i32 : i32
    %27 = arith.index_cast %26 : i32 to index
    %c0_13 = arith.constant 0 : index
    %c0_14 = arith.constant 0 : index
    %28 = vector.load %arg4[%27, %c0_13, %c0_14] : memref<9x64x64xbf16, #tpu.memory_space<vmem>>, vector<1x64x64xbf16>
    %29 = vector.shape_cast %28 : vector<1x64x64xbf16> to vector<64x64xbf16>
    %cst_15 = arith.constant dense<0.000000e+00> : vector<5x64xf32>
    %30 = tpu.matmul %24, %29, %cst_15 {dimension_numbers = #tpu.dot_dimension_numbers<[1], [0], [0], [1], [0, 0, 1, 1], [], []>} : vector<5x64xbf16>, vector<64x64xbf16>, vector<5x64xf32> -> vector<5x64xf32>
    %31 = arith.addf %21, %30 : vector<5x64xf32>
    %32 = vector.extract_strided_slice %10 {offsets = [0, 2, 0], sizes = [1, 5, 64], strides = [1, 1, 1]} : vector<1x7x64xf32> to vector<1x5x64xf32>
    %33 = vector.shape_cast %32 : vector<1x5x64xf32> to vector<5x64xf32>
    %34 = arith.truncf %33 : vector<5x64xf32> to vector<5x64xbf16>
    %c3_i32_16 = arith.constant 3 : i32
    %35 = arith.muli %arg2, %c3_i32_16 : i32
    %c2_i32 = arith.constant 2 : i32
    %36 = arith.addi %35, %c2_i32 : i32
    %37 = arith.index_cast %36 : i32 to index
    %c0_17 = arith.constant 0 : index
    %c0_18 = arith.constant 0 : index
    %38 = vector.load %arg4[%37, %c0_17, %c0_18] : memref<9x64x64xbf16, #tpu.memory_space<vmem>>, vector<1x64x64xbf16>
    %39 = vector.shape_cast %38 : vector<1x64x64xbf16> to vector<64x64xbf16>
    %cst_19 = arith.constant dense<0.000000e+00> : vector<5x64xf32>
    %40 = tpu.matmul %34, %39, %cst_19 {dimension_numbers = #tpu.dot_dimension_numbers<[1], [0], [0], [1], [0, 0, 1, 1], [], []>} : vector<5x64xbf16>, vector<64x64xbf16>, vector<5x64xf32> -> vector<5x64xf32>
    %41 = arith.addf %31, %40 : vector<5x64xf32>
    %c0_20 = arith.constant 0 : index
    %c0_21 = arith.constant 0 : index
    %42 = vector.load %arg8[%c0_20, %c0_21] : memref<5x64xf32, #tpu.memory_space<vmem>>, vector<5x64xf32>
    %43 = arith.addf %42, %41 : vector<5x64xf32>
    %c0_22 = arith.constant 0 : index
    %c0_23 = arith.constant 0 : index
    %44 = vector.load %arg8[%c0_22, %c0_23] : memref<5x64xf32, #tpu.memory_space<vmem>>, vector<5x64xf32>
    tpu.vector_store %arg8[%c0_22, %c0_23], %43 {strides = array<i32>} : memref<5x64xf32, #tpu.memory_space<vmem>>, vector<5x64xf32>,
    %c2_i32_24 = arith.constant 2 : i32
    %45 = arith.cmpi eq, %arg2, %c2_i32_24 : i32
    %46 = arith.extui %45 : i1 to i32
    %c0_i32_25 = arith.constant 0 : i32
    %47 = arith.cmpi ne, %46, %c0_i32_25 : i32
    scf.if %47 {
      %c0_26 = arith.constant 0 : index
      %c0_27 = arith.constant 0 : index
      %48 = vector.load %arg8[%c0_26, %c0_27] : memref<5x64xf32, #tpu.memory_space<vmem>>, vector<5x64xf32>
      %c0_28 = arith.constant 0 : index
      %c0_29 = arith.constant 0 : index
      %c0_30 = arith.constant 0 : index
      %49 = vector.load %arg6[%c0_28, %c0_29, %c0_30] : memref<1x1x64xf32, #tpu.memory_space<vmem>>, vector<1x1x64xf32>
      %50 = vector.shape_cast %49 : vector<1x1x64xf32> to vector<1x64xf32>
      %51 = vector.broadcast %50 : vector<1x64xf32> to vector<5x64xf32>
      %52 = arith.addf %48, %51 : vector<5x64xf32>
      %cst_31 = arith.constant 0.000000e+00 : f32
      %53 = vector.broadcast %cst_31 : f32 to vector<5x64xf32>
      %54 = arith.maximumf %52, %53 : vector<5x64xf32>
      %55 = arith.truncf %54 : vector<5x64xf32> to vector<5x64xbf16>
      %c0_32 = arith.constant 0 : index
      %c0_33 = arith.constant 0 : index
      %c0_34 = arith.constant 0 : index
      %c0_35 = arith.constant 0 : index
      %56 = vector.load %arg7[%c0_32, %c0_33, %c0_34, %c0_35] : memref<1x1x5x64xbf16, #tpu.memory_space<vmem>>, vector<1x1x5x64xbf16>
      %57 = vector.shape_cast %56 : vector<1x1x5x64xbf16> to vector<5x64xbf16>
      %58 = vector.shape_cast %55 : vector<5x64xbf16> to vector<1x1x5x64xbf16>
      tpu.vector_store %arg7[%c0_32, %c0_33, %c0_34, %c0_35], %58 {strides = array<i32>} : memref<1x1x5x64xbf16, #tpu.memory_space<vmem>>, vector<1x1x5x64xbf16>,
    } else {
    }
    return
  }
  func.func @transform_0(%arg0: i32, %arg1: i32, %arg2: i32) -> (i32, i32, i32, i32, i32) {
    %c1_i32 = arith.constant 1 : i32
    %0 = arith.muli %arg1, %c1_i32 : i32
    %1 = arith.addi %0, %arg2 : i32
    %c0_i32 = arith.constant 0 : i32
    %c0_i32_0 = arith.constant 0 : i32
    %c0_i32_1 = arith.constant 0 : i32
    %c0_i32_2 = arith.constant 0 : i32
    return %arg0, %1, %c0_i32, %c0_i32_0, %c0_i32_1 : i32, i32, i32, i32, i32
  }
  func.func @transform_1(%arg0: i32, %arg1: i32, %arg2: i32) -> (i32, i32, i32) {
    %c0_i32 = arith.constant 0 : i32
    %c0_i32_0 = arith.constant 0 : i32
    %c0_i32_1 = arith.constant 0 : i32
    %c0_i32_2 = arith.constant 0 : i32
    return %c0_i32, %c0_i32_0, %c0_i32_1 : i32, i32, i32
  }
  func.func @transform_2(%arg0: i32, %arg1: i32, %arg2: i32) -> (i32, i32, i32) {
    %c0_i32 = arith.constant 0 : i32
    %c0_i32_0 = arith.constant 0 : i32
    %c0_i32_1 = arith.constant 0 : i32
    return %arg0, %c0_i32, %c0_i32_0 : i32, i32, i32
  }
  func.func @transform_3(%arg0: i32, %arg1: i32, %arg2: i32) -> (i32, i32, i32) {
    %c0_i32 = arith.constant 0 : i32
    %c0_i32_0 = arith.constant 0 : i32
    %c0_i32_1 = arith.constant 0 : i32
    %c0_i32_2 = arith.constant 0 : i32
    return %c0_i32, %c0_i32_0, %c0_i32_1 : i32, i32, i32
  }
  func.func @transform_4(%arg0: i32, %arg1: i32, %arg2: i32) -> (i32, i32, i32, i32) {
    %c0_i32 = arith.constant 0 : i32
    %c0_i32_0 = arith.constant 0 : i32
    %c0_i32_1 = arith.constant 0 : i32
    return %arg0, %arg1, %c0_i32, %c0_i32_0 : i32, i32, i32, i32
  }
}

module attributes {stable_mosaic.version = 11 : i64} {
  func.func @_conv_tap_kernel(%arg0: i32, %arg1: i32, %arg2: i32, %arg3: memref<1x1x1x7x64xbf16, #tpu.memory_space<vmem>>, %arg4: memref<9x64x64xbf16, #tpu.memory_space<vmem>>, %arg5: memref<1x1x64xf32, #tpu.memory_space<vmem>>, %arg6: memref<1x1x64xf32, #tpu.memory_space<vmem>>, %arg7: memref<1x1x5x64xbf16, #tpu.memory_space<vmem>>, %arg8: memref<1x1x5x64xbf16, #tpu.memory_space<vmem>>, %arg9: memref<5x64xf32, #tpu.memory_space<vmem>>) attributes {dimension_semantics = [#tpu.dimension_semantics<parallel>, #tpu.dimension_semantics<parallel>, #tpu.dimension_semantics<arbitrary>], iteration_bounds = array<i64: 2, 5, 3>, scalar_prefetch = 0 : i64, scratch_operands = 1 : i64, tpu.core_type = #tpu.core_type<tc>, window_params = [{transform_indices = @transform_0, window_bounds = array<i64: 1, 1, 1, 7, 64>}, {pipeline_mode = #tpu.pipeline_mode<synchronous>, transform_indices = @transform_1, window_bounds = array<i64: 9, 64, 64>}, {transform_indices = @transform_2, window_bounds = array<i64: 1, 1, 64>}, {pipeline_mode = #tpu.pipeline_mode<synchronous>, transform_indices = @transform_3, window_bounds = array<i64: 1, 1, 64>}, {transform_indices = @transform_4, window_bounds = array<i64: 1, 1, 5, 64>}, {transform_indices = @transform_5, window_bounds = array<i64: 1, 1, 5, 64>}]} {
    %c0_i32 = arith.constant 0 : i32
    %0 = arith.cmpi eq, %arg2, %c0_i32 : i32
    %1 = arith.extui %0 : i1 to i32
    %c0_i32_0 = arith.constant 0 : i32
    %2 = arith.cmpi ne, %1, %c0_i32_0 : i32
    scf.if %2 {
      %cst_26 = arith.constant 0.000000e+00 : f32
      %48 = vector.broadcast %cst_26 : f32 to vector<5x64xf32>
      %c0_27 = arith.constant 0 : index
      %c0_28 = arith.constant 0 : index
      %49 = vector.load %arg9[%c0_27, %c0_28] : memref<5x64xf32, #tpu.memory_space<vmem>>, vector<5x64xf32>
      tpu.vector_store %arg9[%c0_27, %c0_28], %48 {strides = array<i32>} : memref<5x64xf32, #tpu.memory_space<vmem>>, vector<5x64xf32>,
    } else {
    }
    %c0 = arith.constant 0 : index
    %c0_1 = arith.constant 0 : index
    %c0_2 = arith.constant 0 : index
    %c0_3 = arith.constant 0 : index
    %c0_4 = arith.constant 0 : index
    %3 = vector.load %arg3[%c0, %c0_1, %c0_2, %c0_3, %c0_4] : memref<1x1x1x7x64xbf16, #tpu.memory_space<vmem>>, vector<1x1x1x7x64xbf16>
    %4 = vector.shape_cast %3 : vector<1x1x1x7x64xbf16> to vector<1x7x64xbf16>
    %5 = arith.extf %4 : vector<1x7x64xbf16> to vector<1x7x64xf32>
    %c0_5 = arith.constant 0 : index
    %c0_6 = arith.constant 0 : index
    %c0_7 = arith.constant 0 : index
    %6 = vector.load %arg5[%c0_5, %c0_6, %c0_7] : memref<1x1x64xf32, #tpu.memory_space<vmem>>, vector<1x1x64xf32>
    %7 = vector.shape_cast %6 : vector<1x1x64xf32> to vector<1x64xf32>
    %8 = vector.shape_cast %7 : vector<1x64xf32> to vector<1x1x64xf32>
    %9 = vector.broadcast %8 : vector<1x1x64xf32> to vector<1x7x64xf32>
    %10 = arith.mulf %5, %9 : vector<1x7x64xf32>
    %cst = arith.constant 0.000000e+00 : f32
    %11 = vector.broadcast %cst : f32 to vector<5x64xf32>
    %12 = vector.extract_strided_slice %10 {offsets = [0, 0, 0], sizes = [1, 5, 64], strides = [1, 1, 1]} : vector<1x7x64xf32> to vector<1x5x64xf32>
    %13 = vector.shape_cast %12 : vector<1x5x64xf32> to vector<5x64xf32>
    %14 = arith.truncf %13 : vector<5x64xf32> to vector<5x64xbf16>
    %c3_i32 = arith.constant 3 : i32
    %15 = arith.muli %arg2, %c3_i32 : i32
    %c0_i32_8 = arith.constant 0 : i32
    %16 = arith.addi %15, %c0_i32_8 : i32
    %17 = arith.index_cast %16 : i32 to index
    %c0_9 = arith.constant 0 : index
    %c0_10 = arith.constant 0 : index
    %18 = vector.load %arg4[%17, %c0_9, %c0_10] : memref<9x64x64xbf16, #tpu.memory_space<vmem>>, vector<1x64x64xbf16>
    %19 = vector.shape_cast %18 : vector<1x64x64xbf16> to vector<64x64xbf16>
    %cst_11 = arith.constant dense<0.000000e+00> : vector<5x64xf32>
    %20 = tpu.matmul %14, %19, %cst_11 {dimension_numbers = #tpu.dot_dimension_numbers<[1], [0], [0], [1], [0, 0, 1, 1], [], []>} : vector<5x64xbf16>, vector<64x64xbf16>, vector<5x64xf32> -> vector<5x64xf32>
    %21 = arith.addf %11, %20 : vector<5x64xf32>
    %22 = vector.extract_strided_slice %10 {offsets = [0, 1, 0], sizes = [1, 5, 64], strides = [1, 1, 1]} : vector<1x7x64xf32> to vector<1x5x64xf32>
    %23 = vector.shape_cast %22 : vector<1x5x64xf32> to vector<5x64xf32>
    %24 = arith.truncf %23 : vector<5x64xf32> to vector<5x64xbf16>
    %c3_i32_12 = arith.constant 3 : i32
    %25 = arith.muli %arg2, %c3_i32_12 : i32
    %c1_i32 = arith.constant 1 : i32
    %26 = arith.addi %25, %c1_i32 : i32
    %27 = arith.index_cast %26 : i32 to index
    %c0_13 = arith.constant 0 : index
    %c0_14 = arith.constant 0 : index
    %28 = vector.load %arg4[%27, %c0_13, %c0_14] : memref<9x64x64xbf16, #tpu.memory_space<vmem>>, vector<1x64x64xbf16>
    %29 = vector.shape_cast %28 : vector<1x64x64xbf16> to vector<64x64xbf16>
    %cst_15 = arith.constant dense<0.000000e+00> : vector<5x64xf32>
    %30 = tpu.matmul %24, %29, %cst_15 {dimension_numbers = #tpu.dot_dimension_numbers<[1], [0], [0], [1], [0, 0, 1, 1], [], []>} : vector<5x64xbf16>, vector<64x64xbf16>, vector<5x64xf32> -> vector<5x64xf32>
    %31 = arith.addf %21, %30 : vector<5x64xf32>
    %32 = vector.extract_strided_slice %10 {offsets = [0, 2, 0], sizes = [1, 5, 64], strides = [1, 1, 1]} : vector<1x7x64xf32> to vector<1x5x64xf32>
    %33 = vector.shape_cast %32 : vector<1x5x64xf32> to vector<5x64xf32>
    %34 = arith.truncf %33 : vector<5x64xf32> to vector<5x64xbf16>
    %c3_i32_16 = arith.constant 3 : i32
    %35 = arith.muli %arg2, %c3_i32_16 : i32
    %c2_i32 = arith.constant 2 : i32
    %36 = arith.addi %35, %c2_i32 : i32
    %37 = arith.index_cast %36 : i32 to index
    %c0_17 = arith.constant 0 : index
    %c0_18 = arith.constant 0 : index
    %38 = vector.load %arg4[%37, %c0_17, %c0_18] : memref<9x64x64xbf16, #tpu.memory_space<vmem>>, vector<1x64x64xbf16>
    %39 = vector.shape_cast %38 : vector<1x64x64xbf16> to vector<64x64xbf16>
    %cst_19 = arith.constant dense<0.000000e+00> : vector<5x64xf32>
    %40 = tpu.matmul %34, %39, %cst_19 {dimension_numbers = #tpu.dot_dimension_numbers<[1], [0], [0], [1], [0, 0, 1, 1], [], []>} : vector<5x64xbf16>, vector<64x64xbf16>, vector<5x64xf32> -> vector<5x64xf32>
    %41 = arith.addf %31, %40 : vector<5x64xf32>
    %c0_20 = arith.constant 0 : index
    %c0_21 = arith.constant 0 : index
    %42 = vector.load %arg9[%c0_20, %c0_21] : memref<5x64xf32, #tpu.memory_space<vmem>>, vector<5x64xf32>
    %43 = arith.addf %42, %41 : vector<5x64xf32>
    %c0_22 = arith.constant 0 : index
    %c0_23 = arith.constant 0 : index
    %44 = vector.load %arg9[%c0_22, %c0_23] : memref<5x64xf32, #tpu.memory_space<vmem>>, vector<5x64xf32>
    tpu.vector_store %arg9[%c0_22, %c0_23], %43 {strides = array<i32>} : memref<5x64xf32, #tpu.memory_space<vmem>>, vector<5x64xf32>,
    %c2_i32_24 = arith.constant 2 : i32
    %45 = arith.cmpi eq, %arg2, %c2_i32_24 : i32
    %46 = arith.extui %45 : i1 to i32
    %c0_i32_25 = arith.constant 0 : i32
    %47 = arith.cmpi ne, %46, %c0_i32_25 : i32
    scf.if %47 {
      %c0_26 = arith.constant 0 : index
      %c0_27 = arith.constant 0 : index
      %48 = vector.load %arg9[%c0_26, %c0_27] : memref<5x64xf32, #tpu.memory_space<vmem>>, vector<5x64xf32>
      %c0_28 = arith.constant 0 : index
      %c0_29 = arith.constant 0 : index
      %c0_30 = arith.constant 0 : index
      %49 = vector.load %arg6[%c0_28, %c0_29, %c0_30] : memref<1x1x64xf32, #tpu.memory_space<vmem>>, vector<1x1x64xf32>
      %50 = vector.shape_cast %49 : vector<1x1x64xf32> to vector<1x64xf32>
      %51 = vector.broadcast %50 : vector<1x64xf32> to vector<5x64xf32>
      %52 = arith.addf %48, %51 : vector<5x64xf32>
      %c0_31 = arith.constant 0 : index
      %c0_32 = arith.constant 0 : index
      %c0_33 = arith.constant 0 : index
      %c0_34 = arith.constant 0 : index
      %53 = vector.load %arg7[%c0_31, %c0_32, %c0_33, %c0_34] : memref<1x1x5x64xbf16, #tpu.memory_space<vmem>>, vector<1x1x5x64xbf16>
      %54 = vector.shape_cast %53 : vector<1x1x5x64xbf16> to vector<5x64xbf16>
      %55 = arith.extf %54 : vector<5x64xbf16> to vector<5x64xf32>
      %56 = arith.addf %52, %55 : vector<5x64xf32>
      %cst_35 = arith.constant 0.000000e+00 : f32
      %57 = vector.broadcast %cst_35 : f32 to vector<5x64xf32>
      %58 = arith.maximumf %56, %57 : vector<5x64xf32>
      %59 = arith.truncf %58 : vector<5x64xf32> to vector<5x64xbf16>
      %c0_36 = arith.constant 0 : index
      %c0_37 = arith.constant 0 : index
      %c0_38 = arith.constant 0 : index
      %c0_39 = arith.constant 0 : index
      %60 = vector.load %arg8[%c0_36, %c0_37, %c0_38, %c0_39] : memref<1x1x5x64xbf16, #tpu.memory_space<vmem>>, vector<1x1x5x64xbf16>
      %61 = vector.shape_cast %60 : vector<1x1x5x64xbf16> to vector<5x64xbf16>
      %62 = vector.shape_cast %59 : vector<5x64xbf16> to vector<1x1x5x64xbf16>
      tpu.vector_store %arg8[%c0_36, %c0_37, %c0_38, %c0_39], %62 {strides = array<i32>} : memref<1x1x5x64xbf16, #tpu.memory_space<vmem>>, vector<1x1x5x64xbf16>,
    } else {
    }
    return
  }
  func.func @transform_0(%arg0: i32, %arg1: i32, %arg2: i32) -> (i32, i32, i32, i32, i32) {
    %c1_i32 = arith.constant 1 : i32
    %0 = arith.muli %arg1, %c1_i32 : i32
    %1 = arith.addi %0, %arg2 : i32
    %c0_i32 = arith.constant 0 : i32
    %c0_i32_0 = arith.constant 0 : i32
    %c0_i32_1 = arith.constant 0 : i32
    %c0_i32_2 = arith.constant 0 : i32
    return %arg0, %1, %c0_i32, %c0_i32_0, %c0_i32_1 : i32, i32, i32, i32, i32
  }
  func.func @transform_1(%arg0: i32, %arg1: i32, %arg2: i32) -> (i32, i32, i32) {
    %c0_i32 = arith.constant 0 : i32
    %c0_i32_0 = arith.constant 0 : i32
    %c0_i32_1 = arith.constant 0 : i32
    %c0_i32_2 = arith.constant 0 : i32
    return %c0_i32, %c0_i32_0, %c0_i32_1 : i32, i32, i32
  }
  func.func @transform_2(%arg0: i32, %arg1: i32, %arg2: i32) -> (i32, i32, i32) {
    %c0_i32 = arith.constant 0 : i32
    %c0_i32_0 = arith.constant 0 : i32
    %c0_i32_1 = arith.constant 0 : i32
    return %arg0, %c0_i32, %c0_i32_0 : i32, i32, i32
  }
  func.func @transform_3(%arg0: i32, %arg1: i32, %arg2: i32) -> (i32, i32, i32) {
    %c0_i32 = arith.constant 0 : i32
    %c0_i32_0 = arith.constant 0 : i32
    %c0_i32_1 = arith.constant 0 : i32
    %c0_i32_2 = arith.constant 0 : i32
    return %c0_i32, %c0_i32_0, %c0_i32_1 : i32, i32, i32
  }
  func.func @transform_4(%arg0: i32, %arg1: i32, %arg2: i32) -> (i32, i32, i32, i32) {
    %c0_i32 = arith.constant 0 : i32
    %c0_i32_0 = arith.constant 0 : i32
    %c0_i32_1 = arith.constant 0 : i32
    return %arg0, %arg1, %c0_i32, %c0_i32_0 : i32, i32, i32, i32
  }
  func.func @transform_5(%arg0: i32, %arg1: i32, %arg2: i32) -> (i32, i32, i32, i32) {
    %c0_i32 = arith.constant 0 : i32
    %c0_i32_0 = arith.constant 0 : i32
    %c0_i32_1 = arith.constant 0 : i32
    return %arg0, %arg1, %c0_i32, %c0_i32_0 : i32, i32, i32, i32
  }
}

module attributes {stable_mosaic.version = 11 : i64} {
  func.func @_se_fc_tail_kernel(%arg0: i32, %arg1: i32, %arg2: memref<1x25x64xbf16, #tpu.memory_space<vmem>>, %arg3: memref<25x64xbf16, #tpu.memory_space<vmem>>, %arg4: memref<64x4xf32, #tpu.memory_space<vmem>>, %arg5: memref<4x64xf32, #tpu.memory_space<vmem>>, %arg6: memref<1x1x64xf32, #tpu.memory_space<vmem>>, %arg7: memref<1x64xf32, #tpu.memory_space<vmem>>, %arg8: memref<1x64xf32, #tpu.memory_space<vmem>>) attributes {dimension_semantics = [#tpu.dimension_semantics<parallel>, #tpu.dimension_semantics<arbitrary>], iteration_bounds = array<i64: 2, 1>, scalar_prefetch = 0 : i64, scratch_operands = 2 : i64, tpu.core_type = #tpu.core_type<tc>, window_params = [{transform_indices = @transform_0, window_bounds = array<i64: 1, 25, 64>}, {transform_indices = @transform_1, window_bounds = array<i64: 25, 64>}, {pipeline_mode = #tpu.pipeline_mode<synchronous>, transform_indices = @transform_2, window_bounds = array<i64: 64, 4>}, {pipeline_mode = #tpu.pipeline_mode<synchronous>, transform_indices = @transform_3, window_bounds = array<i64: 4, 64>}, {transform_indices = @transform_4, window_bounds = array<i64: 1, 1, 64>}]} {
    %c0_i32 = arith.constant 0 : i32
    %0 = arith.cmpi eq, %arg1, %c0_i32 : i32
    %1 = arith.extui %0 : i1 to i32
    %c0_i32_0 = arith.constant 0 : i32
    %2 = arith.cmpi ne, %1, %c0_i32_0 : i32
    scf.if %2 {
      %cst_19 = arith.constant 0.000000e+00 : f32
      %36 = vector.broadcast %cst_19 : f32 to vector<1x64xf32>
      %c0_20 = arith.constant 0 : index
      %c0_21 = arith.constant 0 : index
      %37 = vector.load %arg7[%c0_20, %c0_21] : memref<1x64xf32, #tpu.memory_space<vmem>>, vector<1x64xf32>
      tpu.vector_store %arg7[%c0_20, %c0_21], %36 {strides = array<i32>} : memref<1x64xf32, #tpu.memory_space<vmem>>, vector<1x64xf32>,
      %cst_22 = arith.constant 0.000000e+00 : f32
      %38 = vector.broadcast %cst_22 : f32 to vector<1x64xf32>
      %c0_23 = arith.constant 0 : index
      %c0_24 = arith.constant 0 : index
      %39 = vector.load %arg8[%c0_23, %c0_24] : memref<1x64xf32, #tpu.memory_space<vmem>>, vector<1x64xf32>
      tpu.vector_store %arg8[%c0_23, %c0_24], %38 {strides = array<i32>} : memref<1x64xf32, #tpu.memory_space<vmem>>, vector<1x64xf32>,
    } else {
    }
    %c0 = arith.constant 0 : index
    %c0_1 = arith.constant 0 : index
    %c0_2 = arith.constant 0 : index
    %3 = vector.load %arg2[%c0, %c0_1, %c0_2] : memref<1x25x64xbf16, #tpu.memory_space<vmem>>, vector<1x25x64xbf16>
    %4 = vector.shape_cast %3 : vector<1x25x64xbf16> to vector<25x64xbf16>
    %5 = arith.extf %4 : vector<25x64xbf16> to vector<25x64xf32>
    %c0_3 = arith.constant 0 : index
    %c0_4 = arith.constant 0 : index
    %6 = vector.load %arg3[%c0_3, %c0_4] : memref<25x64xbf16, #tpu.memory_space<vmem>>, vector<25x64xbf16>
    %7 = arith.extf %6 : vector<25x64xbf16> to vector<25x64xf32>
    %c25_i32 = arith.constant 25 : i32
    %8 = arith.muli %arg1, %c25_i32 : i32
    %9 = tpu.iota {dimensions = array<i32: 0>} : vector<25x1xi32>
    %10 = vector.broadcast %8 : i32 to vector<25x1xi32>
    %11 = arith.addi %10, %9 : vector<25x1xi32>
    %c25_i32_5 = arith.constant 25 : i32
    %12 = vector.broadcast %c25_i32_5 : i32 to vector<25x1xi32>
    %13 = arith.cmpi slt, %11, %12 : vector<25x1xi32>
    %c0_6 = arith.constant 0 : index
    %c0_7 = arith.constant 0 : index
    %14 = vector.load %arg7[%c0_6, %c0_7] : memref<1x64xf32, #tpu.memory_space<vmem>>, vector<1x64xf32>
    %cst = arith.constant 0.000000e+00 : f32
    %15 = vector.shape_cast %13 : vector<25x1xi1> to vector<25x1xi1>
    %16 = vector.broadcast %15 : vector<25x1xi1> to vector<25x64xi1>
    %17 = vector.broadcast %cst : f32 to vector<25x64xf32>
    %18 = arith.select %16, %5, %17 : vector<25x64xi1>, vector<25x64xf32>
    %cst_8 = arith.constant dense<0.000000e+00> : vector<64xf32>
    %19 = vector.multi_reduction <add>, %18, %cst_8 [0] : vector<25x64xf32> to vector<64xf32>
    %20 = vector.shape_cast %19 : vector<64xf32> to vector<1x64xf32>
    %21 = arith.addf %14, %20 : vector<1x64xf32>
    %c0_9 = arith.constant 0 : index
    %c0_10 = arith.constant 0 : index
    %22 = vector.load %arg7[%c0_9, %c0_10] : memref<1x64xf32, #tpu.memory_space<vmem>>, vector<1x64xf32>
    tpu.vector_store %arg7[%c0_9, %c0_10], %21 {strides = array<i32>} : memref<1x64xf32, #tpu.memory_space<vmem>>, vector<1x64xf32>,
    %c0_11 = arith.constant 0 : index
    %c0_12 = arith.constant 0 : index
    %23 = vector.load %arg8[%c0_11, %c0_12] : memref<1x64xf32, #tpu.memory_space<vmem>>, vector<1x64xf32>
    %24 = arith.mulf %5, %7 : vector<25x64xf32>
    %cst_13 = arith.constant 0.000000e+00 : f32
    %25 = vector.shape_cast %13 : vector<25x1xi1> to vector<25x1xi1>
    %26 = vector.broadcast %25 : vector<25x1xi1> to vector<25x64xi1>
    %27 = vector.broadcast %cst_13 : f32 to vector<25x64xf32>
    %28 = arith.select %26, %24, %27 : vector<25x64xi1>, vector<25x64xf32>
    %cst_14 = arith.constant dense<0.000000e+00> : vector<64xf32>
    %29 = vector.multi_reduction <add>, %28, %cst_14 [0] : vector<25x64xf32> to vector<64xf32>
    %30 = vector.shape_cast %29 : vector<64xf32> to vector<1x64xf32>
    %31 = arith.addf %23, %30 : vector<1x64xf32>
    %c0_15 = arith.constant 0 : index
    %c0_16 = arith.constant 0 : index
    %32 = vector.load %arg8[%c0_15, %c0_16] : memref<1x64xf32, #tpu.memory_space<vmem>>, vector<1x64xf32>
    tpu.vector_store %arg8[%c0_15, %c0_16], %31 {strides = array<i32>} : memref<1x64xf32, #tpu.memory_space<vmem>>, vector<1x64xf32>,
    %c0_i32_17 = arith.constant 0 : i32
    %33 = arith.cmpi eq, %arg1, %c0_i32_17 : i32
    %34 = arith.extui %33 : i1 to i32
    %c0_i32_18 = arith.constant 0 : i32
    %35 = arith.cmpi ne, %34, %c0_i32_18 : i32
    scf.if %35 {
      %c0_19 = arith.constant 0 : index
      %c0_20 = arith.constant 0 : index
      %36 = vector.load %arg7[%c0_19, %c0_20] : memref<1x64xf32, #tpu.memory_space<vmem>>, vector<1x64xf32>
      %cst_21 = arith.constant 4.000000e-02 : f32
      %37 = vector.broadcast %cst_21 : f32 to vector<1x64xf32>
      %38 = arith.mulf %36, %37 : vector<1x64xf32>
      %c0_22 = arith.constant 0 : index
      %c0_23 = arith.constant 0 : index
      %39 = vector.load %arg4[%c0_22, %c0_23] : memref<64x4xf32, #tpu.memory_space<vmem>>, vector<64x4xf32>
      %cst_24 = arith.constant dense<0.000000e+00> : vector<1x4xf32>
      %40 = tpu.matmul %38, %39, %cst_24 {dimension_numbers = #tpu.dot_dimension_numbers<[1], [0], [0], [1], [0, 0, 1, 1], [], []>} : vector<1x64xf32>, vector<64x4xf32>, vector<1x4xf32> -> vector<1x4xf32>
      %cst_25 = arith.constant 0.000000e+00 : f32
      %41 = vector.broadcast %cst_25 : f32 to vector<1x4xf32>
      %42 = arith.maximumf %40, %41 : vector<1x4xf32>
      %c0_26 = arith.constant 0 : index
      %c0_27 = arith.constant 0 : index
      %43 = vector.load %arg5[%c0_26, %c0_27] : memref<4x64xf32, #tpu.memory_space<vmem>>, vector<4x64xf32>
      %cst_28 = arith.constant dense<0.000000e+00> : vector<1x64xf32>
      %44 = tpu.matmul %42, %43, %cst_28 {dimension_numbers = #tpu.dot_dimension_numbers<[1], [0], [0], [1], [0, 0, 1, 1], [], []>} : vector<1x4xf32>, vector<4x64xf32>, vector<1x64xf32> -> vector<1x64xf32>
      %45 = arith.negf %44 : vector<1x64xf32>
      %46 = math.exp %45 : vector<1x64xf32>
      %cst_29 = arith.constant 1.000000e+00 : f32
      %47 = vector.broadcast %cst_29 : f32 to vector<1x64xf32>
      %48 = arith.addf %47, %46 : vector<1x64xf32>
      %49 = arith.divf %47, %48 : vector<1x64xf32>
      %c0_30 = arith.constant 0 : index
      %c0_31 = arith.constant 0 : index
      %50 = vector.load %arg8[%c0_30, %c0_31] : memref<1x64xf32, #tpu.memory_space<vmem>>, vector<1x64xf32>
      %51 = arith.mulf %50, %49 : vector<1x64xf32>
      %c0_32 = arith.constant 0 : index
      %c0_33 = arith.constant 0 : index
      %c0_34 = arith.constant 0 : index
      %52 = vector.load %arg6[%c0_32, %c0_33, %c0_34] : memref<1x1x64xf32, #tpu.memory_space<vmem>>, vector<1x1x64xf32>
      %53 = vector.shape_cast %52 : vector<1x1x64xf32> to vector<1x64xf32>
      %54 = vector.shape_cast %51 : vector<1x64xf32> to vector<1x1x64xf32>
      tpu.vector_store %arg6[%c0_32, %c0_33, %c0_34], %54 {strides = array<i32>} : memref<1x1x64xf32, #tpu.memory_space<vmem>>, vector<1x1x64xf32>,
    } else {
    }
    return
  }
  func.func @transform_0(%arg0: i32, %arg1: i32) -> (i32, i32, i32) {
    %c0_i32 = arith.constant 0 : i32
    %c0_i32_0 = arith.constant 0 : i32
    return %arg0, %arg1, %c0_i32 : i32, i32, i32
  }
  func.func @transform_1(%arg0: i32, %arg1: i32) -> (i32, i32) {
    %c0_i32 = arith.constant 0 : i32
    %c0_i32_0 = arith.constant 0 : i32
    return %arg1, %c0_i32 : i32, i32
  }
  func.func @transform_2(%arg0: i32, %arg1: i32) -> (i32, i32) {
    %c0_i32 = arith.constant 0 : i32
    %c0_i32_0 = arith.constant 0 : i32
    %c0_i32_1 = arith.constant 0 : i32
    return %c0_i32, %c0_i32_0 : i32, i32
  }
  func.func @transform_3(%arg0: i32, %arg1: i32) -> (i32, i32) {
    %c0_i32 = arith.constant 0 : i32
    %c0_i32_0 = arith.constant 0 : i32
    %c0_i32_1 = arith.constant 0 : i32
    return %c0_i32, %c0_i32_0 : i32, i32
  }
  func.func @transform_4(%arg0: i32, %arg1: i32) -> (i32, i32, i32) {
    %c0_i32 = arith.constant 0 : i32
    %c0_i32_0 = arith.constant 0 : i32
    %c0_i32_1 = arith.constant 0 : i32
    return %arg0, %c0_i32, %c0_i32_0 : i32, i32, i32
  }
}

</mosaic_0001>

<llo_original>
// kernel: tudu_forward.6
$region0: #{tudu_forward.6}
  #allocation0 [shape = 'u32[]', space=smem, size = 0x4, offset = 0x4, fixed_abs, tag = 'smem constant byte address 0x4 - core index']
  #allocation1 [shape = 'u32[144,128]{1,0:T(1,128)}', space=vmem, size = 0x12000, scoped, tag = 'internal scratch']
  #allocation2 [shape = 'f32[8,64]{1,0:T(8,128)}', space=vmem, size = 0x1000, scoped, tag = 'scratch operand']
  %s0 = inlined_call_operand.vmem [shape: bf16[2,22,2,11,3], index: 0, kind: input, shape index: {}]
  %s1 = inlined_call_operand.vmem [shape: bf16[49,3,64], index: 1, kind: input, shape index: {}]
  %s2 = inlined_call_operand.vmem [shape: f32[2,1,3], index: 2, kind: input, shape index: {}]
  %s3 = inlined_call_operand.vmem [shape: f32[1,1,64], index: 3, kind: input, shape index: {}]
  %s4 = inlined_call_operand.vmem [shape: bf16[2,8,8,64], index: 4, kind: output, shape index: {}]
  %s5 = sld [smem:[#allocation0]]
  $region57: #{tudu_forward.6} parent=0
    _
  %s7 = ssub.s32 1, %s5
  %s8 = scalar_select 0, %s7, %s5
  loop: start=0, step=1, limit=114
  $region2: #{tudu_forward.6} parent=0 // loop_pre_header
    _
  $region3: #{tudu_forward.6} parent=0 // loop_header
    %s10 = sphi 0, %s14
    %p11 = scmp.ge.s32.totalorder %s10, 114
    %s17 = sphi 0, %s36
    %s18 = sphi 0, %s32
    %s19 = sphi 0, %s28
    %s20 = sphi 0, %s17
    %s21 = sphi 0, %s18
    %s22 = sphi 0, %s19
    %s23 = sphi 0, %s20
    %s24 = sphi 0, %s21
    %s25 = sphi 0, %s22
    %s45 = sphi 0, %s47
    %s48 = sphi 0, %s45
    %s49 = sphi 0, %s48
    %s65 = sphi 0, %s49
    %s69 = sphi 0, %s69
    %s71 = sphi 0, %s69
    %s72 = sphi 0, %s71
    %s86 = sphi 0, %s72
    %s92 = sphi 0, %s94
    %s95 = sphi 0, %s92
    %s96 = sphi 0, %s95
    %s112 = sphi 0, %s96
    %s116 = sphi 0, %s116
    %s118 = sphi 0, %s116
    %s119 = sphi 0, %s118
    %s133 = sphi 0, %s119
    %s141 = sphi 0, %s143
    %s144 = sphi 0, %s141
    %s145 = sphi 0, %s144
    %s161 = sphi 0, %s145
  $region4: #{tudu_forward.6} parent=0 // loop_header_branch
    %13 = sbr.rel (%p11) target = $region8
  $region5: #{tudu_forward.6} parent=0 // loop_body
    %s15 = ssub.s32 %s10, 1
    %s16 = ssub.s32 %s10, 2
    %s26 = sadd.s32 1, %s19
    %p27 = scmp.ge.s32.totalorder %s26, 7
    %s28 = scalar_select %p27, 0, %s26
    %s29 = sadd.s32 1, %s18
    %s30 = scalar_select %p27, %s29, %s18
    %p31 = scmp.ge.s32.totalorder %s30, 8
    %s32 = scalar_select %p31, 0, %s30
    %s33 = sadd.s32 1, %s17
    %s34 = scalar_select %p31, %s33, %s17
    %p35 = scmp.ge.s32.totalorder %s34, 2
    %s36 = scalar_select %p35, 0, %s34
    %s37 = smul.u32 %s18, 2
    %s38 = sadd.s32 %s37, %s19
    %s39 = smul.u32 %s32, 2
    %s40 = sadd.s32 %s39, %s28
    %s41 = ssub.s32 %s17, %s36
    %s42 = ssub.s32 %s38, %s40
    %s43 = sor.u32 %s41, %s42
    %p44 = scmp.eq.s32.totalorder %s43, 0
    %s46 = sadd.s32 %s45, 1
    %s47 = scalar_select %p44, %s45, %s46
    %p50 = pneg %p44
    %p51 = scmp.eq.s32.totalorder %s10, 111
    %p52 = por %p50, %p51
    %p53 = scmp.ne.s32.totalorder %s45, %s48
    %p54 = scmp.eq.s32.totalorder %s10, 0
    %p55 = por %p53, %p54
    %p56 = scmp.ne.s32.totalorder %s45, %s48
    %p57 = scmp.eq.s32.totalorder %s15, 111
    %p58 = por %p56, %p57
    %p59 = scmp.ne.s32.totalorder %s48, %s49
    %p60 = scmp.eq.s32.totalorder %s15, 0
    %p61 = por %p59, %p60
    %p62 = scmp.ne.s32.totalorder %s48, %s49
    %p63 = scmp.eq.s32.totalorder %s16, 111
    %p64 = por %p62, %p63
    %p66 = scmp.ne.s32.totalorder %s49, %s65
    %p67 = scmp.eq.s32.totalorder %s16, 0
    %p68 = por %p66, %p67
    %s70 = sadd.s32 %s69, 1
    %p73 = scmp.eq.s32.totalorder %s10, 111
    %p74 = scmp.ne.s32.totalorder %s69, %s71
    %p75 = scmp.eq.s32.totalorder %s10, 0
    %p76 = por %p74, %p75
    %p77 = scmp.ne.s32.totalorder %s69, %s71
    %p78 = scmp.eq.s32.totalorder %s15, 111
    %p79 = por %p77, %p78
    %p80 = scmp.ne.s32.totalorder %s71, %s72
    %p81 = scmp.eq.s32.totalorder %s15, 0
    %p82 = por %p80, %p81
    %p83 = scmp.ne.s32.totalorder %s71, %s72
    %p84 = scmp.eq.s32.totalorder %s16, 111
    %p85 = por %p83, %p84
    %p87 = scmp.ne.s32.totalorder %s72, %s86
    %p88 = scmp.eq.s32.totalorder %s16, 0
    %p89 = por %p87, %p88
    %s90 = ssub.s32 %s17, %s36
    %p91 = scmp.eq.s32.totalorder %s90, 0
    %s93 = sadd.s32 %s92, 1
    %s94 = scalar_select %p91, %s92, %s93
    %p97 = pneg %p91
    %p98 = scmp.eq.s32.totalorder %s10, 111
    %p99 = por %p97, %p98
    %p100 = scmp.ne.s32.totalorder %s92, %s95
    %p101 = scmp.eq.s32.totalorder %s10, 0
    %p102 = por %p100, %p101
    %p103 = scmp.ne.s32.totalorder %s92, %s95
    %p104 = scmp.eq.s32.totalorder %s15, 111
    %p105 = por %p103, %p104
    %p106 = scmp.ne.s32.totalorder %s95, %s96
    %p107 = scmp.eq.s32.totalorder %s15, 0
    %p108 = por %p106, %p107
    %p109 = scmp.ne.s32.totalorder %s95, %s96
    %p110 = scmp.eq.s32.totalorder %s16, 111
    %p111 = por %p109, %p110
    %p113 = scmp.ne.s32.totalorder %s96, %s112
    %p114 = scmp.eq.s32.totalorder %s16, 0
    %p115 = por %p113, %p114
    %s117 = sadd.s32 %s116, 1
    %p120 = scmp.eq.s32.totalorder %s10, 111
    %p121 = scmp.ne.s32.totalorder %s116, %s118
    %p122 = scmp.eq.s32.totalorder %s10, 0
    %p123 = por %p121, %p122
    %p124 = scmp.ne.s32.totalorder %s116, %s118
    %p125 = scmp.eq.s32.totalorder %s15, 111
    %p126 = por %p124, %p125
    %p127 = scmp.ne.s32.totalorder %s118, %s119
    %p128 = scmp.eq.s32.totalorder %s15, 0
    %p129 = por %p127, %p128
    %p130 = scmp.ne.s32.totalorder %s118, %s119
    %p131 = scmp.eq.s32.totalorder %s16, 111
    %p132 = por %p130, %p131
    %p134 = scmp.ne.s32.totalorder %s119, %s133
    %p135 = scmp.eq.s32.totalorder %s16, 0
    %p136 = por %p134, %p135
    %s137 = ssub.s32 %s17, %s36
    %s138 = ssub.s32 %s18, %s32
    %s139 = sor.u32 %s137, %s138
    %p140 = scmp.eq.s32.totalorder %s139, 0
    %s142 = sadd.s32 %s141, 1
    %s143 = scalar_select %p140, %s141, %s142
    %p146 = pneg %p140
    %p147 = scmp.eq.s32.totalorder %s10, 111
    %p148 = por %p146, %p147
    %p149 = scmp.ne.s32.totalorder %s141, %s144
    %p150 = scmp.eq.s32.totalorder %s10, 0
    %p151 = por %p149, %p150
    %p152 = scmp.ne.s32.totalorder %s141, %s144
    %p153 = scmp.eq.s32.totalorder %s15, 111
    %p154 = por %p152, %p153
    %p155 = scmp.ne.s32.totalorder %s144, %s145
    %p156 = scmp.eq.s32.totalorder %s15, 0
    %p157 = por %p155, %p156
    %p158 = scmp.ne.s32.totalorder %s144, %s145
    %p159 = scmp.eq.s32.totalorder %s16, 111
    %p160 = por %p158, %p159
    %p162 = scmp.ne.s32.totalorder %s145, %s161
    %p163 = scmp.eq.s32.totalorder %s16, 0
    %p164 = por %p162, %p163
    %p165 = scmp.le.s32.totalorder 1, %s10
    %p166 = scmp.lt.s32.totalorder %s10, 113
    %p167 = pnand %p165, %p166
    %p168 = pneg %p167
    // Predicated region
    $region9: #{tudu_forward.6} parent=5 // pred_check
      _
    $region10: #{tudu_forward.6} parent=5 // pred_check_branch
      %170 = sbr.rel (%p167) target = $region12
    $region11: #{tudu_forward.6} parent=5 // pred_region
      %s171 = ssub.s32 %s10, 1
      // Predicated region
      $region13: #{tudu_forward.6} parent=11 // pred_check
        %p172 = pneg %p82
      $region14: #{tudu_forward.6} parent=11 // pred_check_branch
        %174 = sbr.rel (%p172) target = $region16
      $region15: #{tudu_forward.6} parent=11 // pred_region
        _
      $region16: #{tudu_forward.6} parent=11 // pred_fallthru
        _
      // Predicated region
      $region17: #{tudu_forward.6} parent=11 // pred_check
        %p175 = pneg %p129
      $region18: #{tudu_forward.6} parent=11 // pred_check_branch
        %177 = sbr.rel (%p175) target = $region20
      $region19: #{tudu_forward.6} parent=11 // pred_region
        _
      $region20: #{tudu_forward.6} parent=11 // pred_fallthru
        _
    $region12: #{tudu_forward.6} parent=5 // pred_fallthru
      _
    %p178 = scmp.lt.s32.totalorder %s10, 112
    // Predicated region
    $region21: #{tudu_forward.6} parent=5 // pred_check
      %p179 = pneg %p178
    $region22: #{tudu_forward.6} parent=5 // pred_check_branch
      %181 = sbr.rel (%p179) target = $region24
    $region23: #{tudu_forward.6} parent=5 // pred_region
      // Predicated region
      $region25: #{tudu_forward.6} parent=23 // pred_check
        %p182 = pneg %p55
      $region26: #{tudu_forward.6} parent=23 // pred_check_branch
        %184 = sbr.rel (%p182) target = $region28
      $region27: #{tudu_forward.6} parent=23 // pred_region
        %s185 = smul.u32 %s18, 2
        %s186 = sadd.s32 %s185, %s19
        %p187 = scmp.lt.s32.totalorder %s17, 1
        %s188 = scalar_select %p187, %s17, 1
        %p189 = scmp.lt.s32.totalorder %s186, 21
        %s190 = scalar_select %p189, %s186, 21
        %s191 = smul.addr %s190, 4
        %s192 = smul.addr %s188, 88
        %s193 = sadd.s32 %s191, %s192
        %s194 = smul.addr %s193, 4
        %s195 = scalar_lea.vmem %s0, %s194
        %s196 = smul.u32 %s18, 2
        %s197 = sadd.s32 %s196, %s19
      $region28: #{tudu_forward.6} parent=23 // pred_fallthru
        _
      // Predicated region
      $region29: #{tudu_forward.6} parent=23 // pred_check
        %p198 = pneg %p102
      $region30: #{tudu_forward.6} parent=23 // pred_check_branch
        %200 = sbr.rel (%p198) target = $region32
      $region31: #{tudu_forward.6} parent=23 // pred_region
        %p201 = scmp.lt.s32.totalorder %s17, 1
        %s202 = scalar_select %p201, %s17, 1
        %s203 = scalar_lea.vmem %s2, %s202
      $region32: #{tudu_forward.6} parent=23 // pred_fallthru
        _
    $region24: #{tudu_forward.6} parent=5 // pred_fallthru
      _
    %p204 = scmp.le.s32.totalorder 1, %s10
    %p205 = scmp.lt.s32.totalorder %s10, 113
    %p206 = pnand %p204, %p205
    %p207 = pneg %p206
    // Predicated region
    $region33: #{tudu_forward.6} parent=5 // pred_check
      _
    $region34: #{tudu_forward.6} parent=5 // pred_check_branch
      %209 = sbr.rel (%p206) target = $region36
    $region35: #{tudu_forward.6} parent=5 // pred_region
      %s210 = ssub.s32 %s10, 1
      %s211 = smul.u32 %s21, 2
      %s212 = sadd.s32 %s211, %s22
      %p213 = scmp.lt.s32.totalorder %s20, 1
      %s214 = scalar_select %p213, %s20, 1
      %p215 = scmp.lt.s32.totalorder %s212, 21
      %s216 = scalar_select %p215, %s212, 21
      %s217 = smul.addr %s216, 4
      %s218 = smul.addr %s214, 88
      %s219 = sadd.s32 %s217, %s218
      %s220 = smul.addr %s219, 4
      %s221 = scalar_lea.vmem %s0, %s220
      %p222 = pneg %p61
      %p223 = pneg %p58
      %p224 = pneg %p82
      %p225 = pneg %p79
      %p226 = scmp.lt.s32.totalorder %s20, 1
      %s227 = scalar_select %p226, %s20, 1
      %s228 = scalar_lea.vmem %s2, %s227
      %p229 = pneg %p108
      %p230 = pneg %p105
      %p231 = pneg %p129
      %p232 = pneg %p126
      %p233 = pneg %p157
      %p234 = pneg %p154
      %p235 = scmp.lt.s32.totalorder %s20, 1
      %s236 = scalar_select %p235, %s20, 1
      %p237 = scmp.lt.s32.totalorder %s21, 7
      %s238 = scalar_select %p237, %s21, 7
      %s239 = smul.addr %s236, 8
      %s240 = sadd.s32 %s238, %s239
      %s241 = smul.addr %s240, 4
      %s242 = scalar_lea.vmem %s4, %s241
      %s243 = smul.u32 %s21, 2
      %s244 = sadd.s32 %s243, %s22
      %p245 = scmp.lt.s32.totalorder %s20, 1
      %s246 = scalar_select %p245, %s20, 1
      %p247 = scmp.lt.s32.totalorder %s244, 21
      %s248 = scalar_select %p247, %s244, 21
      %s249 = smul.addr %s248, 4
      %s250 = smul.addr %s246, 88
      %s251 = sadd.s32 %s249, %s250
      %s252 = smul.addr %s251, 4
      %s253 = scalar_lea.vmem %s0, %s252
      %s254 = smul.u32 %s21, 2
      %s255 = sadd.s32 %s254, %s22
      %p256 = scmp.lt.s32.totalorder %s20, 1
      %s257 = scalar_select %p256, %s20, 1
      %s258 = scalar_lea.vmem %s2, %s257
      %p259 = scmp.lt.s32.totalorder %s20, 1
      %s260 = scalar_select %p259, %s20, 1
      %p261 = scmp.lt.s32.totalorder %s21, 7
      %s262 = scalar_select %p261, %s21, 7
      %s263 = smul.addr %s260, 8
      %s264 = sadd.s32 %s262, %s263
      %s265 = smul.addr %s264, 4
      %s266 = scalar_lea.vmem %s4, %s265
      %p268 = scmp.eq.s32.totalorder %s22, 0
      // Predicated region
      $region37: #{tudu_forward.6} parent=35 // pred_check
        %p269 = pneg %p268
      $region38: #{tudu_forward.6} parent=35 // pred_check_branch
        %271 = sbr.rel (%p269) target = $region40
      $region39: #{tudu_forward.6} parent=35 // pred_region
        %vm272 = vcmask 523264
        %273 = vst.msk [vmem:[#allocation2] sm:$0xff] %vm272, 0.0
      $region40: #{tudu_forward.6} parent=35 // pred_fallthru
        _
      %v274 = vld [vmem:[%s253] sm:$0xf]
      %v275 = vld [vmem:[%s253 + $0x4] sm:$0x3]
      %v276 = vld [vmem:[%s253 + $0x8] sm:$0xf]
      %v277 = vld [vmem:[%s253 + $0xc] sm:$0x3]
      %v278 = vunpack.c.l.bf16 %v274
      %v279 = vunpack.c.l.bf16 %v275
      %v280 = vunpack.c.l.bf16 %v276
      %v281 = vunpack.c.l.bf16 %v277
      %v282 = vld [vmem:[%s258] sm:$0x1]
      %v284 = vlaneseq
      %v285 = vshrl.u32 %v284, 7
      %v286 = vsub.s32 0, %v285
      %v287 = vrot.slane %v282, %v286
      %v289 = vmul.f32 %v278, %v287
      %v290 = vmul.f32 %v279, %v287
      %v291 = vmul.f32 %v280, %v287
      %v292 = vmul.f32 %v281, %v287
      %v293 = vpack.c.bf16 %v289, %v289
      %s294 = smul.u32 %s22, 7
      %s295 = smul.addr %s294, 2
      %s296 = scalar_lea.vmem %s1, %s295
      %v297 = vld [vmem:[%s296] sm:$0x3]
      %v298 = vpack.c.bf16 %v291, %v291
      %s299 = sadd.s32 %s294, 1
      %s300 = smul.addr %s299, 2
      %s301 = scalar_lea.vmem %s1, %s300
      %v302 = vld [vmem:[%s301] sm:$0x3]
      %vm303 = vcmask 23552
      %v305 = vsel %vm303, %v298, 0
      %vm307 = vcmask 1040384
      %vm308 = vcmask 1041408
      %v309 = vsel %vm307, 4294967295, 65535
      %v310 = vsel %vm308, %v309, 0
      %v312 = vand.u32 %v302, %v310
      %314 = vmatprep.subr.bf16.mxu0 0
      %315 = vmatpush1.bf16.msra.mxu0 0
      %316 = vmatprep.subr.bf16.mxu0 0
      %317 = vmatpush1.bf16.msra.mxu0 0
      %318 = vmatprep.subr.bf16.mxu0 0
      %319 = vmatpush1.bf16.msra.mxu0 0
      %320 = vmatprep.subr.bf16.mxu0 0
      %321 = vmatpush1.bf16.msra.mxu0 0
      %322 = vmatprep.subr.bf16.mxu0 0
      %323 = vmatpush1.bf16.msra.mxu0 0
      %324 = vmatprep.subr.bf16.mxu0 0
      %325 = vmatpush1.bf16.msra.mxu0 0
      %326 = vmatprep.subr.bf16.mxu0 0
      %327 = vmatpush1.bf16.msra.mxu0 0
      %328 = vmatprep.subr.bf16.mxu0 0
      %329 = vmatpush1.bf16.msra.mxu0 %v312
      %330 = vmatprep.subr.bf16.mxu0 0
      %331 = vmatpush2.bf16.msra.mxu0 0
      %332 = vmatprep.subr.bf16.mxu0 0
      %333 = vmatpush2.bf16.msra.mxu0 0
      %334 = vmatprep.subr.bf16.mxu0 0
      %335 = vmatpush2.bf16.msra.mxu0 0
      %336 = vmatprep.subr.bf16.mxu0 0
      %337 = vmatpush2.bf16.msra.mxu0 0
      %338 = vmatprep.subr.bf16.mxu0 0
      %339 = vmatpush2.bf16.msra.mxu0 0
      %340 = vmatprep.subr.bf16.mxu0 0
      %341 = vmatpush2.bf16.msra.mxu0 0
      %342 = vmatprep.subr.bf16.mxu0 0
      %343 = vmatpush2.bf16.msra.mxu0 0
      %344 = vmatprep.subr.bf16.mxu0 0
      %345 = vmatpush2.bf16.msra.mxu0 0
      %346 = vmatprep.mubr.bf16.mxu0 0
      %347 = vmatmul.mubr.bf16.gmra.mxu0 %v305
      %v348 = vpop.f32.mrf.mxu0
      %v349 = vadd.f32 0.0, %v348
      %v350 = vpop.f32.mrf.mxu0
      %v351 = vpop.f32.mrf.mxu0
      %v352 = vpop.f32.mrf.mxu0
      %353 = vdwg.mxu0
      %v355 = vsel %vm303, %v293, 0
      %v358 = vand.u32 %v297, %v310
      %360 = vmatprep.subr.bf16.mxu0 0
      %361 = vmatpush1.bf16.msra.mxu0 0
      %362 = vmatprep.subr.bf16.mxu0 0
      %363 = vmatpush1.bf16.msra.mxu0 0
      %364 = vmatprep.subr.bf16.mxu0 0
      %365 = vmatpush1.bf16.msra.mxu0 0
      %366 = vmatprep.subr.bf16.mxu0 0
      %367 = vmatpush1.bf16.msra.mxu0 0
      %368 = vmatprep.subr.bf16.mxu0 0
      %369 = vmatpush1.bf16.msra.mxu0 0
      %370 = vmatprep.subr.bf16.mxu0 0
      %371 = vmatpush1.bf16.msra.mxu0 0
      %372 = vmatprep.subr.bf16.mxu0 0
      %373 = vmatpush1.bf16.msra.mxu0 0
      %374 = vmatprep.subr.bf16.mxu0 0
      %375 = vmatpush1.bf16.msra.mxu0 %v358
      %376 = vmatprep.subr.bf16.mxu0 0
      %377 = vmatpush2.bf16.msra.mxu0 0
      %378 = vmatprep.subr.bf16.mxu0 0
      %379 = vmatpush2.bf16.msra.mxu0 0
      %380 = vmatprep.subr.bf16.mxu0 0
      %381 = vmatpush2.bf16.msra.mxu0 0
      %382 = vmatprep.subr.bf16.mxu0 0
      %383 = vmatpush2.bf16.msra.mxu0 0
      %384 = vmatprep.subr.bf16.mxu0 0
      %385 = vmatpush2.bf16.msra.mxu0 0
      %386 = vmatprep.subr.bf16.mxu0 0
      %387 = vmatpush2.bf16.msra.mxu0 0
      %388 = vmatprep.subr.bf16.mxu0 0
      %389 = vmatpush2.bf16.msra.mxu0 0
      %390 = vmatprep.subr.bf16.mxu0 0
      %391 = vmatpush2.bf16.msra.mxu0 0
      %392 = vmatprep.mubr.bf16.mxu0 0
      %393 = vmatmul.mubr.bf16.gmra.mxu0 %v355
      %v394 = vpop.f32.mrf.mxu0
      %v395 = vadd.f32 %v349, %v394
      %v396 = vpop.f32.mrf.mxu0
      %v397 = vpop.f32.mrf.mxu0
      %v398 = vpop.f32.mrf.mxu0
      %399 = vdwg.mxu0
      %v400 = vpack.c.bf16 %v290, %v289
      %s401 = sadd.s32 %s294, 2
      %s402 = smul.addr %s401, 2
      %s403 = scalar_lea.vmem %s1, %s402
      %v404 = vld [vmem:[%s403] sm:$0x3]
      %v406 = vshrl.u32 %v400, 16
      %v408 = vshll.u32 %v400, 16
      %v410 = vrot.slane %v408, 1
      %v411 = vor.u32 %v406, %v410
      %v413 = vsel %vm303, %v411, 0
      %v416 = vand.u32 %v404, %v310
      %418 = vmatprep.subr.bf16.mxu0 0
      %419 = vmatpush1.bf16.msra.mxu0 0
      %420 = vmatprep.subr.bf16.mxu0 0
      %421 = vmatpush1.bf16.msra.mxu0 0
      %422 = vmatprep.subr.bf16.mxu0 0
      %423 = vmatpush1.bf16.msra.mxu0 0
      %424 = vmatprep.subr.bf16.mxu0 0
      %425 = vmatpush1.bf16.msra.mxu0 0
      %426 = vmatprep.subr.bf16.mxu0 0
      %427 = vmatpush1.bf16.msra.mxu0 0
      %428 = vmatprep.subr.bf16.mxu0 0
      %429 = vmatpush1.bf16.msra.mxu0 0
      %430 = vmatprep.subr.bf16.mxu0 0
      %431 = vmatpush1.bf16.msra.mxu0 0
      %432 = vmatprep.subr.bf16.mxu0 0
      %433 = vmatpush1.bf16.msra.mxu0 %v416
      %434 = vmatprep.subr.bf16.mxu0 0
      %435 = vmatpush2.bf16.msra.mxu0 0
      %436 = vmatprep.subr.bf16.mxu0 0
      %437 = vmatpush2.bf16.msra.mxu0 0
      %438 = vmatprep.subr.bf16.mxu0 0
      %439 = vmatpush2.bf16.msra.mxu0 0
      %440 = vmatprep.subr.bf16.mxu0 0
      %441 = vmatpush2.bf16.msra.mxu0 0
      %442 = vmatprep.subr.bf16.mxu0 0
      %443 = vmatpush2.bf16.msra.mxu0 0
      %444 = vmatprep.subr.bf16.mxu0 0
      %445 = vmatpush2.bf16.msra.mxu0 0
      %446 = vmatprep.subr.bf16.mxu0 0
      %447 = vmatpush2.bf16.msra.mxu0 0
      %448 = vmatprep.subr.bf16.mxu0 0
      %449 = vmatpush2.bf16.msra.mxu0 0
      %450 = vmatprep.mubr.bf16.mxu0 0
      %451 = vmatmul.mubr.bf16.gmra.mxu0 %v413
      %v452 = vpop.f32.mrf.mxu0
      %v453 = vadd.f32 0.0, %v452
      %v454 = vpop.f32.mrf.mxu0
      %v455 = vpop.f32.mrf.mxu0
      %v456 = vpop.f32.mrf.mxu0
      %457 = vdwg.mxu0
      %v458 = vadd.f32 %v395, %v453
      %v459 = vpack.c.bf16 %v292, %v291
      %s460 = sadd.s32 %s294, 3
      %s461 = smul.addr %s460, 2
      %s462 = scalar_lea.vmem %s1, %s461
      %v463 = vld [vmem:[%s462] sm:$0x3]
      %v465 = vshrl.u32 %v459, 16
      %v467 = vshll.u32 %v459, 16
      %v469 = vrot.slane %v467, 1
      %v470 = vor.u32 %v465, %v469
      %v472 = vsel %vm303, %v470, 0
      %v475 = vand.u32 %v463, %v310
      %477 = vmatprep.subr.bf16.mxu0 0
      %478 = vmatpush1.bf16.msra.mxu0 0
      %479 = vmatprep.subr.bf16.mxu0 0
      %480 = vmatpush1.bf16.msra.mxu0 0
      %481 = vmatprep.subr.bf16.mxu0 0
      %482 = vmatpush1.bf16.msra.mxu0 0
      %483 = vmatprep.subr.bf16.mxu0 0
      %484 = vmatpush1.bf16.msra.mxu0 0
      %485 = vmatprep.subr.bf16.mxu0 0
      %486 = vmatpush1.bf16.msra.mxu0 0
      %487 = vmatprep.subr.bf16.mxu0 0
      %488 = vmatpush1.bf16.msra.mxu0 0
      %489 = vmatprep.subr.bf16.mxu0 0
      %490 = vmatpush1.bf16.msra.mxu0 0
      %491 = vmatprep.subr.bf16.mxu0 0
      %492 = vmatpush1.bf16.msra.mxu0 %v475
      %493 = vmatprep.subr.bf16.mxu0 0
      %494 = vmatpush2.bf16.msra.mxu0 0
      %495 = vmatprep.subr.bf16.mxu0 0
      %496 = vmatpush2.bf16.msra.mxu0 0
      %497 = vmatprep.subr.bf16.mxu0 0
      %498 = vmatpush2.bf16.msra.mxu0 0
      %499 = vmatprep.subr.bf16.mxu0 0
      %500 = vmatpush2.bf16.msra.mxu0 0
      %501 = vmatprep.subr.bf16.mxu0 0
      %502 = vmatpush2.bf16.msra.mxu0 0
      %503 = vmatprep.subr.bf16.mxu0 0
      %504 = vmatpush2.bf16.msra.mxu0 0
      %505 = vmatprep.subr.bf16.mxu0 0
      %506 = vmatpush2.bf16.msra.mxu0 0
      %507 = vmatprep.subr.bf16.mxu0 0
      %508 = vmatpush2.bf16.msra.mxu0 0
      %509 = vmatprep.mubr.bf16.mxu0 0
      %510 = vmatmul.mubr.bf16.gmra.mxu0 %v472
      %v511 = vpop.f32.mrf.mxu0
      %v512 = vadd.f32 0.0, %v511
      %v513 = vpop.f32.mrf.mxu0
      %v514 = vpop.f32.mrf.mxu0
      %v515 = vpop.f32.mrf.mxu0
      %516 = vdwg.mxu0
      %v517 = vadd.f32 %v458, %v512
      %s518 = sadd.s32 %s294, 4
      %s519 = smul.addr %s518, 2
      %s520 = scalar_lea.vmem %s1, %s519
      %v521 = vld [vmem:[%s520] sm:$0x3]
      %v523 = vrot.slane %v400, 1
      %v525 = vsel %vm303, %v523, 0
      %v528 = vand.u32 %v521, %v310
      %530 = vmatprep.subr.bf16.mxu0 0
      %531 = vmatpush1.bf16.msra.mxu0 0
      %532 = vmatprep.subr.bf16.mxu0 0
      %533 = vmatpush1.bf16.msra.mxu0 0
      %534 = vmatprep.subr.bf16.mxu0 0
      %535 = vmatpush1.bf16.msra.mxu0 0
      %536 = vmatprep.subr.bf16.mxu0 0
      %537 = vmatpush1.bf16.msra.mxu0 0
      %538 = vmatprep.subr.bf16.mxu0 0
      %539 = vmatpush1.bf16.msra.mxu0 0
      %540 = vmatprep.subr.bf16.mxu0 0
      %541 = vmatpush1.bf16.msra.mxu0 0
      %542 = vmatprep.subr.bf16.mxu0 0
      %543 = vmatpush1.bf16.msra.mxu0 0
      %544 = vmatprep.subr.bf16.mxu0 0
      %545 = vmatpush1.bf16.msra.mxu0 %v528
      %546 = vmatprep.subr.bf16.mxu0 0
      %547 = vmatpush2.bf16.msra.mxu0 0
      %548 = vmatprep.subr.bf16.mxu0 0
      %549 = vmatpush2.bf16.msra.mxu0 0
      %550 = vmatprep.subr.bf16.mxu0 0
      %551 = vmatpush2.bf16.msra.mxu0 0
      %552 = vmatprep.subr.bf16.mxu0 0
      %553 = vmatpush2.bf16.msra.mxu0 0
      %554 = vmatprep.subr.bf16.mxu0 0
      %555 = vmatpush2.bf16.msra.mxu0 0
      %556 = vmatprep.subr.bf16.mxu0 0
      %557 = vmatpush2.bf16.msra.mxu0 0
      %558 = vmatprep.subr.bf16.mxu0 0
      %559 = vmatpush2.bf16.msra.mxu0 0
      %560 = vmatprep.subr.bf16.mxu0 0
      %561 = vmatpush2.bf16.msra.mxu0 0
      %562 = vmatprep.mubr.bf16.mxu0 0
      %563 = vmatmul.mubr.bf16.gmra.mxu0 %v525
      %v564 = vpop.f32.mrf.mxu0
      %v565 = vadd.f32 0.0, %v564
      %v566 = vpop.f32.mrf.mxu0
      %v567 = vpop.f32.mrf.mxu0
      %v568 = vpop.f32.mrf.mxu0
      %569 = vdwg.mxu0
      %v570 = vadd.f32 %v517, %v565
      %s571 = sadd.s32 %s294, 5
      %s572 = smul.addr %s571, 2
      %s573 = scalar_lea.vmem %s1, %s572
      %v574 = vld [vmem:[%s573] sm:$0x3]
      %v576 = vrot.slane %v459, 1
      %v578 = vsel %vm303, %v576, 0
      %v581 = vand.u32 %v574, %v310
      %583 = vmatprep.subr.bf16.mxu0 0
      %584 = vmatpush1.bf16.msra.mxu0 0
      %585 = vmatprep.subr.bf16.mxu0 0
      %586 = vmatpush1.bf16.msra.mxu0 0
      %587 = vmatprep.subr.bf16.mxu0 0
      %588 = vmatpush1.bf16.msra.mxu0 0
      %589 = vmatprep.subr.bf16.mxu0 0
      %590 = vmatpush1.bf16.msra.mxu0 0
      %591 = vmatprep.subr.bf16.mxu0 0
      %592 = vmatpush1.bf16.msra.mxu0 0
      %593 = vmatprep.subr.bf16.mxu0 0
      %594 = vmatpush1.bf16.msra.mxu0 0
      %595 = vmatprep.subr.bf16.mxu0 0
      %596 = vmatpush1.bf16.msra.mxu0 0
      %597 = vmatprep.subr.bf16.mxu0 0
      %598 = vmatpush1.bf16.msra.mxu0 %v581
      %599 = vmatprep.subr.bf16.mxu0 0
      %600 = vmatpush2.bf16.msra.mxu0 0
      %601 = vmatprep.subr.bf16.mxu0 0
      %602 = vmatpush2.bf16.msra.mxu0 0
      %603 = vmatprep.subr.bf16.mxu0 0
      %604 = vmatpush2.bf16.msra.mxu0 0
      %605 = vmatprep.subr.bf16.mxu0 0
      %606 = vmatpush2.bf16.msra.mxu0 0
      %607 = vmatprep.subr.bf16.mxu0 0
      %608 = vmatpush2.bf16.msra.mxu0 0
      %609 = vmatprep.subr.bf16.mxu0 0
      %610 = vmatpush2.bf16.msra.mxu0 0
      %611 = vmatprep.subr.bf16.mxu0 0
      %612 = vmatpush2.bf16.msra.mxu0 0
      %613 = vmatprep.subr.bf16.mxu0 0
      %614 = vmatpush2.bf16.msra.mxu0 0
      %615 = vmatprep.mubr.bf16.mxu0 0
      %616 = vmatmul.mubr.bf16.gmra.mxu0 %v578
      %v617 = vpop.f32.mrf.mxu0
      %v618 = vadd.f32 0.0, %v617
      %v619 = vpop.f32.mrf.mxu0
      %v620 = vpop.f32.mrf.mxu0
      %v621 = vpop.f32.mrf.mxu0
      %622 = vdwg.mxu0
      %v623 = vadd.f32 %v570, %v618
      %s624 = sadd.s32 %s294, 6
      %s625 = smul.addr %s624, 2
      %s626 = scalar_lea.vmem %s1, %s625
      %v627 = vld [vmem:[%s626] sm:$0x3]
      %v628 = vrot.slane %v406, 1
      %v629 = vrot.slane %v408, 2
      %v630 = vor.u32 %v628, %v629
      %v632 = vsel %vm303, %v630, 0
      %v635 = vand.u32 %v627, %v310
      %637 = vmatprep.subr.bf16.mxu0 0
      %638 = vmatpush1.bf16.msra.mxu0 0
      %639 = vmatprep.subr.bf16.mxu0 0
      %640 = vmatpush1.bf16.msra.mxu0 0
      %641 = vmatprep.subr.bf16.mxu0 0
      %642 = vmatpush1.bf16.msra.mxu0 0
      %643 = vmatprep.subr.bf16.mxu0 0
      %644 = vmatpush1.bf16.msra.mxu0 0
      %645 = vmatprep.subr.bf16.mxu0 0
      %646 = vmatpush1.bf16.msra.mxu0 0
      %647 = vmatprep.subr.bf16.mxu0 0
      %648 = vmatpush1.bf16.msra.mxu0 0
      %649 = vmatprep.subr.bf16.mxu0 0
      %650 = vmatpush1.bf16.msra.mxu0 0
      %651 = vmatprep.subr.bf16.mxu0 0
      %652 = vmatpush1.bf16.msra.mxu0 %v635
      %653 = vmatprep.subr.bf16.mxu0 0
      %654 = vmatpush2.bf16.msra.mxu0 0
      %655 = vmatprep.subr.bf16.mxu0 0
      %656 = vmatpush2.bf16.msra.mxu0 0
      %657 = vmatprep.subr.bf16.mxu0 0
      %658 = vmatpush2.bf16.msra.mxu0 0
      %659 = vmatprep.subr.bf16.mxu0 0
      %660 = vmatpush2.bf16.msra.mxu0 0
      %661 = vmatprep.subr.bf16.mxu0 0
      %662 = vmatpush2.bf16.msra.mxu0 0
      %663 = vmatprep.subr.bf16.mxu0 0
      %664 = vmatpush2.bf16.msra.mxu0 0
      %665 = vmatprep.subr.bf16.mxu0 0
      %666 = vmatpush2.bf16.msra.mxu0 0
      %667 = vmatprep.subr.bf16.mxu0 0
      %668 = vmatpush2.bf16.msra.mxu0 0
      %669 = vmatprep.mubr.bf16.mxu0 0
      %670 = vmatmul.mubr.bf16.gmra.mxu0 %v632
      %v671 = vpop.f32.mrf.mxu0
      %v672 = vadd.f32 0.0, %v671
      %v673 = vpop.f32.mrf.mxu0
      %v674 = vpop.f32.mrf.mxu0
      %v675 = vpop.f32.mrf.mxu0
      %676 = vdwg.mxu0
      %v677 = vadd.f32 %v623, %v672
      %v678 = vld [vmem:[#allocation2] sm:$0xff]
      %v679 = vadd.f32 %v678, %v677
      %vm680 = vcmask 523264
      %681 = vst.msk [vmem:[#allocation2] sm:$0xff] %vm680, %v679
      %p682 = scmp.eq.s32.totalorder %s22, 6
      // Predicated region
      $region41: #{tudu_forward.6} parent=35 // pred_check
        %p683 = pneg %p682
      $region42: #{tudu_forward.6} parent=35 // pred_check_branch
        %685 = sbr.rel (%p683) target = $region44
      $region43: #{tudu_forward.6} parent=35 // pred_region
        %v686 = vld [vmem:[#allocation2] sm:$0xff]
        %v687 = vld [vmem:[%s3] sm:$0x1]
        %v689 = vlaneseq
        %v690 = vshrl.u32 %v689, 7
        %v691 = vsub.s32 0, %v690
        %v692 = vrot.slane %v687, %v691
        %v694 = vadd.f32 %v686, %v692
        %v695 = vmax.f32 %v694, 0.0
        %v696 = vpack.c.bf16 %v695, %v695
        %vm697 = vcmask 519168
        %698 = vst.msk [vmem:[%s266] sm:$0xf] %vm697, %v696
      $region44: #{tudu_forward.6} parent=35 // pred_fallthru
        _
      %p699 = scmp.lt.s32.totalorder %s20, 1
      %s700 = scalar_select %p699, %s20, 1
      %p701 = scmp.lt.s32.totalorder %s21, 7
      %s702 = scalar_select %p701, %s21, 7
      %s703 = smul.addr %s700, 8
      %s704 = sadd.s32 %s702, %s703
      %s705 = smul.addr %s704, 4
      %s706 = scalar_lea.vmem %s4, %s705
      // Predicated region
      $region45: #{tudu_forward.6} parent=35 // pred_check
        %p707 = pneg %p154
      $region46: #{tudu_forward.6} parent=35 // pred_check_branch
        %709 = sbr.rel (%p707) target = $region48
      $region47: #{tudu_forward.6} parent=35 // pred_region
        _
      $region48: #{tudu_forward.6} parent=35 // pred_fallthru
        _
    $region36: #{tudu_forward.6} parent=5 // pred_fallthru
      _
    %p710 = scmp.le.s32.totalorder 2, %s10
    // Predicated region
    $region49: #{tudu_forward.6} parent=5 // pred_check
      %p711 = pneg %p710
    $region50: #{tudu_forward.6} parent=5 // pred_check_branch
      %713 = sbr.rel (%p711) target = $region52
    $region51: #{tudu_forward.6} parent=5 // pred_region
      %s714 = ssub.s32 %s10, 2
      // Predicated region
      $region53: #{tudu_forward.6} parent=51 // pred_check
        %p715 = pneg %p160
      $region54: #{tudu_forward.6} parent=51 // pred_check_branch
        %717 = sbr.rel (%p715) target = $region56
      $region55: #{tudu_forward.6} parent=51 // pred_region
        %p718 = scmp.lt.s32.totalorder %s23, 1
        %s719 = scalar_select %p718, %s23, 1
        %p720 = scmp.lt.s32.totalorder %s24, 7
        %s721 = scalar_select %p720, %s24, 7
        %s722 = smul.addr %s719, 8
        %s723 = sadd.s32 %s721, %s722
        %s724 = smul.addr %s723, 4
        %s725 = scalar_lea.vmem %s4, %s724
      $region56: #{tudu_forward.6} parent=51 // pred_fallthru
        _
    $region52: #{tudu_forward.6} parent=5 // pred_fallthru
      _
  $region6: #{tudu_forward.6} parent=0 // loop_footer
    %s14 = sadd.s32 1, %s10
  $region7: #{tudu_forward.6} parent=0 // loop_footer_branch
    %9 = sbr.rel target = $region3
  $region8: #{tudu_forward.6} parent=0 // loop_exit
    _

// kernel: tudu_forward.7
$region0: #{tudu_forward.7}
  #allocation0 [shape = 'u32[]', space=smem, size = 0x4, offset = 0x4, fixed_abs, tag = 'smem constant byte address 0x4 - core index']
  #allocation1 [shape = 'u32[144,128]{1,0:T(1,128)}', space=vmem, size = 0x12000, scoped, tag = 'internal scratch']
  #allocation2 [shape = 'f32[1,64]{1,0:T(1,128)}', space=vmem, size = 0x200, scoped, tag = 'scratch operand']
  %s0 = inlined_call_operand.vmem [shape: bf16[2,64,64], index: 0, kind: input, shape index: {}]
  %s1 = inlined_call_operand.vmem [shape: f32[64,4], index: 1, kind: input, shape index: {}]
  %s2 = inlined_call_operand.vmem [shape: f32[4,64], index: 2, kind: input, shape index: {}]
  %s3 = inlined_call_operand.vmem [shape: f32[2,1,64], index: 3, kind: output, shape index: {}]
  %s4 = sld [smem:[#allocation0]]
  $region53: #{tudu_forward.7} parent=0
    _
  %s6 = ssub.s32 1, %s4
  %s7 = scalar_select 0, %s6, %s4
  loop: start=0, step=1, limit=4
  $region2: #{tudu_forward.7} parent=0 // loop_pre_header
    _
  $region3: #{tudu_forward.7} parent=0 // loop_header
    %s9 = sphi 0, %s13
    %p10 = scmp.ge.s32.totalorder %s9, 4
    %s16 = sphi 0, %s28
    %s17 = sphi 0, %s24
    %s18 = sphi 0, %s16
    %s19 = sphi 0, %s17
    %s20 = sphi 0, %s18
    %s21 = sphi 0, %s19
    %s33 = sphi 0, %s35
    %s36 = sphi 0, %s33
    %s37 = sphi 0, %s36
    %s53 = sphi 0, %s37
    %s57 = sphi 0, %s57
    %s59 = sphi 0, %s57
    %s60 = sphi 0, %s59
    %s74 = sphi 0, %s60
    %s78 = sphi 0, %s78
    %s80 = sphi 0, %s78
    %s81 = sphi 0, %s80
    %s95 = sphi 0, %s81
    %s101 = sphi 0, %s103
    %s104 = sphi 0, %s101
    %s105 = sphi 0, %s104
    %s121 = sphi 0, %s105
  $region4: #{tudu_forward.7} parent=0 // loop_header_branch
    %12 = sbr.rel (%p10) target = $region8
  $region5: #{tudu_forward.7} parent=0 // loop_body
    %s14 = ssub.s32 %s9, 1
    %s15 = ssub.s32 %s9, 2
    %s22 = sadd.s32 1, %s17
    %p23 = scmp.ge.s32.totalorder %s22, 1
    %s24 = scalar_select %p23, 0, %s22
    %s25 = sadd.s32 1, %s16
    %s26 = scalar_select %p23, %s25, %s16
    %p27 = scmp.ge.s32.totalorder %s26, 2
    %s28 = scalar_select %p27, 0, %s26
    %s29 = ssub.s32 %s16, %s28
    %s30 = ssub.s32 %s17, %s24
    %s31 = sor.u32 %s29, %s30
    %p32 = scmp.eq.s32.totalorder %s31, 0
    %s34 = sadd.s32 %s33, 1
    %s35 = scalar_select %p32, %s33, %s34
    %p38 = pneg %p32
    %p39 = scmp.eq.s32.totalorder %s9, 1
    %p40 = por %p38, %p39
    %p41 = scmp.ne.s32.totalorder %s33, %s36
    %p42 = scmp.eq.s32.totalorder %s9, 0
    %p43 = por %p41, %p42
    %p44 = scmp.ne.s32.totalorder %s33, %s36
    %p45 = scmp.eq.s32.totalorder %s14, 1
    %p46 = por %p44, %p45
    %p47 = scmp.ne.s32.totalorder %s36, %s37
    %p48 = scmp.eq.s32.totalorder %s14, 0
    %p49 = por %p47, %p48
    %p50 = scmp.ne.s32.totalorder %s36, %s37
    %p51 = scmp.eq.s32.totalorder %s15, 1
    %p52 = por %p50, %p51
    %p54 = scmp.ne.s32.totalorder %s37, %s53
    %p55 = scmp.eq.s32.totalorder %s15, 0
    %p56 = por %p54, %p55
    %s58 = sadd.s32 %s57, 1
    %p61 = scmp.eq.s32.totalorder %s9, 1
    %p62 = scmp.ne.s32.totalorder %s57, %s59
    %p63 = scmp.eq.s32.totalorder %s9, 0
    %p64 = por %p62, %p63
    %p65 = scmp.ne.s32.totalorder %s57, %s59
    %p66 = scmp.eq.s32.totalorder %s14, 1
    %p67 = por %p65, %p66
    %p68 = scmp.ne.s32.totalorder %s59, %s60
    %p69 = scmp.eq.s32.totalorder %s14, 0
    %p70 = por %p68, %p69
    %p71 = scmp.ne.s32.totalorder %s59, %s60
    %p72 = scmp.eq.s32.totalorder %s15, 1
    %p73 = por %p71, %p72
    %p75 = scmp.ne.s32.totalorder %s60, %s74
    %p76 = scmp.eq.s32.totalorder %s15, 0
    %p77 = por %p75, %p76
    %s79 = sadd.s32 %s78, 1
    %p82 = scmp.eq.s32.totalorder %s9, 1
    %p83 = scmp.ne.s32.totalorder %s78, %s80
    %p84 = scmp.eq.s32.totalorder %s9, 0
    %p85 = por %p83, %p84
    %p86 = scmp.ne.s32.totalorder %s78, %s80
    %p87 = scmp.eq.s32.totalorder %s14, 1
    %p88 = por %p86, %p87
    %p89 = scmp.ne.s32.totalorder %s80, %s81
    %p90 = scmp.eq.s32.totalorder %s14, 0
    %p91 = por %p89, %p90
    %p92 = scmp.ne.s32.totalorder %s80, %s81
    %p93 = scmp.eq.s32.totalorder %s15, 1
    %p94 = por %p92, %p93
    %p96 = scmp.ne.s32.totalorder %s81, %s95
    %p97 = scmp.eq.s32.totalorder %s15, 0
    %p98 = por %p96, %p97
    %s99 = ssub.s32 %s16, %s28
    %p100 = scmp.eq.s32.totalorder %s99, 0
    %s102 = sadd.s32 %s101, 1
    %s103 = scalar_select %p100, %s101, %s102
    %p106 = pneg %p100
    %p107 = scmp.eq.s32.totalorder %s9, 1
    %p108 = por %p106, %p107
    %p109 = scmp.ne.s32.totalorder %s101, %s104
    %p110 = scmp.eq.s32.totalorder %s9, 0
    %p111 = por %p109, %p110
    %p112 = scmp.ne.s32.totalorder %s101, %s104
    %p113 = scmp.eq.s32.totalorder %s14, 1
    %p114 = por %p112, %p113
    %p115 = scmp.ne.s32.totalorder %s104, %s105
    %p116 = scmp.eq.s32.totalorder %s14, 0
    %p117 = por %p115, %p116
    %p118 = scmp.ne.s32.totalorder %s104, %s105
    %p119 = scmp.eq.s32.totalorder %s15, 1
    %p120 = por %p118, %p119
    %p122 = scmp.ne.s32.totalorder %s105, %s121
    %p123 = scmp.eq.s32.totalorder %s15, 0
    %p124 = por %p122, %p123
    %p125 = scmp.le.s32.totalorder 1, %s9
    %p126 = scmp.lt.s32.totalorder %s9, 3
    %p127 = pnand %p125, %p126
    %p128 = pneg %p127
    // Predicated region
    $region9: #{tudu_forward.7} parent=5 // pred_check
      _
    $region10: #{tudu_forward.7} parent=5 // pred_check_branch
      %130 = sbr.rel (%p127) target = $region12
    $region11: #{tudu_forward.7} parent=5 // pred_region
      %s131 = ssub.s32 %s9, 1
      // Predicated region
      $region13: #{tudu_forward.7} parent=11 // pred_check
        %p132 = pneg %p70
      $region14: #{tudu_forward.7} parent=11 // pred_check_branch
        %134 = sbr.rel (%p132) target = $region16
      $region15: #{tudu_forward.7} parent=11 // pred_region
        _
      $region16: #{tudu_forward.7} parent=11 // pred_fallthru
        _
      // Predicated region
      $region17: #{tudu_forward.7} parent=11 // pred_check
        %p135 = pneg %p91
      $region18: #{tudu_forward.7} parent=11 // pred_check_branch
        %137 = sbr.rel (%p135) target = $region20
      $region19: #{tudu_forward.7} parent=11 // pred_region
        _
      $region20: #{tudu_forward.7} parent=11 // pred_fallthru
        _
    $region12: #{tudu_forward.7} parent=5 // pred_fallthru
      _
    %p138 = scmp.lt.s32.totalorder %s9, 2
    // Predicated region
    $region21: #{tudu_forward.7} parent=5 // pred_check
      %p139 = pneg %p138
    $region22: #{tudu_forward.7} parent=5 // pred_check_branch
      %141 = sbr.rel (%p139) target = $region24
    $region23: #{tudu_forward.7} parent=5 // pred_region
      // Predicated region
      $region25: #{tudu_forward.7} parent=23 // pred_check
        %p142 = pneg %p43
      $region26: #{tudu_forward.7} parent=23 // pred_check_branch
        %144 = sbr.rel (%p142) target = $region28
      $region27: #{tudu_forward.7} parent=23 // pred_region
        %s145 = smul.u32 8, %s17
        %p146 = scmp.lt.s32.totalorder %s16, 1
        %s147 = scalar_select %p146, %s16, 1
        %p148 = scmp.lt.s32.totalorder %s145, 7
        %s149 = scalar_select %p148, %s145, 7
        %s150 = smul.addr %s147, 8
        %s151 = sadd.s32 %s149, %s150
        %s152 = smul.addr %s151, 4
        %s153 = scalar_lea.vmem %s0, %s152
        %s154 = smul.u32 8, %s17
      $region28: #{tudu_forward.7} parent=23 // pred_fallthru
        _
    $region24: #{tudu_forward.7} parent=5 // pred_fallthru
      _
    %p155 = scmp.le.s32.totalorder 1, %s9
    %p156 = scmp.lt.s32.totalorder %s9, 3
    %p157 = pnand %p155, %p156
    %p158 = pneg %p157
    // Predicated region
    $region29: #{tudu_forward.7} parent=5 // pred_check
      _
    $region30: #{tudu_forward.7} parent=5 // pred_check_branch
      %160 = sbr.rel (%p157) target = $region32
    $region31: #{tudu_forward.7} parent=5 // pred_region
      %s161 = ssub.s32 %s9, 1
      %s162 = smul.u32 8, %s19
      %p163 = scmp.lt.s32.totalorder %s18, 1
      %s164 = scalar_select %p163, %s18, 1
      %p165 = scmp.lt.s32.totalorder %s162, 7
      %s166 = scalar_select %p165, %s162, 7
      %s167 = smul.addr %s164, 8
      %s168 = sadd.s32 %s166, %s167
      %s169 = smul.addr %s168, 4
      %s170 = scalar_lea.vmem %s0, %s169
      %p171 = pneg %p49
      %p172 = pneg %p46
      %p173 = pneg %p70
      %p174 = pneg %p67
      %p175 = pneg %p91
      %p176 = pneg %p88
      %p177 = pneg %p117
      %p178 = pneg %p114
      %p179 = scmp.lt.s32.totalorder %s18, 1
      %s180 = scalar_select %p179, %s18, 1
      %s181 = scalar_lea.vmem %s3, %s180
      %s182 = smul.u32 8, %s19
      %p183 = scmp.lt.s32.totalorder %s18, 1
      %s184 = scalar_select %p183, %s18, 1
      %p185 = scmp.lt.s32.totalorder %s182, 7
      %s186 = scalar_select %p185, %s182, 7
      %s187 = smul.addr %s184, 8
      %s188 = sadd.s32 %s186, %s187
      %s189 = smul.addr %s188, 4
      %s190 = scalar_lea.vmem %s0, %s189
      %s191 = smul.u32 8, %s19
      %p192 = scmp.lt.s32.totalorder %s18, 1
      %s193 = scalar_select %p192, %s18, 1
      %s194 = scalar_lea.vmem %s3, %s193
      %p195 = scmp.eq.s32.totalorder %s19, 0
      // Predicated region
      $region33: #{tudu_forward.7} parent=31 // pred_check
        %p196 = pneg %p195
      $region34: #{tudu_forward.7} parent=31 // pred_check_branch
        %198 = sbr.rel (%p196) target = $region36
      $region35: #{tudu_forward.7} parent=31 // pred_region
        %vm199 = vcmask 516096
        %200 = vst.msk [vmem:[#allocation2] sm:$0x1] %vm199, 0.0
      $region36: #{tudu_forward.7} parent=31 // pred_fallthru
        _
      %v201 = vld [vmem:[%s190] sm:$0xf]
      %v202 = vld [vmem:[%s190 + $0x4] sm:$0xf]
      %v203 = vld [vmem:[%s190 + $0x8] sm:$0xf]
      %v204 = vld [vmem:[%s190 + $0xc] sm:$0xf]
      %v205 = vld [vmem:[%s190 + $0x10] sm:$0xf]
      %v206 = vld [vmem:[%s190 + $0x14] sm:$0xf]
      %v207 = vld [vmem:[%s190 + $0x18] sm:$0xf]
      %v208 = vld [vmem:[%s190 + $0x1c] sm:$0xf]
      %v209 = vunpack.c.l.bf16 %v201
      %v210 = vunpack.c.l.bf16 %v202
      %v211 = vunpack.c.l.bf16 %v203
      %v212 = vunpack.c.l.bf16 %v204
      %v213 = vunpack.c.l.bf16 %v205
      %v214 = vunpack.c.l.bf16 %v206
      %v215 = vunpack.c.l.bf16 %v207
      %v216 = vunpack.c.l.bf16 %v208
      %s217 = smul.u32 %s19, 64
      %v218 = vlaneseq
      %v219 = vshrl.u32 %v218, 7
      %v220 = vadd.s32 %v219, 8
      %v221 = vadd.s32 %v219, 16
      %v222 = vadd.s32 %v219, 24
      %v223 = vadd.s32 %v219, 32
      %v224 = vadd.s32 %v219, 40
      %v225 = vadd.s32 %v219, 48
      %v226 = vadd.s32 %v219, 56
      %v227 = vstv %s217
      %v228 = vadd.s32 %v227, %v219
      %v229 = vadd.s32 %v227, %v220
      %v230 = vadd.s32 %v227, %v221
      %v231 = vadd.s32 %v227, %v222
      %v232 = vadd.s32 %v227, %v223
      %v233 = vadd.s32 %v227, %v224
      %v234 = vadd.s32 %v227, %v225
      %v235 = vadd.s32 %v227, %v226
      %v236 = vld [vmem:[#allocation2] sm:$0x1]
      %vm237 = vcmp.lt.s32.totalorder %v228, 64
      %vm238 = vcmp.lt.s32.totalorder %v229, 64
      %vm239 = vcmp.lt.s32.totalorder %v230, 64
      %vm240 = vcmp.lt.s32.totalorder %v231, 64
      %vm241 = vcmp.lt.s32.totalorder %v232, 64
      %vm242 = vcmp.lt.s32.totalorder %v233, 64
      %vm243 = vcmp.lt.s32.totalorder %v234, 64
      %vm244 = vcmp.lt.s32.totalorder %v235, 64
      %v245 = vsel %vm237, 1, 0
      %v246 = vsel %vm238, 1, 0
      %v247 = vsel %vm239, 1, 0
      %v248 = vsel %vm240, 1, 0
      %v249 = vsel %vm241, 1, 0
      %v250 = vsel %vm242, 1, 0
      %v251 = vsel %vm243, 1, 0
      %v252 = vsel %vm244, 1, 0
      %vm253 = vcmp.eq.s32.totalorder %v245, 1
      %vm254 = vcmp.eq.s32.totalorder %v246, 1
      %vm255 = vcmp.eq.s32.totalorder %v247, 1
      %vm256 = vcmp.eq.s32.totalorder %v248, 1
      %vm257 = vcmp.eq.s32.totalorder %v249, 1
      %vm258 = vcmp.eq.s32.totalorder %v250, 1
      %vm259 = vcmp.eq.s32.totalorder %v251, 1
      %vm260 = vcmp.eq.s32.totalorder %v252, 1
      %v261 = vsel %vm253, %v209, 0.0
      %v262 = vsel %vm254, %v210, 0.0
      %v263 = vsel %vm255, %v211, 0.0
      %v264 = vsel %vm256, %v212, 0.0
      %v265 = vsel %vm257, %v213, 0.0
      %v266 = vsel %vm258, %v214, 0.0
      %v267 = vsel %vm259, %v215, 0.0
      %v268 = vsel %vm260, %v216, 0.0
      %vm269 = vcmask 523264
      %v270 = vsel %vm269, %v261, 0.0
      %v271 = vsel %vm269, %v262, 0.0
      %v272 = vadd.f32 %v270, %v271
      %v273 = vsel %vm269, %v263, 0.0
      %v274 = vadd.f32 %v272, %v273
      %v275 = vsel %vm269, %v264, 0.0
      %v276 = vadd.f32 %v274, %v275
      %v277 = vsel %vm269, %v265, 0.0
      %v278 = vadd.f32 %v276, %v277
      %v279 = vsel %vm269, %v266, 0.0
      %v280 = vadd.f32 %v278, %v279
      %v281 = vsel %vm269, %v267, 0.0
      %v282 = vadd.f32 %v280, %v281
      %v283 = vsel %vm269, %v268, 0.0
      %v284 = vadd.f32 %v282, %v283
      %v285 = vrot.slane %v284, 4
      %v286 = vadd.f32 %v284, %v285
      %v287 = vrot.slane %v286, 2
      %v288 = vadd.f32 %v286, %v287
      %v289 = vrot.slane %v288, 1
      %v290 = vadd.f32 %v288, %v289
      %v291 = vadd.f32 %v236, %v290
      %vm292 = vcmask 516096
      %293 = vst.msk [vmem:[#allocation2] sm:$0x1] %vm292, %v291
      // Predicated region
      $region37: #{tudu_forward.7} parent=31 // pred_check
        %p294 = pneg %p195
      $region38: #{tudu_forward.7} parent=31 // pred_check_branch
        %296 = sbr.rel (%p294) target = $region40
      $region39: #{tudu_forward.7} parent=31 // pred_region
        %v297 = vld [vmem:[#allocation2] sm:$0x1]
        %v298 = vmul.f32 %v297, 0.015625
        %v299 = vld [vmem:[%s1] sm:$0xff]
        %v300 = vld [vmem:[%s1 + $0x8] sm:$0xff]
        %v301 = vld [vmem:[%s1 + $0x10] sm:$0xff]
        %v302 = vld [vmem:[%s1 + $0x18] sm:$0xff]
        %v303 = vld [vmem:[%s1 + $0x20] sm:$0xff]
        %v304 = vld [vmem:[%s1 + $0x28] sm:$0xff]
        %v305 = vld [vmem:[%s1 + $0x30] sm:$0xff]
        %v306 = vld [vmem:[%s1 + $0x38] sm:$0xff]
        %v308 = vsel %vm269, %v298, 0
        %310 = vmatprep.subr.mxu0 0.0
        %311 = vmatpush1.msra.mxu0 0.0
        %312 = vmatprep.subr.mxu0 0.0
        %313 = vmatpush1.msra.mxu0 0.0
        %314 = vmatprep.subr.mxu0 0.0
        %315 = vmatpush1.msra.mxu0 0.0
        %316 = vmatprep.subr.mxu0 0.0
        %317 = vmatpush1.msra.mxu0 0.0
        %318 = vmatprep.subr.mxu0 0.0
        %319 = vmatpush1.msra.mxu0 0.0
        %320 = vmatprep.subr.mxu0 0.0
        %321 = vmatpush1.msra.mxu0 0.0
        %322 = vmatprep.subr.mxu0 0.0
        %323 = vmatpush1.msra.mxu0 0.0
        %324 = vmatprep.subr.mxu0 0.0
        %325 = vmatpush1.msra.mxu0 0.0
        %326 = vmatprep.subr.mxu0 0.0
        %327 = vmatpush1.msra.mxu0 %v306
        %328 = vmatprep.subr.mxu0 0.0
        %329 = vmatpush1.msra.mxu0 %v305
        %330 = vmatprep.subr.mxu0 0.0
        %331 = vmatpush1.msra.mxu0 %v304
        %332 = vmatprep.subr.mxu0 0.0
        %333 = vmatpush1.msra.mxu0 %v303
        %334 = vmatprep.subr.mxu0 0.0
        %335 = vmatpush1.msra.mxu0 %v302
        %336 = vmatprep.subr.mxu0 0.0
        %337 = vmatpush1.msra.mxu0 %v301
        %338 = vmatprep.subr.mxu0 0.0
        %339 = vmatpush1.msra.mxu0 %v300
        %340 = vmatprep.subr.mxu0 0.0
        %341 = vmatpush1.msra.mxu0 %v299
        %342 = vmatprep.subr.mxu0 0.0
        %343 = vmatpush2.msra.mxu0 0.0
        %344 = vmatprep.subr.mxu0 0.0
        %345 = vmatpush2.msra.mxu0 0.0
        %346 = vmatprep.subr.mxu0 0.0
        %347 = vmatpush2.msra.mxu0 0.0
        %348 = vmatprep.subr.mxu0 0.0
        %349 = vmatpush2.msra.mxu0 0.0
        %350 = vmatprep.subr.mxu0 0.0
        %351 = vmatpush2.msra.mxu0 0.0
        %352 = vmatprep.subr.mxu0 0.0
        %353 = vmatpush2.msra.mxu0 0.0
        %354 = vmatprep.subr.mxu0 0.0
        %355 = vmatpush2.msra.mxu0 0.0
        %356 = vmatprep.subr.mxu0 0.0
        %357 = vmatpush2.msra.mxu0 0.0
        %358 = vmatprep.subr.mxu0 0.0
        %359 = vmatpush2.msra.mxu0 0.0
        %360 = vmatprep.subr.mxu0 0.0
        %361 = vmatpush2.msra.mxu0 0.0
        %362 = vmatprep.subr.mxu0 0.0
        %363 = vmatpush2.msra.mxu0 0.0
        %364 = vmatprep.subr.mxu0 0.0
        %365 = vmatpush2.msra.mxu0 0.0
        %366 = vmatprep.subr.mxu0 0.0
        %367 = vmatpush2.msra.mxu0 0.0
        %368 = vmatprep.subr.mxu0 0.0
        %369 = vmatpush2.msra.mxu0 0.0
        %370 = vmatprep.subr.mxu0 0.0
        %371 = vmatpush2.msra.mxu0 0.0
        %372 = vmatprep.subr.mxu0 0.0
        %373 = vmatpush2.msra.mxu0 0.0
        %374 = vmatprep.mubr.f32.mxu0 0.0
        %375 = vmatmul.mubr.f32.gmra.mxu0 %v308
        %v376 = vpop.f32.mrf.mxu0
        %v377 = vadd.f32 0.0, %v376
        %v378 = vpop.f32.mrf.mxu0
        %379 = vdwg.mxu0
        %v380 = vmax.f32 %v377, 0.0
        %v381 = vld [vmem:[%s2] sm:$0xf]
        %vm382 = vcmask 31744
        %v384 = vsel %vm382, %v380, 0
        %vm386 = vcmask 1043456
        %v388 = vsel %vm386, %v381, 0
        %390 = vmatprep.subr.mxu0 0.0
        %391 = vmatpush1.msra.mxu0 0.0
        %392 = vmatprep.subr.mxu0 0.0
        %393 = vmatpush1.msra.mxu0 0.0
        %394 = vmatprep.subr.mxu0 0.0
        %395 = vmatpush1.msra.mxu0 0.0
        %396 = vmatprep.subr.mxu0 0.0
        %397 = vmatpush1.msra.mxu0 0.0
        %398 = vmatprep.subr.mxu0 0.0
        %399 = vmatpush1.msra.mxu0 0.0
        %400 = vmatprep.subr.mxu0 0.0
        %401 = vmatpush1.msra.mxu0 0.0
        %402 = vmatprep.subr.mxu0 0.0
        %403 = vmatpush1.msra.mxu0 0.0
        %404 = vmatprep.subr.mxu0 0.0
        %405 = vmatpush1.msra.mxu0 0.0
        %406 = vmatprep.subr.mxu0 0.0
        %407 = vmatpush1.msra.mxu0 0.0
        %408 = vmatprep.subr.mxu0 0.0
        %409 = vmatpush1.msra.mxu0 0.0
        %410 = vmatprep.subr.mxu0 0.0
        %411 = vmatpush1.msra.mxu0 0.0
        %412 = vmatprep.subr.mxu0 0.0
        %413 = vmatpush1.msra.mxu0 0.0
        %414 = vmatprep.subr.mxu0 0.0
        %415 = vmatpush1.msra.mxu0 0.0
        %416 = vmatprep.subr.mxu0 0.0
        %417 = vmatpush1.msra.mxu0 0.0
        %418 = vmatprep.subr.mxu0 0.0
        %419 = vmatpush1.msra.mxu0 0.0
        %420 = vmatprep.subr.mxu0 0.0
        %421 = vmatpush1.msra.mxu0 %v388
        %422 = vmatprep.subr.mxu0 0.0
        %423 = vmatpush2.msra.mxu0 0.0
        %424 = vmatprep.subr.mxu0 0.0
        %425 = vmatpush2.msra.mxu0 0.0
        %426 = vmatprep.subr.mxu0 0.0
        %427 = vmatpush2.msra.mxu0 0.0
        %428 = vmatprep.subr.mxu0 0.0
        %429 = vmatpush2.msra.mxu0 0.0
        %430 = vmatprep.subr.mxu0 0.0
        %431 = vmatpush2.msra.mxu0 0.0
        %432 = vmatprep.subr.mxu0 0.0
        %433 = vmatpush2.msra.mxu0 0.0
        %434 = vmatprep.subr.mxu0 0.0
        %435 = vmatpush2.msra.mxu0 0.0
        %436 = vmatprep.subr.mxu0 0.0
        %437 = vmatpush2.msra.mxu0 0.0
        %438 = vmatprep.subr.mxu0 0.0
        %439 = vmatpush2.msra.mxu0 0.0
        %440 = vmatprep.subr.mxu0 0.0
        %441 = vmatpush2.msra.mxu0 0.0
        %442 = vmatprep.subr.mxu0 0.0
        %443 = vmatpush2.msra.mxu0 0.0
        %444 = vmatprep.subr.mxu0 0.0
        %445 = vmatpush2.msra.mxu0 0.0
        %446 = vmatprep.subr.mxu0 0.0
        %447 = vmatpush2.msra.mxu0 0.0
        %448 = vmatprep.subr.mxu0 0.0
        %449 = vmatpush2.msra.mxu0 0.0
        %450 = vmatprep.subr.mxu0 0.0
        %451 = vmatpush2.msra.mxu0 0.0
        %452 = vmatprep.subr.mxu0 0.0
        %453 = vmatpush2.msra.mxu0 0.0
        %454 = vmatprep.mubr.f32.mxu0 0.0
        %455 = vmatmul.mubr.f32.gmra.mxu0 %v384
        %v456 = vpop.f32.mrf.mxu0
        %v457 = vadd.f32 0.0, %v456
        %v458 = vpop.f32.mrf.mxu0
        %459 = vdwg.mxu0
        %v460 = vxor.u32 %v457, 2147483648
        %v461 = vmul.f32 %v460, 1.442695
        %v462 = vpow.pop %v461
        %v463 = vadd.f32 %v462, 1.0
        %v464 = vrcp.pop %v463
        %v465 = vmul.f32 1.0, %v464
        %466 = vst.msk [vmem:[%s194] sm:$0x1] %vm292, %v465
      $region40: #{tudu_forward.7} parent=31 // pred_fallthru
        _
      %p467 = scmp.lt.s32.totalorder %s18, 1
      %s468 = scalar_select %p467, %s18, 1
      %s469 = scalar_lea.vmem %s3, %s468
      // Predicated region
      $region41: #{tudu_forward.7} parent=31 // pred_check
        %p470 = pneg %p114
      $region42: #{tudu_forward.7} parent=31 // pred_check_branch
        %472 = sbr.rel (%p470) target = $region44
      $region43: #{tudu_forward.7} parent=31 // pred_region
        _
      $region44: #{tudu_forward.7} parent=31 // pred_fallthru
        _
    $region32: #{tudu_forward.7} parent=5 // pred_fallthru
      _
    %p473 = scmp.le.s32.totalorder 2, %s9
    // Predicated region
    $region45: #{tudu_forward.7} parent=5 // pred_check
      %p474 = pneg %p473
    $region46: #{tudu_forward.7} parent=5 // pred_check_branch
      %476 = sbr.rel (%p474) target = $region48
    $region47: #{tudu_forward.7} parent=5 // pred_region
      %s477 = ssub.s32 %s9, 2
      // Predicated region
      $region49: #{tudu_forward.7} parent=47 // pred_check
        %p478 = pneg %p120
      $region50: #{tudu_forward.7} parent=47 // pred_check_branch
        %480 = sbr.rel (%p478) target = $region52
      $region51: #{tudu_forward.7} parent=47 // pred_region
        %p481 = scmp.lt.s32.totalorder %s20, 1
        %s482 = scalar_select %p481, %s20, 1
        %s483 = scalar_lea.vmem %s3, %s482
      $region52: #{tudu_forward.7} parent=47 // pred_fallthru
        _
    $region48: #{tudu_forward.7} parent=5 // pred_fallthru
      _
  $region6: #{tudu_forward.7} parent=0 // loop_footer
    %s13 = sadd.s32 1, %s9
  $region7: #{tudu_forward.7} parent=0 // loop_footer_branch
    %8 = sbr.rel target = $region3
  $region8: #{tudu_forward.7} parent=0 // loop_exit
    _

// kernel: tudu_forward.8
$region0: #{tudu_forward.8}
  #allocation0 [shape = 'u32[]', space=smem, size = 0x4, offset = 0x4, fixed_abs, tag = 'smem constant byte address 0x4 - core index']
  #allocation1 [shape = 'u32[144,128]{1,0:T(1,128)}', space=vmem, size = 0x12000, scoped, tag = 'internal scratch']
  #allocation2 [shape = 'f32[5,64]{1,0:T(8,128)}', space=vmem, size = 0x1000, scoped, tag = 'scratch operand']
  %s0 = inlined_call_operand.vmem [shape: bf16[2,14,2,7,64], index: 0, kind: input, shape index: {}]
  %s1 = inlined_call_operand.vmem [shape: bf16[25,64,64], index: 1, kind: input, shape index: {}]
  %s2 = inlined_call_operand.vmem [shape: f32[2,1,64], index: 2, kind: input, shape index: {}]
  %s3 = inlined_call_operand.vmem [shape: f32[1,1,64], index: 3, kind: input, shape index: {}]
  %s4 = inlined_call_operand.vmem [shape: bf16[2,5,5,64], index: 4, kind: output, shape index: {}]
  %s5 = sld [smem:[#allocation0]]
  $region57: #{tudu_forward.8} parent=0
    _
  %s7 = ssub.s32 1, %s5
  %s8 = scalar_select 0, %s7, %s5
  loop: start=0, step=1, limit=52
  $region2: #{tudu_forward.8} parent=0 // loop_pre_header
    _
  $region3: #{tudu_forward.8} parent=0 // loop_header
    %s10 = sphi 0, %s14
    %p11 = scmp.ge.s32.totalorder %s10, 52
    %s17 = sphi 0, %s36
    %s18 = sphi 0, %s32
    %s19 = sphi 0, %s28
    %s20 = sphi 0, %s17
    %s21 = sphi 0, %s18
    %s22 = sphi 0, %s19
    %s23 = sphi 0, %s20
    %s24 = sphi 0, %s21
    %s25 = sphi 0, %s22
    %s45 = sphi 0, %s47
    %s48 = sphi 0, %s45
    %s49 = sphi 0, %s48
    %s65 = sphi 0, %s49
    %s69 = sphi 0, %s69
    %s71 = sphi 0, %s69
    %s72 = sphi 0, %s71
    %s86 = sphi 0, %s72
    %s92 = sphi 0, %s94
    %s95 = sphi 0, %s92
    %s96 = sphi 0, %s95
    %s112 = sphi 0, %s96
    %s116 = sphi 0, %s116
    %s118 = sphi 0, %s116
    %s119 = sphi 0, %s118
    %s133 = sphi 0, %s119
    %s141 = sphi 0, %s143
    %s144 = sphi 0, %s141
    %s145 = sphi 0, %s144
    %s161 = sphi 0, %s145
  $region4: #{tudu_forward.8} parent=0 // loop_header_branch
    %13 = sbr.rel (%p11) target = $region8
  $region5: #{tudu_forward.8} parent=0 // loop_body
    %s15 = ssub.s32 %s10, 1
    %s16 = ssub.s32 %s10, 2
    %s26 = sadd.s32 1, %s19
    %p27 = scmp.ge.s32.totalorder %s26, 5
    %s28 = scalar_select %p27, 0, %s26
    %s29 = sadd.s32 1, %s18
    %s30 = scalar_select %p27, %s29, %s18
    %p31 = scmp.ge.s32.totalorder %s30, 5
    %s32 = scalar_select %p31, 0, %s30
    %s33 = sadd.s32 1, %s17
    %s34 = scalar_select %p31, %s33, %s17
    %p35 = scmp.ge.s32.totalorder %s34, 2
    %s36 = scalar_select %p35, 0, %s34
    %s37 = smul.u32 %s18, 2
    %s38 = sadd.s32 %s37, %s19
    %s39 = smul.u32 %s32, 2
    %s40 = sadd.s32 %s39, %s28
    %s41 = ssub.s32 %s17, %s36
    %s42 = ssub.s32 %s38, %s40
    %s43 = sor.u32 %s41, %s42
    %p44 = scmp.eq.s32.totalorder %s43, 0
    %s46 = sadd.s32 %s45, 1
    %s47 = scalar_select %p44, %s45, %s46
    %p50 = pneg %p44
    %p51 = scmp.eq.s32.totalorder %s10, 49
    %p52 = por %p50, %p51
    %p53 = scmp.ne.s32.totalorder %s45, %s48
    %p54 = scmp.eq.s32.totalorder %s10, 0
    %p55 = por %p53, %p54
    %p56 = scmp.ne.s32.totalorder %s45, %s48
    %p57 = scmp.eq.s32.totalorder %s15, 49
    %p58 = por %p56, %p57
    %p59 = scmp.ne.s32.totalorder %s48, %s49
    %p60 = scmp.eq.s32.totalorder %s15, 0
    %p61 = por %p59, %p60
    %p62 = scmp.ne.s32.totalorder %s48, %s49
    %p63 = scmp.eq.s32.totalorder %s16, 49
    %p64 = por %p62, %p63
    %p66 = scmp.ne.s32.totalorder %s49, %s65
    %p67 = scmp.eq.s32.totalorder %s16, 0
    %p68 = por %p66, %p67
    %s70 = sadd.s32 %s69, 1
    %p73 = scmp.eq.s32.totalorder %s10, 49
    %p74 = scmp.ne.s32.totalorder %s69, %s71
    %p75 = scmp.eq.s32.totalorder %s10, 0
    %p76 = por %p74, %p75
    %p77 = scmp.ne.s32.totalorder %s69, %s71
    %p78 = scmp.eq.s32.totalorder %s15, 49
    %p79 = por %p77, %p78
    %p80 = scmp.ne.s32.totalorder %s71, %s72
    %p81 = scmp.eq.s32.totalorder %s15, 0
    %p82 = por %p80, %p81
    %p83 = scmp.ne.s32.totalorder %s71, %s72
    %p84 = scmp.eq.s32.totalorder %s16, 49
    %p85 = por %p83, %p84
    %p87 = scmp.ne.s32.totalorder %s72, %s86
    %p88 = scmp.eq.s32.totalorder %s16, 0
    %p89 = por %p87, %p88
    %s90 = ssub.s32 %s17, %s36
    %p91 = scmp.eq.s32.totalorder %s90, 0
    %s93 = sadd.s32 %s92, 1
    %s94 = scalar_select %p91, %s92, %s93
    %p97 = pneg %p91
    %p98 = scmp.eq.s32.totalorder %s10, 49
    %p99 = por %p97, %p98
    %p100 = scmp.ne.s32.totalorder %s92, %s95
    %p101 = scmp.eq.s32.totalorder %s10, 0
    %p102 = por %p100, %p101
    %p103 = scmp.ne.s32.totalorder %s92, %s95
    %p104 = scmp.eq.s32.totalorder %s15, 49
    %p105 = por %p103, %p104
    %p106 = scmp.ne.s32.totalorder %s95, %s96
    %p107 = scmp.eq.s32.totalorder %s15, 0
    %p108 = por %p106, %p107
    %p109 = scmp.ne.s32.totalorder %s95, %s96
    %p110 = scmp.eq.s32.totalorder %s16, 49
    %p111 = por %p109, %p110
    %p113 = scmp.ne.s32.totalorder %s96, %s112
    %p114 = scmp.eq.s32.totalorder %s16, 0
    %p115 = por %p113, %p114
    %s117 = sadd.s32 %s116, 1
    %p120 = scmp.eq.s32.totalorder %s10, 49
    %p121 = scmp.ne.s32.totalorder %s116, %s118
    %p122 = scmp.eq.s32.totalorder %s10, 0
    %p123 = por %p121, %p122
    %p124 = scmp.ne.s32.totalorder %s116, %s118
    %p125 = scmp.eq.s32.totalorder %s15, 49
    %p126 = por %p124, %p125
    %p127 = scmp.ne.s32.totalorder %s118, %s119
    %p128 = scmp.eq.s32.totalorder %s15, 0
    %p129 = por %p127, %p128
    %p130 = scmp.ne.s32.totalorder %s118, %s119
    %p131 = scmp.eq.s32.totalorder %s16, 49
    %p132 = por %p130, %p131
    %p134 = scmp.ne.s32.totalorder %s119, %s133
    %p135 = scmp.eq.s32.totalorder %s16, 0
    %p136 = por %p134, %p135
    %s137 = ssub.s32 %s17, %s36
    %s138 = ssub.s32 %s18, %s32
    %s139 = sor.u32 %s137, %s138
    %p140 = scmp.eq.s32.totalorder %s139, 0
    %s142 = sadd.s32 %s141, 1
    %s143 = scalar_select %p140, %s141, %s142
    %p146 = pneg %p140
    %p147 = scmp.eq.s32.totalorder %s10, 49
    %p148 = por %p146, %p147
    %p149 = scmp.ne.s32.totalorder %s141, %s144
    %p150 = scmp.eq.s32.totalorder %s10, 0
    %p151 = por %p149, %p150
    %p152 = scmp.ne.s32.totalorder %s141, %s144
    %p153 = scmp.eq.s32.totalorder %s15, 49
    %p154 = por %p152, %p153
    %p155 = scmp.ne.s32.totalorder %s144, %s145
    %p156 = scmp.eq.s32.totalorder %s15, 0
    %p157 = por %p155, %p156
    %p158 = scmp.ne.s32.totalorder %s144, %s145
    %p159 = scmp.eq.s32.totalorder %s16, 49
    %p160 = por %p158, %p159
    %p162 = scmp.ne.s32.totalorder %s145, %s161
    %p163 = scmp.eq.s32.totalorder %s16, 0
    %p164 = por %p162, %p163
    %p165 = scmp.le.s32.totalorder 1, %s10
    %p166 = scmp.lt.s32.totalorder %s10, 51
    %p167 = pnand %p165, %p166
    %p168 = pneg %p167
    // Predicated region
    $region9: #{tudu_forward.8} parent=5 // pred_check
      _
    $region10: #{tudu_forward.8} parent=5 // pred_check_branch
      %170 = sbr.rel (%p167) target = $region12
    $region11: #{tudu_forward.8} parent=5 // pred_region
      %s171 = ssub.s32 %s10, 1
      // Predicated region
      $region13: #{tudu_forward.8} parent=11 // pred_check
        %p172 = pneg %p82
      $region14: #{tudu_forward.8} parent=11 // pred_check_branch
        %174 = sbr.rel (%p172) target = $region16
      $region15: #{tudu_forward.8} parent=11 // pred_region
        _
      $region16: #{tudu_forward.8} parent=11 // pred_fallthru
        _
      // Predicated region
      $region17: #{tudu_forward.8} parent=11 // pred_check
        %p175 = pneg %p129
      $region18: #{tudu_forward.8} parent=11 // pred_check_branch
        %177 = sbr.rel (%p175) target = $region20
      $region19: #{tudu_forward.8} parent=11 // pred_region
        _
      $region20: #{tudu_forward.8} parent=11 // pred_fallthru
        _
    $region12: #{tudu_forward.8} parent=5 // pred_fallthru
      _
    %p178 = scmp.lt.s32.totalorder %s10, 50
    // Predicated region
    $region21: #{tudu_forward.8} parent=5 // pred_check
      %p179 = pneg %p178
    $region22: #{tudu_forward.8} parent=5 // pred_check_branch
      %181 = sbr.rel (%p179) target = $region24
    $region23: #{tudu_forward.8} parent=5 // pred_region
      // Predicated region
      $region25: #{tudu_forward.8} parent=23 // pred_check
        %p182 = pneg %p55
      $region26: #{tudu_forward.8} parent=23 // pred_check_branch
        %184 = sbr.rel (%p182) target = $region28
      $region27: #{tudu_forward.8} parent=23 // pred_region
        %s185 = smul.u32 %s18, 2
        %s186 = sadd.s32 %s185, %s19
        %p187 = scmp.lt.s32.totalorder %s17, 1
        %s188 = scalar_select %p187, %s17, 1
        %p189 = scmp.lt.s32.totalorder %s186, 13
        %s190 = scalar_select %p189, %s186, 13
        %s191 = smul.addr %s190, 2
        %s192 = smul.addr %s188, 28
        %s193 = sadd.s32 %s191, %s192
        %s194 = smul.addr %s193, 4
        %s195 = scalar_lea.vmem %s0, %s194
        %s196 = smul.u32 %s18, 2
        %s197 = sadd.s32 %s196, %s19
      $region28: #{tudu_forward.8} parent=23 // pred_fallthru
        _
      // Predicated region
      $region29: #{tudu_forward.8} parent=23 // pred_check
        %p198 = pneg %p102
      $region30: #{tudu_forward.8} parent=23 // pred_check_branch
        %200 = sbr.rel (%p198) target = $region32
      $region31: #{tudu_forward.8} parent=23 // pred_region
        %p201 = scmp.lt.s32.totalorder %s17, 1
        %s202 = scalar_select %p201, %s17, 1
        %s203 = scalar_lea.vmem %s2, %s202
      $region32: #{tudu_forward.8} parent=23 // pred_fallthru
        _
    $region24: #{tudu_forward.8} parent=5 // pred_fallthru
      _
    %p204 = scmp.le.s32.totalorder 1, %s10
    %p205 = scmp.lt.s32.totalorder %s10, 51
    %p206 = pnand %p204, %p205
    %p207 = pneg %p206
    // Predicated region
    $region33: #{tudu_forward.8} parent=5 // pred_check
      _
    $region34: #{tudu_forward.8} parent=5 // pred_check_branch
      %209 = sbr.rel (%p206) target = $region36
    $region35: #{tudu_forward.8} parent=5 // pred_region
      %s210 = ssub.s32 %s10, 1
      %s211 = smul.u32 %s21, 2
      %s212 = sadd.s32 %s211, %s22
      %p213 = scmp.lt.s32.totalorder %s20, 1
      %s214 = scalar_select %p213, %s20, 1
      %p215 = scmp.lt.s32.totalorder %s212, 13
      %s216 = scalar_select %p215, %s212, 13
      %s217 = smul.addr %s216, 2
      %s218 = smul.addr %s214, 28
      %s219 = sadd.s32 %s217, %s218
      %s220 = smul.addr %s219, 4
      %s221 = scalar_lea.vmem %s0, %s220
      %p222 = pneg %p61
      %p223 = pneg %p58
      %p224 = pneg %p82
      %p225 = pneg %p79
      %p226 = scmp.lt.s32.totalorder %s20, 1
      %s227 = scalar_select %p226, %s20, 1
      %s228 = scalar_lea.vmem %s2, %s227
      %p229 = pneg %p108
      %p230 = pneg %p105
      %p231 = pneg %p129
      %p232 = pneg %p126
      %p233 = pneg %p157
      %p234 = pneg %p154
      %p235 = scmp.lt.s32.totalorder %s20, 1
      %s236 = scalar_select %p235, %s20, 1
      %p237 = scmp.lt.s32.totalorder %s21, 4
      %s238 = scalar_select %p237, %s21, 4
      %s239 = smul.addr %s236, 5
      %s240 = sadd.s32 %s238, %s239
      %s241 = smul.addr %s240, 4
      %s242 = scalar_lea.vmem %s4, %s241
      %s243 = smul.u32 %s21, 2
      %s244 = sadd.s32 %s243, %s22
      %p245 = scmp.lt.s32.totalorder %s20, 1
      %s246 = scalar_select %p245, %s20, 1
      %p247 = scmp.lt.s32.totalorder %s244, 13
      %s248 = scalar_select %p247, %s244, 13
      %s249 = smul.addr %s248, 2
      %s250 = smul.addr %s246, 28
      %s251 = sadd.s32 %s249, %s250
      %s252 = smul.addr %s251, 4
      %s253 = scalar_lea.vmem %s0, %s252
      %s254 = smul.u32 %s21, 2
      %s255 = sadd.s32 %s254, %s22
      %p256 = scmp.lt.s32.totalorder %s20, 1
      %s257 = scalar_select %p256, %s20, 1
      %s258 = scalar_lea.vmem %s2, %s257
      %p259 = scmp.lt.s32.totalorder %s20, 1
      %s260 = scalar_select %p259, %s20, 1
      %p261 = scmp.lt.s32.totalorder %s21, 4
      %s262 = scalar_select %p261, %s21, 4
      %s263 = smul.addr %s260, 5
      %s264 = sadd.s32 %s262, %s263
      %s265 = smul.addr %s264, 4
      %s266 = scalar_lea.vmem %s4, %s265
      %p268 = scmp.eq.s32.totalorder %s22, 0
      // Predicated region
      $region37: #{tudu_forward.8} parent=35 // pred_check
        %p269 = pneg %p268
      $region38: #{tudu_forward.8} parent=35 // pred_check_branch
        %271 = sbr.rel (%p269) target = $region40
      $region39: #{tudu_forward.8} parent=35 // pred_region
        %vm272 = vcmask 520192
        %273 = vst.msk [vmem:[#allocation2] sm:$0x1f] %vm272, 0.0
      $region40: #{tudu_forward.8} parent=35 // pred_fallthru
        _
      %v274 = vld [vmem:[%s253] sm:$0xf]
      %v275 = vld [vmem:[%s253 + $0x4] sm:$0xf]
      %v276 = vunpack.c.l.bf16 %v274
      %v277 = vunpack.c.l.bf16 %v275
      %v278 = vld [vmem:[%s258] sm:$0x1]
      %v280 = vlaneseq
      %v281 = vshrl.u32 %v280, 7
      %v282 = vsub.s32 0, %v281
      %v283 = vrot.slane %v278, %v282
      %v285 = vmul.f32 %v276, %v283
      %v286 = vmul.f32 %v277, %v283
      %v287 = vpack.c.bf16 %v285, %v285
      %s288 = smul.u32 %s22, 5
      %s289 = smul.u32 %s288, 8
      %s290 = smul.addr %s289, 4
      %s291 = scalar_lea.vmem %s1, %s290
      %v292 = vld [vmem:[%s291] sm:$0xf]
      %v293 = vld [vmem:[%s291 + $0x4] sm:$0xf]
      %v294 = vld [vmem:[%s291 + $0x8] sm:$0xf]
      %v295 = vld [vmem:[%s291 + $0xc] sm:$0xf]
      %v296 = vld [vmem:[%s291 + $0x10] sm:$0xf]
      %v297 = vld [vmem:[%s291 + $0x14] sm:$0xf]
      %v298 = vld [vmem:[%s291 + $0x18] sm:$0xf]
      %v299 = vld [vmem:[%s291 + $0x1c] sm:$0xf]
      %v300 = vpack.c.bf16 %v286, %v286
      %s301 = sadd.s32 %s288, 1
      %s302 = smul.u32 %s301, 8
      %s303 = smul.addr %s302, 4
      %s304 = scalar_lea.vmem %s1, %s303
      %v305 = vld [vmem:[%s304] sm:$0xf]
      %v306 = vld [vmem:[%s304 + $0x4] sm:$0xf]
      %v307 = vld [vmem:[%s304 + $0x8] sm:$0xf]
      %v308 = vld [vmem:[%s304 + $0xc] sm:$0xf]
      %v309 = vld [vmem:[%s304 + $0x10] sm:$0xf]
      %v310 = vld [vmem:[%s304 + $0x14] sm:$0xf]
      %v311 = vld [vmem:[%s304 + $0x18] sm:$0xf]
      %v312 = vld [vmem:[%s304 + $0x1c] sm:$0xf]
      %v321 = vunpack.c.l.b16 %v305
      %v322 = vunpack.c.l.b16 %v306
      %v323 = vunpack.c.l.b16 %v307
      %v324 = vunpack.c.l.b16 %v308
      %v325 = vunpack.c.l.b16 %v309
      %v326 = vunpack.c.l.b16 %v310
      %v327 = vunpack.c.l.b16 %v311
      %v328 = vunpack.c.l.b16 %v312
      %v329 = vpack.c.b16 %v322, %v321
      %v330 = vpack.c.b16 %v324, %v323
      %v331 = vpack.c.b16 %v326, %v325
      %v332 = vpack.c.b16 %v328, %v327
      %vm337 = vcmask 523264
      %v339 = vsel %vm337, %v300, 0
      %341 = vmatprep.subr.bf16.mxu0 0
      %342 = vmatpush1.bf16.msra.mxu0 0
      %343 = vmatprep.subr.bf16.mxu0 0
      %344 = vmatpush1.bf16.msra.mxu0 0
      %345 = vmatprep.subr.bf16.mxu0 0
      %346 = vmatpush1.bf16.msra.mxu0 0
      %347 = vmatprep.subr.bf16.mxu0 0
      %348 = vmatpush1.bf16.msra.mxu0 0
      %349 = vmatprep.subr.bf16.mxu0 0
      %350 = vmatpush1.bf16.msra.mxu0 %v332
      %351 = vmatprep.subr.bf16.mxu0 0
      %352 = vmatpush1.bf16.msra.mxu0 %v331
      %353 = vmatprep.subr.bf16.mxu0 0
      %354 = vmatpush1.bf16.msra.mxu0 %v330
      %355 = vmatprep.subr.bf16.mxu0 0
      %356 = vmatpush1.bf16.msra.mxu0 %v329
      %357 = vmatprep.subr.bf16.mxu0 0
      %358 = vmatpush2.bf16.msra.mxu0 0
      %359 = vmatprep.subr.bf16.mxu0 0
      %360 = vmatpush2.bf16.msra.mxu0 0
      %361 = vmatprep.subr.bf16.mxu0 0
      %362 = vmatpush2.bf16.msra.mxu0 0
      %363 = vmatprep.subr.bf16.mxu0 0
      %364 = vmatpush2.bf16.msra.mxu0 0
      %365 = vmatprep.subr.bf16.mxu0 0
      %366 = vmatpush2.bf16.msra.mxu0 0
      %367 = vmatprep.subr.bf16.mxu0 0
      %368 = vmatpush2.bf16.msra.mxu0 0
      %369 = vmatprep.subr.bf16.mxu0 0
      %370 = vmatpush2.bf16.msra.mxu0 0
      %371 = vmatprep.subr.bf16.mxu0 0
      %372 = vmatpush2.bf16.msra.mxu0 0
      %373 = vmatprep.mubr.bf16.mxu0 0
      %374 = vmatmul.mubr.bf16.gmra.mxu0 %v339
      %v375 = vpop.f32.mrf.mxu0
      %v376 = vadd.f32 0.0, %v375
      %v377 = vpop.f32.mrf.mxu0
      %v378 = vpop.f32.mrf.mxu0
      %v379 = vpop.f32.mrf.mxu0
      %380 = vdwg.mxu0
      %v389 = vunpack.c.l.b16 %v292
      %v390 = vunpack.c.l.b16 %v293
      %v391 = vunpack.c.l.b16 %v294
      %v392 = vunpack.c.l.b16 %v295
      %v393 = vunpack.c.l.b16 %v296
      %v394 = vunpack.c.l.b16 %v297
      %v395 = vunpack.c.l.b16 %v298
      %v396 = vunpack.c.l.b16 %v299
      %v397 = vpack.c.b16 %v390, %v389
      %v398 = vpack.c.b16 %v392, %v391
      %v399 = vpack.c.b16 %v394, %v393
      %v400 = vpack.c.b16 %v396, %v395
      %v406 = vsel %vm337, %v287, 0
      %408 = vmatprep.subr.bf16.mxu0 0
      %409 = vmatpush1.bf16.msra.mxu0 0
      %410 = vmatprep.subr.bf16.mxu0 0
      %411 = vmatpush1.bf16.msra.mxu0 0
      %412 = vmatprep.subr.bf16.mxu0 0
      %413 = vmatpush1.bf16.msra.mxu0 0
      %414 = vmatprep.subr.bf16.mxu0 0
      %415 = vmatpush1.bf16.msra.mxu0 0
      %416 = vmatprep.subr.bf16.mxu0 0
      %417 = vmatpush1.bf16.msra.mxu0 %v400
      %418 = vmatprep.subr.bf16.mxu0 0
      %419 = vmatpush1.bf16.msra.mxu0 %v399
      %420 = vmatprep.subr.bf16.mxu0 0
      %421 = vmatpush1.bf16.msra.mxu0 %v398
      %422 = vmatprep.subr.bf16.mxu0 0
      %423 = vmatpush1.bf16.msra.mxu0 %v397
      %424 = vmatprep.subr.bf16.mxu0 0
      %425 = vmatpush2.bf16.msra.mxu0 0
      %426 = vmatprep.subr.bf16.mxu0 0
      %427 = vmatpush2.bf16.msra.mxu0 0
      %428 = vmatprep.subr.bf16.mxu0 0
      %429 = vmatpush2.bf16.msra.mxu0 0
      %430 = vmatprep.subr.bf16.mxu0 0
      %431 = vmatpush2.bf16.msra.mxu0 0
      %432 = vmatprep.subr.bf16.mxu0 0
      %433 = vmatpush2.bf16.msra.mxu0 0
      %434 = vmatprep.subr.bf16.mxu0 0
      %435 = vmatpush2.bf16.msra.mxu0 0
      %436 = vmatprep.subr.bf16.mxu0 0
      %437 = vmatpush2.bf16.msra.mxu0 0
      %438 = vmatprep.subr.bf16.mxu0 0
      %439 = vmatpush2.bf16.msra.mxu0 0
      %440 = vmatprep.mubr.bf16.mxu0 0
      %441 = vmatmul.mubr.bf16.gmra.mxu0 %v406
      %v442 = vpop.f32.mrf.mxu0
      %v443 = vadd.f32 %v376, %v442
      %v444 = vpop.f32.mrf.mxu0
      %v445 = vpop.f32.mrf.mxu0
      %v446 = vpop.f32.mrf.mxu0
      %447 = vdwg.mxu0
      %s448 = sadd.s32 %s288, 2
      %s449 = smul.u32 %s448, 8
      %s450 = smul.addr %s449, 4
      %s451 = scalar_lea.vmem %s1, %s450
      %v452 = vld [vmem:[%s451] sm:$0xf]
      %v453 = vld [vmem:[%s451 + $0x4] sm:$0xf]
      %v454 = vld [vmem:[%s451 + $0x8] sm:$0xf]
      %v455 = vld [vmem:[%s451 + $0xc] sm:$0xf]
      %v456 = vld [vmem:[%s451 + $0x10] sm:$0xf]
      %v457 = vld [vmem:[%s451 + $0x14] sm:$0xf]
      %v458 = vld [vmem:[%s451 + $0x18] sm:$0xf]
      %v459 = vld [vmem:[%s451 + $0x1c] sm:$0xf]
      %v460 = vshrl.u32 %v287, 16
      %v462 = vshll.u32 %v287, 16
      %v464 = vrot.slane %v462, 1
      %v465 = vor.u32 %v460, %v464
      %v474 = vunpack.c.l.b16 %v452
      %v475 = vunpack.c.l.b16 %v453
      %v476 = vunpack.c.l.b16 %v454
      %v477 = vunpack.c.l.b16 %v455
      %v478 = vunpack.c.l.b16 %v456
      %v479 = vunpack.c.l.b16 %v457
      %v480 = vunpack.c.l.b16 %v458
      %v481 = vunpack.c.l.b16 %v459
      %v482 = vpack.c.b16 %v475, %v474
      %v483 = vpack.c.b16 %v477, %v476
      %v484 = vpack.c.b16 %v479, %v478
      %v485 = vpack.c.b16 %v481, %v480
      %v491 = vsel %vm337, %v465, 0
      %493 = vmatprep.subr.bf16.mxu0 0
      %494 = vmatpush1.bf16.msra.mxu0 0
      %495 = vmatprep.subr.bf16.mxu0 0
      %496 = vmatpush1.bf16.msra.mxu0 0
      %497 = vmatprep.subr.bf16.mxu0 0
      %498 = vmatpush1.bf16.msra.mxu0 0
      %499 = vmatprep.subr.bf16.mxu0 0
      %500 = vmatpush1.bf16.msra.mxu0 0
      %501 = vmatprep.subr.bf16.mxu0 0
      %502 = vmatpush1.bf16.msra.mxu0 %v485
      %503 = vmatprep.subr.bf16.mxu0 0
      %504 = vmatpush1.bf16.msra.mxu0 %v484
      %505 = vmatprep.subr.bf16.mxu0 0
      %506 = vmatpush1.bf16.msra.mxu0 %v483
      %507 = vmatprep.subr.bf16.mxu0 0
      %508 = vmatpush1.bf16.msra.mxu0 %v482
      %509 = vmatprep.subr.bf16.mxu0 0
      %510 = vmatpush2.bf16.msra.mxu0 0
      %511 = vmatprep.subr.bf16.mxu0 0
      %512 = vmatpush2.bf16.msra.mxu0 0
      %513 = vmatprep.subr.bf16.mxu0 0
      %514 = vmatpush2.bf16.msra.mxu0 0
      %515 = vmatprep.subr.bf16.mxu0 0
      %516 = vmatpush2.bf16.msra.mxu0 0
      %517 = vmatprep.subr.bf16.mxu0 0
      %518 = vmatpush2.bf16.msra.mxu0 0
      %519 = vmatprep.subr.bf16.mxu0 0
      %520 = vmatpush2.bf16.msra.mxu0 0
      %521 = vmatprep.subr.bf16.mxu0 0
      %522 = vmatpush2.bf16.msra.mxu0 0
      %523 = vmatprep.subr.bf16.mxu0 0
      %524 = vmatpush2.bf16.msra.mxu0 0
      %525 = vmatprep.mubr.bf16.mxu0 0
      %526 = vmatmul.mubr.bf16.gmra.mxu0 %v491
      %v527 = vpop.f32.mrf.mxu0
      %v528 = vadd.f32 0.0, %v527
      %v529 = vpop.f32.mrf.mxu0
      %v530 = vpop.f32.mrf.mxu0
      %v531 = vpop.f32.mrf.mxu0
      %532 = vdwg.mxu0
      %v533 = vadd.f32 %v443, %v528
      %s534 = sadd.s32 %s288, 3
      %s535 = smul.u32 %s534, 8
      %s536 = smul.addr %s535, 4
      %s537 = scalar_lea.vmem %s1, %s536
      %v538 = vld [vmem:[%s537] sm:$0xf]
      %v539 = vld [vmem:[%s537 + $0x4] sm:$0xf]
      %v540 = vld [vmem:[%s537 + $0x8] sm:$0xf]
      %v541 = vld [vmem:[%s537 + $0xc] sm:$0xf]
      %v542 = vld [vmem:[%s537 + $0x10] sm:$0xf]
      %v543 = vld [vmem:[%s537 + $0x14] sm:$0xf]
      %v544 = vld [vmem:[%s537 + $0x18] sm:$0xf]
      %v545 = vld [vmem:[%s537 + $0x1c] sm:$0xf]
      %v546 = vshrl.u32 %v300, 16
      %v548 = vshll.u32 %v300, 16
      %v550 = vrot.slane %v548, 1
      %v551 = vor.u32 %v546, %v550
      %v560 = vunpack.c.l.b16 %v538
      %v561 = vunpack.c.l.b16 %v539
      %v562 = vunpack.c.l.b16 %v540
      %v563 = vunpack.c.l.b16 %v541
      %v564 = vunpack.c.l.b16 %v542
      %v565 = vunpack.c.l.b16 %v543
      %v566 = vunpack.c.l.b16 %v544
      %v567 = vunpack.c.l.b16 %v545
      %v568 = vpack.c.b16 %v561, %v560
      %v569 = vpack.c.b16 %v563, %v562
      %v570 = vpack.c.b16 %v565, %v564
      %v571 = vpack.c.b16 %v567, %v566
      %v577 = vsel %vm337, %v551, 0
      %579 = vmatprep.subr.bf16.mxu0 0
      %580 = vmatpush1.bf16.msra.mxu0 0
      %581 = vmatprep.subr.bf16.mxu0 0
      %582 = vmatpush1.bf16.msra.mxu0 0
      %583 = vmatprep.subr.bf16.mxu0 0
      %584 = vmatpush1.bf16.msra.mxu0 0
      %585 = vmatprep.subr.bf16.mxu0 0
      %586 = vmatpush1.bf16.msra.mxu0 0
      %587 = vmatprep.subr.bf16.mxu0 0
      %588 = vmatpush1.bf16.msra.mxu0 %v571
      %589 = vmatprep.subr.bf16.mxu0 0
      %590 = vmatpush1.bf16.msra.mxu0 %v570
      %591 = vmatprep.subr.bf16.mxu0 0
      %592 = vmatpush1.bf16.msra.mxu0 %v569
      %593 = vmatprep.subr.bf16.mxu0 0
      %594 = vmatpush1.bf16.msra.mxu0 %v568
      %595 = vmatprep.subr.bf16.mxu0 0
      %596 = vmatpush2.bf16.msra.mxu0 0
      %597 = vmatprep.subr.bf16.mxu0 0
      %598 = vmatpush2.bf16.msra.mxu0 0
      %599 = vmatprep.subr.bf16.mxu0 0
      %600 = vmatpush2.bf16.msra.mxu0 0
      %601 = vmatprep.subr.bf16.mxu0 0
      %602 = vmatpush2.bf16.msra.mxu0 0
      %603 = vmatprep.subr.bf16.mxu0 0
      %604 = vmatpush2.bf16.msra.mxu0 0
      %605 = vmatprep.subr.bf16.mxu0 0
      %606 = vmatpush2.bf16.msra.mxu0 0
      %607 = vmatprep.subr.bf16.mxu0 0
      %608 = vmatpush2.bf16.msra.mxu0 0
      %609 = vmatprep.subr.bf16.mxu0 0
      %610 = vmatpush2.bf16.msra.mxu0 0
      %611 = vmatprep.mubr.bf16.mxu0 0
      %612 = vmatmul.mubr.bf16.gmra.mxu0 %v577
      %v613 = vpop.f32.mrf.mxu0
      %v614 = vadd.f32 0.0, %v613
      %v615 = vpop.f32.mrf.mxu0
      %v616 = vpop.f32.mrf.mxu0
      %v617 = vpop.f32.mrf.mxu0
      %618 = vdwg.mxu0
      %v619 = vadd.f32 %v533, %v614
      %s620 = sadd.s32 %s288, 4
      %s621 = smul.u32 %s620, 8
      %s622 = smul.addr %s621, 4
      %s623 = scalar_lea.vmem %s1, %s622
      %v624 = vld [vmem:[%s623] sm:$0xf]
      %v625 = vld [vmem:[%s623 + $0x4] sm:$0xf]
      %v626 = vld [vmem:[%s623 + $0x8] sm:$0xf]
      %v627 = vld [vmem:[%s623 + $0xc] sm:$0xf]
      %v628 = vld [vmem:[%s623 + $0x10] sm:$0xf]
      %v629 = vld [vmem:[%s623 + $0x14] sm:$0xf]
      %v630 = vld [vmem:[%s623 + $0x18] sm:$0xf]
      %v631 = vld [vmem:[%s623 + $0x1c] sm:$0xf]
      %v633 = vrot.slane %v287, 1
      %v642 = vunpack.c.l.b16 %v624
      %v643 = vunpack.c.l.b16 %v625
      %v644 = vunpack.c.l.b16 %v626
      %v645 = vunpack.c.l.b16 %v627
      %v646 = vunpack.c.l.b16 %v628
      %v647 = vunpack.c.l.b16 %v629
      %v648 = vunpack.c.l.b16 %v630
      %v649 = vunpack.c.l.b16 %v631
      %v650 = vpack.c.b16 %v643, %v642
      %v651 = vpack.c.b16 %v645, %v644
      %v652 = vpack.c.b16 %v647, %v646
      %v653 = vpack.c.b16 %v649, %v648
      %v659 = vsel %vm337, %v633, 0
      %661 = vmatprep.subr.bf16.mxu0 0
      %662 = vmatpush1.bf16.msra.mxu0 0
      %663 = vmatprep.subr.bf16.mxu0 0
      %664 = vmatpush1.bf16.msra.mxu0 0
      %665 = vmatprep.subr.bf16.mxu0 0
      %666 = vmatpush1.bf16.msra.mxu0 0
      %667 = vmatprep.subr.bf16.mxu0 0
      %668 = vmatpush1.bf16.msra.mxu0 0
      %669 = vmatprep.subr.bf16.mxu0 0
      %670 = vmatpush1.bf16.msra.mxu0 %v653
      %671 = vmatprep.subr.bf16.mxu0 0
      %672 = vmatpush1.bf16.msra.mxu0 %v652
      %673 = vmatprep.subr.bf16.mxu0 0
      %674 = vmatpush1.bf16.msra.mxu0 %v651
      %675 = vmatprep.subr.bf16.mxu0 0
      %676 = vmatpush1.bf16.msra.mxu0 %v650
      %677 = vmatprep.subr.bf16.mxu0 0
      %678 = vmatpush2.bf16.msra.mxu0 0
      %679 = vmatprep.subr.bf16.mxu0 0
      %680 = vmatpush2.bf16.msra.mxu0 0
      %681 = vmatprep.subr.bf16.mxu0 0
      %682 = vmatpush2.bf16.msra.mxu0 0
      %683 = vmatprep.subr.bf16.mxu0 0
      %684 = vmatpush2.bf16.msra.mxu0 0
      %685 = vmatprep.subr.bf16.mxu0 0
      %686 = vmatpush2.bf16.msra.mxu0 0
      %687 = vmatprep.subr.bf16.mxu0 0
      %688 = vmatpush2.bf16.msra.mxu0 0
      %689 = vmatprep.subr.bf16.mxu0 0
      %690 = vmatpush2.bf16.msra.mxu0 0
      %691 = vmatprep.subr.bf16.mxu0 0
      %692 = vmatpush2.bf16.msra.mxu0 0
      %693 = vmatprep.mubr.bf16.mxu0 0
      %694 = vmatmul.mubr.bf16.gmra.mxu0 %v659
      %v695 = vpop.f32.mrf.mxu0
      %v696 = vadd.f32 0.0, %v695
      %v697 = vpop.f32.mrf.mxu0
      %v698 = vpop.f32.mrf.mxu0
      %v699 = vpop.f32.mrf.mxu0
      %700 = vdwg.mxu0
      %v701 = vadd.f32 %v619, %v696
      %v702 = vld [vmem:[#allocation2] sm:$0x1f]
      %v703 = vadd.f32 %v702, %v701
      %vm704 = vcmask 520192
      %705 = vst.msk [vmem:[#allocation2] sm:$0x1f] %vm704, %v703
      %p706 = scmp.eq.s32.totalorder %s22, 4
      // Predicated region
      $region41: #{tudu_forward.8} parent=35 // pred_check
        %p707 = pneg %p706
      $region42: #{tudu_forward.8} parent=35 // pred_check_branch
        %709 = sbr.rel (%p707) target = $region44
      $region43: #{tudu_forward.8} parent=35 // pred_region
        %v710 = vld [vmem:[#allocation2] sm:$0x1f]
        %v711 = vld [vmem:[%s3] sm:$0x1]
        %v713 = vlaneseq
        %v714 = vshrl.u32 %v713, 7
        %v715 = vsub.s32 0, %v714
        %v716 = vrot.slane %v711, %v715
        %v718 = vadd.f32 %v710, %v716
        %v719 = vmax.f32 %v718, 0.0
        %v720 = vpack.c.bf16 %v719, %v719
        %vm721 = vcmask 518144
        %vm722 = vsmask.f32 2304
        %vm723 = vmand %vm721, %vm722
        %v724 = vld [vmem:[%s266] sm:$0x7]
        %v725 = vsel %vm723, %v720, %v724
        %726 = vst [vmem:[%s266] sm:$0x7] %v725
      $region44: #{tudu_forward.8} parent=35 // pred_fallthru
        _
      %p727 = scmp.lt.s32.totalorder %s20, 1
      %s728 = scalar_select %p727, %s20, 1
      %p729 = scmp.lt.s32.totalorder %s21, 4
      %s730 = scalar_select %p729, %s21, 4
      %s731 = smul.addr %s728, 5
      %s732 = sadd.s32 %s730, %s731
      %s733 = smul.addr %s732, 4
      %s734 = scalar_lea.vmem %s4, %s733
      // Predicated region
      $region45: #{tudu_forward.8} parent=35 // pred_check
        %p735 = pneg %p154
      $region46: #{tudu_forward.8} parent=35 // pred_check_branch
        %737 = sbr.rel (%p735) target = $region48
      $region47: #{tudu_forward.8} parent=35 // pred_region
        _
      $region48: #{tudu_forward.8} parent=35 // pred_fallthru
        _
    $region36: #{tudu_forward.8} parent=5 // pred_fallthru
      _
    %p738 = scmp.le.s32.totalorder 2, %s10
    // Predicated region
    $region49: #{tudu_forward.8} parent=5 // pred_check
      %p739 = pneg %p738
    $region50: #{tudu_forward.8} parent=5 // pred_check_branch
      %741 = sbr.rel (%p739) target = $region52
    $region51: #{tudu_forward.8} parent=5 // pred_region
      %s742 = ssub.s32 %s10, 2
      // Predicated region
      $region53: #{tudu_forward.8} parent=51 // pred_check
        %p743 = pneg %p160
      $region54: #{tudu_forward.8} parent=51 // pred_check_branch
        %745 = sbr.rel (%p743) target = $region56
      $region55: #{tudu_forward.8} parent=51 // pred_region
        %p746 = scmp.lt.s32.totalorder %s23, 1
        %s747 = scalar_select %p746, %s23, 1
        %p748 = scmp.lt.s32.totalorder %s24, 4
        %s749 = scalar_select %p748, %s24, 4
        %s750 = smul.addr %s747, 5
        %s751 = sadd.s32 %s749, %s750
        %s752 = smul.addr %s751, 4
        %s753 = scalar_lea.vmem %s4, %s752
      $region56: #{tudu_forward.8} parent=51 // pred_fallthru
        _
    $region52: #{tudu_forward.8} parent=5 // pred_fallthru
      _
  $region6: #{tudu_forward.8} parent=0 // loop_footer
    %s14 = sadd.s32 1, %s10
  $region7: #{tudu_forward.8} parent=0 // loop_footer_branch
    %9 = sbr.rel target = $region3
  $region8: #{tudu_forward.8} parent=0 // loop_exit
    _

// kernel: tudu_forward.9
$region0: #{tudu_forward.9}
  #allocation0 [shape = 'u32[]', space=smem, size = 0x4, offset = 0x4, fixed_abs, tag = 'smem constant byte address 0x4 - core index']
  #allocation1 [shape = 'u32[144,128]{1,0:T(1,128)}', space=vmem, size = 0x12000, scoped, tag = 'internal scratch']
  #allocation2 [shape = 'f32[5,64]{1,0:T(8,128)}', space=vmem, size = 0x1000, scoped, tag = 'scratch operand']
  %s0 = inlined_call_operand.vmem [shape: bf16[2,7,1,7,64], index: 0, kind: input, shape index: {}]
  %s1 = inlined_call_operand.vmem [shape: bf16[9,64,64], index: 1, kind: input, shape index: {}]
  %s2 = inlined_call_operand.vmem [shape: f32[2,1,64], index: 2, kind: input, shape index: {}]
  %s3 = inlined_call_operand.vmem [shape: f32[1,1,64], index: 3, kind: input, shape index: {}]
  %s4 = inlined_call_operand.vmem [shape: bf16[2,5,5,64], index: 4, kind: output, shape index: {}]
  %s5 = sld [smem:[#allocation0]]
  $region57: #{tudu_forward.9} parent=0
    _
  %s7 = ssub.s32 1, %s5
  %s8 = scalar_select 0, %s7, %s5
  loop: start=0, step=1, limit=32
  $region2: #{tudu_forward.9} parent=0 // loop_pre_header
    _
  $region3: #{tudu_forward.9} parent=0 // loop_header
    %s10 = sphi 0, %s14
    %p11 = scmp.ge.s32.totalorder %s10, 32
    %s17 = sphi 0, %s36
    %s18 = sphi 0, %s32
    %s19 = sphi 0, %s28
    %s20 = sphi 0, %s17
    %s21 = sphi 0, %s18
    %s22 = sphi 0, %s19
    %s23 = sphi 0, %s20
    %s24 = sphi 0, %s21
    %s25 = sphi 0, %s22
    %s43 = sphi 0, %s45
    %s46 = sphi 0, %s43
    %s47 = sphi 0, %s46
    %s63 = sphi 0, %s47
    %s67 = sphi 0, %s67
    %s69 = sphi 0, %s67
    %s70 = sphi 0, %s69
    %s84 = sphi 0, %s70
    %s90 = sphi 0, %s92
    %s93 = sphi 0, %s90
    %s94 = sphi 0, %s93
    %s110 = sphi 0, %s94
    %s114 = sphi 0, %s114
    %s116 = sphi 0, %s114
    %s117 = sphi 0, %s116
    %s131 = sphi 0, %s117
    %s139 = sphi 0, %s141
    %s142 = sphi 0, %s139
    %s143 = sphi 0, %s142
    %s159 = sphi 0, %s143
  $region4: #{tudu_forward.9} parent=0 // loop_header_branch
    %13 = sbr.rel (%p11) target = $region8
  $region5: #{tudu_forward.9} parent=0 // loop_body
    %s15 = ssub.s32 %s10, 1
    %s16 = ssub.s32 %s10, 2
    %s26 = sadd.s32 1, %s19
    %p27 = scmp.ge.s32.totalorder %s26, 3
    %s28 = scalar_select %p27, 0, %s26
    %s29 = sadd.s32 1, %s18
    %s30 = scalar_select %p27, %s29, %s18
    %p31 = scmp.ge.s32.totalorder %s30, 5
    %s32 = scalar_select %p31, 0, %s30
    %s33 = sadd.s32 1, %s17
    %s34 = scalar_select %p31, %s33, %s17
    %p35 = scmp.ge.s32.totalorder %s34, 2
    %s36 = scalar_select %p35, 0, %s34
    %s37 = sadd.s32 %s18, %s19
    %s38 = sadd.s32 %s32, %s28
    %s39 = ssub.s32 %s17, %s36
    %s40 = ssub.s32 %s37, %s38
    %s41 = sor.u32 %s39, %s40
    %p42 = scmp.eq.s32.totalorder %s41, 0
    %s44 = sadd.s32 %s43, 1
    %s45 = scalar_select %p42, %s43, %s44
    %p48 = pneg %p42
    %p49 = scmp.eq.s32.totalorder %s10, 29
    %p50 = por %p48, %p49
    %p51 = scmp.ne.s32.totalorder %s43, %s46
    %p52 = scmp.eq.s32.totalorder %s10, 0
    %p53 = por %p51, %p52
    %p54 = scmp.ne.s32.totalorder %s43, %s46
    %p55 = scmp.eq.s32.totalorder %s15, 29
    %p56 = por %p54, %p55
    %p57 = scmp.ne.s32.totalorder %s46, %s47
    %p58 = scmp.eq.s32.totalorder %s15, 0
    %p59 = por %p57, %p58
    %p60 = scmp.ne.s32.totalorder %s46, %s47
    %p61 = scmp.eq.s32.totalorder %s16, 29
    %p62 = por %p60, %p61
    %p64 = scmp.ne.s32.totalorder %s47, %s63
    %p65 = scmp.eq.s32.totalorder %s16, 0
    %p66 = por %p64, %p65
    %s68 = sadd.s32 %s67, 1
    %p71 = scmp.eq.s32.totalorder %s10, 29
    %p72 = scmp.ne.s32.totalorder %s67, %s69
    %p73 = scmp.eq.s32.totalorder %s10, 0
    %p74 = por %p72, %p73
    %p75 = scmp.ne.s32.totalorder %s67, %s69
    %p76 = scmp.eq.s32.totalorder %s15, 29
    %p77 = por %p75, %p76
    %p78 = scmp.ne.s32.totalorder %s69, %s70
    %p79 = scmp.eq.s32.totalorder %s15, 0
    %p80 = por %p78, %p79
    %p81 = scmp.ne.s32.totalorder %s69, %s70
    %p82 = scmp.eq.s32.totalorder %s16, 29
    %p83 = por %p81, %p82
    %p85 = scmp.ne.s32.totalorder %s70, %s84
    %p86 = scmp.eq.s32.totalorder %s16, 0
    %p87 = por %p85, %p86
    %s88 = ssub.s32 %s17, %s36
    %p89 = scmp.eq.s32.totalorder %s88, 0
    %s91 = sadd.s32 %s90, 1
    %s92 = scalar_select %p89, %s90, %s91
    %p95 = pneg %p89
    %p96 = scmp.eq.s32.totalorder %s10, 29
    %p97 = por %p95, %p96
    %p98 = scmp.ne.s32.totalorder %s90, %s93
    %p99 = scmp.eq.s32.totalorder %s10, 0
    %p100 = por %p98, %p99
    %p101 = scmp.ne.s32.totalorder %s90, %s93
    %p102 = scmp.eq.s32.totalorder %s15, 29
    %p103 = por %p101, %p102
    %p104 = scmp.ne.s32.totalorder %s93, %s94
    %p105 = scmp.eq.s32.totalorder %s15, 0
    %p106 = por %p104, %p105
    %p107 = scmp.ne.s32.totalorder %s93, %s94
    %p108 = scmp.eq.s32.totalorder %s16, 29
    %p109 = por %p107, %p108
    %p111 = scmp.ne.s32.totalorder %s94, %s110
    %p112 = scmp.eq.s32.totalorder %s16, 0
    %p113 = por %p111, %p112
    %s115 = sadd.s32 %s114, 1
    %p118 = scmp.eq.s32.totalorder %s10, 29
    %p119 = scmp.ne.s32.totalorder %s114, %s116
    %p120 = scmp.eq.s32.totalorder %s10, 0
    %p121 = por %p119, %p120
    %p122 = scmp.ne.s32.totalorder %s114, %s116
    %p123 = scmp.eq.s32.totalorder %s15, 29
    %p124 = por %p122, %p123
    %p125 = scmp.ne.s32.totalorder %s116, %s117
    %p126 = scmp.eq.s32.totalorder %s15, 0
    %p127 = por %p125, %p126
    %p128 = scmp.ne.s32.totalorder %s116, %s117
    %p129 = scmp.eq.s32.totalorder %s16, 29
    %p130 = por %p128, %p129
    %p132 = scmp.ne.s32.totalorder %s117, %s131
    %p133 = scmp.eq.s32.totalorder %s16, 0
    %p134 = por %p132, %p133
    %s135 = ssub.s32 %s17, %s36
    %s136 = ssub.s32 %s18, %s32
    %s137 = sor.u32 %s135, %s136
    %p138 = scmp.eq.s32.totalorder %s137, 0
    %s140 = sadd.s32 %s139, 1
    %s141 = scalar_select %p138, %s139, %s140
    %p144 = pneg %p138
    %p145 = scmp.eq.s32.totalorder %s10, 29
    %p146 = por %p144, %p145
    %p147 = scmp.ne.s32.totalorder %s139, %s142
    %p148 = scmp.eq.s32.totalorder %s10, 0
    %p149 = por %p147, %p148
    %p150 = scmp.ne.s32.totalorder %s139, %s142
    %p151 = scmp.eq.s32.totalorder %s15, 29
    %p152 = por %p150, %p151
    %p153 = scmp.ne.s32.totalorder %s142, %s143
    %p154 = scmp.eq.s32.totalorder %s15, 0
    %p155 = por %p153, %p154
    %p156 = scmp.ne.s32.totalorder %s142, %s143
    %p157 = scmp.eq.s32.totalorder %s16, 29
    %p158 = por %p156, %p157
    %p160 = scmp.ne.s32.totalorder %s143, %s159
    %p161 = scmp.eq.s32.totalorder %s16, 0
    %p162 = por %p160, %p161
    %p163 = scmp.le.s32.totalorder 1, %s10
    %p164 = scmp.lt.s32.totalorder %s10, 31
    %p165 = pnand %p163, %p164
    %p166 = pneg %p165
    // Predicated region
    $region9: #{tudu_forward.9} parent=5 // pred_check
      _
    $region10: #{tudu_forward.9} parent=5 // pred_check_branch
      %168 = sbr.rel (%p165) target = $region12
    $region11: #{tudu_forward.9} parent=5 // pred_region
      %s169 = ssub.s32 %s10, 1
      // Predicated region
      $region13: #{tudu_forward.9} parent=11 // pred_check
        %p170 = pneg %p80
      $region14: #{tudu_forward.9} parent=11 // pred_check_branch
        %172 = sbr.rel (%p170) target = $region16
      $region15: #{tudu_forward.9} parent=11 // pred_region
        _
      $region16: #{tudu_forward.9} parent=11 // pred_fallthru
        _
      // Predicated region
      $region17: #{tudu_forward.9} parent=11 // pred_check
        %p173 = pneg %p127
      $region18: #{tudu_forward.9} parent=11 // pred_check_branch
        %175 = sbr.rel (%p173) target = $region20
      $region19: #{tudu_forward.9} parent=11 // pred_region
        _
      $region20: #{tudu_forward.9} parent=11 // pred_fallthru
        _
    $region12: #{tudu_forward.9} parent=5 // pred_fallthru
      _
    %p176 = scmp.lt.s32.totalorder %s10, 30
    // Predicated region
    $region21: #{tudu_forward.9} parent=5 // pred_check
      %p177 = pneg %p176
    $region22: #{tudu_forward.9} parent=5 // pred_check_branch
      %179 = sbr.rel (%p177) target = $region24
    $region23: #{tudu_forward.9} parent=5 // pred_region
      // Predicated region
      $region25: #{tudu_forward.9} parent=23 // pred_check
        %p180 = pneg %p53
      $region26: #{tudu_forward.9} parent=23 // pred_check_branch
        %182 = sbr.rel (%p180) target = $region28
      $region27: #{tudu_forward.9} parent=23 // pred_region
        %s183 = sadd.s32 %s18, %s19
        %p184 = scmp.lt.s32.totalorder %s17, 1
        %s185 = scalar_select %p184, %s17, 1
        %p186 = scmp.lt.s32.totalorder %s183, 6
        %s187 = scalar_select %p186, %s183, 6
        %s188 = smul.addr %s185, 7
        %s189 = sadd.s32 %s187, %s188
        %s190 = smul.addr %s189, 4
        %s191 = scalar_lea.vmem %s0, %s190
        %s192 = sadd.s32 %s18, %s19
      $region28: #{tudu_forward.9} parent=23 // pred_fallthru
        _
      // Predicated region
      $region29: #{tudu_forward.9} parent=23 // pred_check
        %p193 = pneg %p100
      $region30: #{tudu_forward.9} parent=23 // pred_check_branch
        %195 = sbr.rel (%p193) target = $region32
      $region31: #{tudu_forward.9} parent=23 // pred_region
        %p196 = scmp.lt.s32.totalorder %s17, 1
        %s197 = scalar_select %p196, %s17, 1
        %s198 = scalar_lea.vmem %s2, %s197
      $region32: #{tudu_forward.9} parent=23 // pred_fallthru
        _
    $region24: #{tudu_forward.9} parent=5 // pred_fallthru
      _
    %p199 = scmp.le.s32.totalorder 1, %s10
    %p200 = scmp.lt.s32.totalorder %s10, 31
    %p201 = pnand %p199, %p200
    %p202 = pneg %p201
    // Predicated region
    $region33: #{tudu_forward.9} parent=5 // pred_check
      _
    $region34: #{tudu_forward.9} parent=5 // pred_check_branch
      %204 = sbr.rel (%p201) target = $region36
    $region35: #{tudu_forward.9} parent=5 // pred_region
      %s205 = ssub.s32 %s10, 1
      %s206 = sadd.s32 %s21, %s22
      %p207 = scmp.lt.s32.totalorder %s20, 1
      %s208 = scalar_select %p207, %s20, 1
      %p209 = scmp.lt.s32.totalorder %s206, 6
      %s210 = scalar_select %p209, %s206, 6
      %s211 = smul.addr %s208, 7
      %s212 = sadd.s32 %s210, %s211
      %s213 = smul.addr %s212, 4
      %s214 = scalar_lea.vmem %s0, %s213
      %p215 = pneg %p59
      %p216 = pneg %p56
      %p217 = pneg %p80
      %p218 = pneg %p77
      %p219 = scmp.lt.s32.totalorder %s20, 1
      %s220 = scalar_select %p219, %s20, 1
      %s221 = scalar_lea.vmem %s2, %s220
      %p222 = pneg %p106
      %p223 = pneg %p103
      %p224 = pneg %p127
      %p225 = pneg %p124
      %p226 = pneg %p155
      %p227 = pneg %p152
      %p228 = scmp.lt.s32.totalorder %s20, 1
      %s229 = scalar_select %p228, %s20, 1
      %p230 = scmp.lt.s32.totalorder %s21, 4
      %s231 = scalar_select %p230, %s21, 4
      %s232 = smul.addr %s229, 5
      %s233 = sadd.s32 %s231, %s232
      %s234 = smul.addr %s233, 4
      %s235 = scalar_lea.vmem %s4, %s234
      %s236 = sadd.s32 %s21, %s22
      %p237 = scmp.lt.s32.totalorder %s20, 1
      %s238 = scalar_select %p237, %s20, 1
      %p239 = scmp.lt.s32.totalorder %s236, 6
      %s240 = scalar_select %p239, %s236, 6
      %s241 = smul.addr %s238, 7
      %s242 = sadd.s32 %s240, %s241
      %s243 = smul.addr %s242, 4
      %s244 = scalar_lea.vmem %s0, %s243
      %s245 = sadd.s32 %s21, %s22
      %p246 = scmp.lt.s32.totalorder %s20, 1
      %s247 = scalar_select %p246, %s20, 1
      %s248 = scalar_lea.vmem %s2, %s247
      %p249 = scmp.lt.s32.totalorder %s20, 1
      %s250 = scalar_select %p249, %s20, 1
      %p251 = scmp.lt.s32.totalorder %s21, 4
      %s252 = scalar_select %p251, %s21, 4
      %s253 = smul.addr %s250, 5
      %s254 = sadd.s32 %s252, %s253
      %s255 = smul.addr %s254, 4
      %s256 = scalar_lea.vmem %s4, %s255
      %p258 = scmp.eq.s32.totalorder %s22, 0
      // Predicated region
      $region37: #{tudu_forward.9} parent=35 // pred_check
        %p259 = pneg %p258
      $region38: #{tudu_forward.9} parent=35 // pred_check_branch
        %261 = sbr.rel (%p259) target = $region40
      $region39: #{tudu_forward.9} parent=35 // pred_region
        %vm262 = vcmask 520192
        %263 = vst.msk [vmem:[#allocation2] sm:$0x1f] %vm262, 0.0
      $region40: #{tudu_forward.9} parent=35 // pred_fallthru
        _
      %v264 = vld [vmem:[%s244] sm:$0xf]
      %v265 = vunpack.c.l.bf16 %v264
      %v266 = vld [vmem:[%s248] sm:$0x1]
      %v268 = vlaneseq
      %v269 = vshrl.u32 %v268, 7
      %v270 = vsub.s32 0, %v269
      %v271 = vrot.slane %v266, %v270
      %v273 = vmul.f32 %v265, %v271
      %v274 = vpack.c.bf16 %v273, %v273
      %s275 = smul.u32 %s22, 3
      %s276 = smul.u32 %s275, 8
      %s277 = smul.addr %s276, 4
      %s278 = scalar_lea.vmem %s1, %s277
      %v279 = vld [vmem:[%s278] sm:$0xf]
      %v280 = vld [vmem:[%s278 + $0x4] sm:$0xf]
      %v281 = vld [vmem:[%s278 + $0x8] sm:$0xf]
      %v282 = vld [vmem:[%s278 + $0xc] sm:$0xf]
      %v283 = vld [vmem:[%s278 + $0x10] sm:$0xf]
      %v284 = vld [vmem:[%s278 + $0x14] sm:$0xf]
      %v285 = vld [vmem:[%s278 + $0x18] sm:$0xf]
      %v286 = vld [vmem:[%s278 + $0x1c] sm:$0xf]
      %s287 = sadd.s32 %s275, 1
      %s288 = smul.u32 %s287, 8
      %s289 = smul.addr %s288, 4
      %s290 = scalar_lea.vmem %s1, %s289
      %v291 = vld [vmem:[%s290] sm:$0xf]
      %v292 = vld [vmem:[%s290 + $0x4] sm:$0xf]
      %v293 = vld [vmem:[%s290 + $0x8] sm:$0xf]
      %v294 = vld [vmem:[%s290 + $0xc] sm:$0xf]
      %v295 = vld [vmem:[%s290 + $0x10] sm:$0xf]
      %v296 = vld [vmem:[%s290 + $0x14] sm:$0xf]
      %v297 = vld [vmem:[%s290 + $0x18] sm:$0xf]
      %v298 = vld [vmem:[%s290 + $0x1c] sm:$0xf]
      %v300 = vshrl.u32 %v274, 16
      %v302 = vshll.u32 %v274, 16
      %v304 = vrot.slane %v302, 1
      %v305 = vor.u32 %v300, %v304
      %v314 = vunpack.c.l.b16 %v291
      %v315 = vunpack.c.l.b16 %v292
      %v316 = vunpack.c.l.b16 %v293
      %v317 = vunpack.c.l.b16 %v294
      %v318 = vunpack.c.l.b16 %v295
      %v319 = vunpack.c.l.b16 %v296
      %v320 = vunpack.c.l.b16 %v297
      %v321 = vunpack.c.l.b16 %v298
      %v322 = vpack.c.b16 %v315, %v314
      %v323 = vpack.c.b16 %v317, %v316
      %v324 = vpack.c.b16 %v319, %v318
      %v325 = vpack.c.b16 %v321, %v320
      %vm330 = vcmask 523264
      %v332 = vsel %vm330, %v305, 0
      %334 = vmatprep.subr.bf16.mxu0 0
      %335 = vmatpush1.bf16.msra.mxu0 0
      %336 = vmatprep.subr.bf16.mxu0 0
      %337 = vmatpush1.bf16.msra.mxu0 0
      %338 = vmatprep.subr.bf16.mxu0 0
      %339 = vmatpush1.bf16.msra.mxu0 0
      %340 = vmatprep.subr.bf16.mxu0 0
      %341 = vmatpush1.bf16.msra.mxu0 0
      %342 = vmatprep.subr.bf16.mxu0 0
      %343 = vmatpush1.bf16.msra.mxu0 %v325
      %344 = vmatprep.subr.bf16.mxu0 0
      %345 = vmatpush1.bf16.msra.mxu0 %v324
      %346 = vmatprep.subr.bf16.mxu0 0
      %347 = vmatpush1.bf16.msra.mxu0 %v323
      %348 = vmatprep.subr.bf16.mxu0 0
      %349 = vmatpush1.bf16.msra.mxu0 %v322
      %350 = vmatprep.subr.bf16.mxu0 0
      %351 = vmatpush2.bf16.msra.mxu0 0
      %352 = vmatprep.subr.bf16.mxu0 0
      %353 = vmatpush2.bf16.msra.mxu0 0
      %354 = vmatprep.subr.bf16.mxu0 0
      %355 = vmatpush2.bf16.msra.mxu0 0
      %356 = vmatprep.subr.bf16.mxu0 0
      %357 = vmatpush2.bf16.msra.mxu0 0
      %358 = vmatprep.subr.bf16.mxu0 0
      %359 = vmatpush2.bf16.msra.mxu0 0
      %360 = vmatprep.subr.bf16.mxu0 0
      %361 = vmatpush2.bf16.msra.mxu0 0
      %362 = vmatprep.subr.bf16.mxu0 0
      %363 = vmatpush2.bf16.msra.mxu0 0
      %364 = vmatprep.subr.bf16.mxu0 0
      %365 = vmatpush2.bf16.msra.mxu0 0
      %366 = vmatprep.mubr.bf16.mxu0 0
      %367 = vmatmul.mubr.bf16.gmra.mxu0 %v332
      %v368 = vpop.f32.mrf.mxu0
      %v369 = vadd.f32 0.0, %v368
      %v370 = vpop.f32.mrf.mxu0
      %v371 = vpop.f32.mrf.mxu0
      %v372 = vpop.f32.mrf.mxu0
      %373 = vdwg.mxu0
      %v382 = vunpack.c.l.b16 %v279
      %v383 = vunpack.c.l.b16 %v280
      %v384 = vunpack.c.l.b16 %v281
      %v385 = vunpack.c.l.b16 %v282
      %v386 = vunpack.c.l.b16 %v283
      %v387 = vunpack.c.l.b16 %v284
      %v388 = vunpack.c.l.b16 %v285
      %v389 = vunpack.c.l.b16 %v286
      %v390 = vpack.c.b16 %v383, %v382
      %v391 = vpack.c.b16 %v385, %v384
      %v392 = vpack.c.b16 %v387, %v386
      %v393 = vpack.c.b16 %v389, %v388
      %v398 = vsel %vm330, %v274, 0
      %400 = vmatprep.subr.bf16.mxu0 0
      %401 = vmatpush1.bf16.msra.mxu0 0
      %402 = vmatprep.subr.bf16.mxu0 0
      %403 = vmatpush1.bf16.msra.mxu0 0
      %404 = vmatprep.subr.bf16.mxu0 0
      %405 = vmatpush1.bf16.msra.mxu0 0
      %406 = vmatprep.subr.bf16.mxu0 0
      %407 = vmatpush1.bf16.msra.mxu0 0
      %408 = vmatprep.subr.bf16.mxu0 0
      %409 = vmatpush1.bf16.msra.mxu0 %v393
      %410 = vmatprep.subr.bf16.mxu0 0
      %411 = vmatpush1.bf16.msra.mxu0 %v392
      %412 = vmatprep.subr.bf16.mxu0 0
      %413 = vmatpush1.bf16.msra.mxu0 %v391
      %414 = vmatprep.subr.bf16.mxu0 0
      %415 = vmatpush1.bf16.msra.mxu0 %v390
      %416 = vmatprep.subr.bf16.mxu0 0
      %417 = vmatpush2.bf16.msra.mxu0 0
      %418 = vmatprep.subr.bf16.mxu0 0
      %419 = vmatpush2.bf16.msra.mxu0 0
      %420 = vmatprep.subr.bf16.mxu0 0
      %421 = vmatpush2.bf16.msra.mxu0 0
      %422 = vmatprep.subr.bf16.mxu0 0
      %423 = vmatpush2.bf16.msra.mxu0 0
      %424 = vmatprep.subr.bf16.mxu0 0
      %425 = vmatpush2.bf16.msra.mxu0 0
      %426 = vmatprep.subr.bf16.mxu0 0
      %427 = vmatpush2.bf16.msra.mxu0 0
      %428 = vmatprep.subr.bf16.mxu0 0
      %429 = vmatpush2.bf16.msra.mxu0 0
      %430 = vmatprep.subr.bf16.mxu0 0
      %431 = vmatpush2.bf16.msra.mxu0 0
      %432 = vmatprep.mubr.bf16.mxu0 0
      %433 = vmatmul.mubr.bf16.gmra.mxu0 %v398
      %v434 = vpop.f32.mrf.mxu0
      %v435 = vadd.f32 %v369, %v434
      %v436 = vpop.f32.mrf.mxu0
      %v437 = vpop.f32.mrf.mxu0
      %v438 = vpop.f32.mrf.mxu0
      %439 = vdwg.mxu0
      %s440 = sadd.s32 %s275, 2
      %s441 = smul.u32 %s440, 8
      %s442 = smul.addr %s441, 4
      %s443 = scalar_lea.vmem %s1, %s442
      %v444 = vld [vmem:[%s443] sm:$0xf]
      %v445 = vld [vmem:[%s443 + $0x4] sm:$0xf]
      %v446 = vld [vmem:[%s443 + $0x8] sm:$0xf]
      %v447 = vld [vmem:[%s443 + $0xc] sm:$0xf]
      %v448 = vld [vmem:[%s443 + $0x10] sm:$0xf]
      %v449 = vld [vmem:[%s443 + $0x14] sm:$0xf]
      %v450 = vld [vmem:[%s443 + $0x18] sm:$0xf]
      %v451 = vld [vmem:[%s443 + $0x1c] sm:$0xf]
      %v453 = vrot.slane %v274, 1
      %v462 = vunpack.c.l.b16 %v444
      %v463 = vunpack.c.l.b16 %v445
      %v464 = vunpack.c.l.b16 %v446
      %v465 = vunpack.c.l.b16 %v447
      %v466 = vunpack.c.l.b16 %v448
      %v467 = vunpack.c.l.b16 %v449
      %v468 = vunpack.c.l.b16 %v450
      %v469 = vunpack.c.l.b16 %v451
      %v470 = vpack.c.b16 %v463, %v462
      %v471 = vpack.c.b16 %v465, %v464
      %v472 = vpack.c.b16 %v467, %v466
      %v473 = vpack.c.b16 %v469, %v468
      %v479 = vsel %vm330, %v453, 0
      %481 = vmatprep.subr.bf16.mxu0 0
      %482 = vmatpush1.bf16.msra.mxu0 0
      %483 = vmatprep.subr.bf16.mxu0 0
      %484 = vmatpush1.bf16.msra.mxu0 0
      %485 = vmatprep.subr.bf16.mxu0 0
      %486 = vmatpush1.bf16.msra.mxu0 0
      %487 = vmatprep.subr.bf16.mxu0 0
      %488 = vmatpush1.bf16.msra.mxu0 0
      %489 = vmatprep.subr.bf16.mxu0 0
      %490 = vmatpush1.bf16.msra.mxu0 %v473
      %491 = vmatprep.subr.bf16.mxu0 0
      %492 = vmatpush1.bf16.msra.mxu0 %v472
      %493 = vmatprep.subr.bf16.mxu0 0
      %494 = vmatpush1.bf16.msra.mxu0 %v471
      %495 = vmatprep.subr.bf16.mxu0 0
      %496 = vmatpush1.bf16.msra.mxu0 %v470
      %497 = vmatprep.subr.bf16.mxu0 0
      %498 = vmatpush2.bf16.msra.mxu0 0
      %499 = vmatprep.subr.bf16.mxu0 0
      %500 = vmatpush2.bf16.msra.mxu0 0
      %501 = vmatprep.subr.bf16.mxu0 0
      %502 = vmatpush2.bf16.msra.mxu0 0
      %503 = vmatprep.subr.bf16.mxu0 0
      %504 = vmatpush2.bf16.msra.mxu0 0
      %505 = vmatprep.subr.bf16.mxu0 0
      %506 = vmatpush2.bf16.msra.mxu0 0
      %507 = vmatprep.subr.bf16.mxu0 0
      %508 = vmatpush2.bf16.msra.mxu0 0
      %509 = vmatprep.subr.bf16.mxu0 0
      %510 = vmatpush2.bf16.msra.mxu0 0
      %511 = vmatprep.subr.bf16.mxu0 0
      %512 = vmatpush2.bf16.msra.mxu0 0
      %513 = vmatprep.mubr.bf16.mxu0 0
      %514 = vmatmul.mubr.bf16.gmra.mxu0 %v479
      %v515 = vpop.f32.mrf.mxu0
      %v516 = vadd.f32 0.0, %v515
      %v517 = vpop.f32.mrf.mxu0
      %v518 = vpop.f32.mrf.mxu0
      %v519 = vpop.f32.mrf.mxu0
      %520 = vdwg.mxu0
      %v521 = vadd.f32 %v435, %v516
      %v522 = vld [vmem:[#allocation2] sm:$0x1f]
      %v523 = vadd.f32 %v522, %v521
      %vm524 = vcmask 520192
      %525 = vst.msk [vmem:[#allocation2] sm:$0x1f] %vm524, %v523
      %p526 = scmp.eq.s32.totalorder %s22, 2
      // Predicated region
      $region41: #{tudu_forward.9} parent=35 // pred_check
        %p527 = pneg %p526
      $region42: #{tudu_forward.9} parent=35 // pred_check_branch
        %529 = sbr.rel (%p527) target = $region44
      $region43: #{tudu_forward.9} parent=35 // pred_region
        %v530 = vld [vmem:[#allocation2] sm:$0x1f]
        %v531 = vld [vmem:[%s3] sm:$0x1]
        %v533 = vlaneseq
        %v534 = vshrl.u32 %v533, 7
        %v535 = vsub.s32 0, %v534
        %v536 = vrot.slane %v531, %v535
        %v538 = vadd.f32 %v530, %v536
        %v539 = vmax.f32 %v538, 0.0
        %v540 = vpack.c.bf16 %v539, %v539
        %vm541 = vcmask 518144
        %vm542 = vsmask.f32 2304
        %vm543 = vmand %vm541, %vm542
        %v544 = vld [vmem:[%s256] sm:$0x7]
        %v545 = vsel %vm543, %v540, %v544
        %546 = vst [vmem:[%s256] sm:$0x7] %v545
      $region44: #{tudu_forward.9} parent=35 // pred_fallthru
        _
      %p547 = scmp.lt.s32.totalorder %s20, 1
      %s548 = scalar_select %p547, %s20, 1
      %p549 = scmp.lt.s32.totalorder %s21, 4
      %s550 = scalar_select %p549, %s21, 4
      %s551 = smul.addr %s548, 5
      %s552 = sadd.s32 %s550, %s551
      %s553 = smul.addr %s552, 4
      %s554 = scalar_lea.vmem %s4, %s553
      // Predicated region
      $region45: #{tudu_forward.9} parent=35 // pred_check
        %p555 = pneg %p152
      $region46: #{tudu_forward.9} parent=35 // pred_check_branch
        %557 = sbr.rel (%p555) target = $region48
      $region47: #{tudu_forward.9} parent=35 // pred_region
        _
      $region48: #{tudu_forward.9} parent=35 // pred_fallthru
        _
    $region36: #{tudu_forward.9} parent=5 // pred_fallthru
      _
    %p558 = scmp.le.s32.totalorder 2, %s10
    // Predicated region
    $region49: #{tudu_forward.9} parent=5 // pred_check
      %p559 = pneg %p558
    $region50: #{tudu_forward.9} parent=5 // pred_check_branch
      %561 = sbr.rel (%p559) target = $region52
    $region51: #{tudu_forward.9} parent=5 // pred_region
      %s562 = ssub.s32 %s10, 2
      // Predicated region
      $region53: #{tudu_forward.9} parent=51 // pred_check
        %p563 = pneg %p158
      $region54: #{tudu_forward.9} parent=51 // pred_check_branch
        %565 = sbr.rel (%p563) target = $region56
      $region55: #{tudu_forward.9} parent=51 // pred_region
        %p566 = scmp.lt.s32.totalorder %s23, 1
        %s567 = scalar_select %p566, %s23, 1
        %p568 = scmp.lt.s32.totalorder %s24, 4
        %s569 = scalar_select %p568, %s24, 4
        %s570 = smul.addr %s567, 5
        %s571 = sadd.s32 %s569, %s570
        %s572 = smul.addr %s571, 4
        %s573 = scalar_lea.vmem %s4, %s572
      $region56: #{tudu_forward.9} parent=51 // pred_fallthru
        _
    $region52: #{tudu_forward.9} parent=5 // pred_fallthru
      _
  $region6: #{tudu_forward.9} parent=0 // loop_footer
    %s14 = sadd.s32 1, %s10
  $region7: #{tudu_forward.9} parent=0 // loop_footer_branch
    %9 = sbr.rel target = $region3
  $region8: #{tudu_forward.9} parent=0 // loop_exit
    _

// kernel: tudu_forward.10
$region0: #{tudu_forward.10}
  #allocation0 [shape = 'u32[]', space=smem, size = 0x4, offset = 0x4, fixed_abs, tag = 'smem constant byte address 0x4 - core index']
  #allocation1 [shape = 'u32[144,128]{1,0:T(1,128)}', space=vmem, size = 0x12000, scoped, tag = 'internal scratch']
  #allocation2 [shape = 'f32[5,64]{1,0:T(8,128)}', space=vmem, size = 0x1000, scoped, tag = 'scratch operand']
  %s0 = inlined_call_operand.vmem [shape: bf16[2,7,1,7,64], index: 0, kind: input, shape index: {}]
  %s1 = inlined_call_operand.vmem [shape: bf16[9,64,64], index: 1, kind: input, shape index: {}]
  %s2 = inlined_call_operand.vmem [shape: f32[2,1,64], index: 2, kind: input, shape index: {}]
  %s3 = inlined_call_operand.vmem [shape: f32[1,1,64], index: 3, kind: input, shape index: {}]
  %s4 = inlined_call_operand.vmem [shape: bf16[2,5,5,64], index: 4, kind: input, shape index: {}]
  %s5 = inlined_call_operand.vmem [shape: bf16[2,5,5,64], index: 5, kind: output, shape index: {}]
  %s6 = sld [smem:[#allocation0]]
  $region61: #{tudu_forward.10} parent=0
    _
  %s8 = ssub.s32 1, %s6
  %s9 = scalar_select 0, %s8, %s6
  loop: start=0, step=1, limit=32
  $region2: #{tudu_forward.10} parent=0 // loop_pre_header
    _
  $region3: #{tudu_forward.10} parent=0 // loop_header
    %s11 = sphi 0, %s15
    %p12 = scmp.ge.s32.totalorder %s11, 32
    %s18 = sphi 0, %s37
    %s19 = sphi 0, %s33
    %s20 = sphi 0, %s29
    %s21 = sphi 0, %s18
    %s22 = sphi 0, %s19
    %s23 = sphi 0, %s20
    %s24 = sphi 0, %s21
    %s25 = sphi 0, %s22
    %s26 = sphi 0, %s23
    %s44 = sphi 0, %s46
    %s47 = sphi 0, %s44
    %s48 = sphi 0, %s47
    %s64 = sphi 0, %s48
    %s68 = sphi 0, %s68
    %s70 = sphi 0, %s68
    %s71 = sphi 0, %s70
    %s85 = sphi 0, %s71
    %s91 = sphi 0, %s93
    %s94 = sphi 0, %s91
    %s95 = sphi 0, %s94
    %s111 = sphi 0, %s95
    %s115 = sphi 0, %s115
    %s117 = sphi 0, %s115
    %s118 = sphi 0, %s117
    %s132 = sphi 0, %s118
    %s140 = sphi 0, %s142
    %s143 = sphi 0, %s140
    %s144 = sphi 0, %s143
    %s160 = sphi 0, %s144
    %s168 = sphi 0, %s170
    %s171 = sphi 0, %s168
    %s172 = sphi 0, %s171
    %s188 = sphi 0, %s172
  $region4: #{tudu_forward.10} parent=0 // loop_header_branch
    %14 = sbr.rel (%p12) target = $region8
  $region5: #{tudu_forward.10} parent=0 // loop_body
    %s16 = ssub.s32 %s11, 1
    %s17 = ssub.s32 %s11, 2
    %s27 = sadd.s32 1, %s20
    %p28 = scmp.ge.s32.totalorder %s27, 3
    %s29 = scalar_select %p28, 0, %s27
    %s30 = sadd.s32 1, %s19
    %s31 = scalar_select %p28, %s30, %s19
    %p32 = scmp.ge.s32.totalorder %s31, 5
    %s33 = scalar_select %p32, 0, %s31
    %s34 = sadd.s32 1, %s18
    %s35 = scalar_select %p32, %s34, %s18
    %p36 = scmp.ge.s32.totalorder %s35, 2
    %s37 = scalar_select %p36, 0, %s35
    %s38 = sadd.s32 %s19, %s20
    %s39 = sadd.s32 %s33, %s29
    %s40 = ssub.s32 %s18, %s37
    %s41 = ssub.s32 %s38, %s39
    %s42 = sor.u32 %s40, %s41
    %p43 = scmp.eq.s32.totalorder %s42, 0
    %s45 = sadd.s32 %s44, 1
    %s46 = scalar_select %p43, %s44, %s45
    %p49 = pneg %p43
    %p50 = scmp.eq.s32.totalorder %s11, 29
    %p51 = por %p49, %p50
    %p52 = scmp.ne.s32.totalorder %s44, %s47
    %p53 = scmp.eq.s32.totalorder %s11, 0
    %p54 = por %p52, %p53
    %p55 = scmp.ne.s32.totalorder %s44, %s47
    %p56 = scmp.eq.s32.totalorder %s16, 29
    %p57 = por %p55, %p56
    %p58 = scmp.ne.s32.totalorder %s47, %s48
    %p59 = scmp.eq.s32.totalorder %s16, 0
    %p60 = por %p58, %p59
    %p61 = scmp.ne.s32.totalorder %s47, %s48
    %p62 = scmp.eq.s32.totalorder %s17, 29
    %p63 = por %p61, %p62
    %p65 = scmp.ne.s32.totalorder %s48, %s64
    %p66 = scmp.eq.s32.totalorder %s17, 0
    %p67 = por %p65, %p66
    %s69 = sadd.s32 %s68, 1
    %p72 = scmp.eq.s32.totalorder %s11, 29
    %p73 = scmp.ne.s32.totalorder %s68, %s70
    %p74 = scmp.eq.s32.totalorder %s11, 0
    %p75 = por %p73, %p74
    %p76 = scmp.ne.s32.totalorder %s68, %s70
    %p77 = scmp.eq.s32.totalorder %s16, 29
    %p78 = por %p76, %p77
    %p79 = scmp.ne.s32.totalorder %s70, %s71
    %p80 = scmp.eq.s32.totalorder %s16, 0
    %p81 = por %p79, %p80
    %p82 = scmp.ne.s32.totalorder %s70, %s71
    %p83 = scmp.eq.s32.totalorder %s17, 29
    %p84 = por %p82, %p83
    %p86 = scmp.ne.s32.totalorder %s71, %s85
    %p87 = scmp.eq.s32.totalorder %s17, 0
    %p88 = por %p86, %p87
    %s89 = ssub.s32 %s18, %s37
    %p90 = scmp.eq.s32.totalorder %s89, 0
    %s92 = sadd.s32 %s91, 1
    %s93 = scalar_select %p90, %s91, %s92
    %p96 = pneg %p90
    %p97 = scmp.eq.s32.totalorder %s11, 29
    %p98 = por %p96, %p97
    %p99 = scmp.ne.s32.totalorder %s91, %s94
    %p100 = scmp.eq.s32.totalorder %s11, 0
    %p101 = por %p99, %p100
    %p102 = scmp.ne.s32.totalorder %s91, %s94
    %p103 = scmp.eq.s32.totalorder %s16, 29
    %p104 = por %p102, %p103
    %p105 = scmp.ne.s32.totalorder %s94, %s95
    %p106 = scmp.eq.s32.totalorder %s16, 0
    %p107 = por %p105, %p106
    %p108 = scmp.ne.s32.totalorder %s94, %s95
    %p109 = scmp.eq.s32.totalorder %s17, 29
    %p110 = por %p108, %p109
    %p112 = scmp.ne.s32.totalorder %s95, %s111
    %p113 = scmp.eq.s32.totalorder %s17, 0
    %p114 = por %p112, %p113
    %s116 = sadd.s32 %s115, 1
    %p119 = scmp.eq.s32.totalorder %s11, 29
    %p120 = scmp.ne.s32.totalorder %s115, %s117
    %p121 = scmp.eq.s32.totalorder %s11, 0
    %p122 = por %p120, %p121
    %p123 = scmp.ne.s32.totalorder %s115, %s117
    %p124 = scmp.eq.s32.totalorder %s16, 29
    %p125 = por %p123, %p124
    %p126 = scmp.ne.s32.totalorder %s117, %s118
    %p127 = scmp.eq.s32.totalorder %s16, 0
    %p128 = por %p126, %p127
    %p129 = scmp.ne.s32.totalorder %s117, %s118
    %p130 = scmp.eq.s32.totalorder %s17, 29
    %p131 = por %p129, %p130
    %p133 = scmp.ne.s32.totalorder %s118, %s132
    %p134 = scmp.eq.s32.totalorder %s17, 0
    %p135 = por %p133, %p134
    %s136 = ssub.s32 %s18, %s37
    %s137 = ssub.s32 %s19, %s33
    %s138 = sor.u32 %s136, %s137
    %p139 = scmp.eq.s32.totalorder %s138, 0
    %s141 = sadd.s32 %s140, 1
    %s142 = scalar_select %p139, %s140, %s141
    %p145 = pneg %p139
    %p146 = scmp.eq.s32.totalorder %s11, 29
    %p147 = por %p145, %p146
    %p148 = scmp.ne.s32.totalorder %s140, %s143
    %p149 = scmp.eq.s32.totalorder %s11, 0
    %p150 = por %p148, %p149
    %p151 = scmp.ne.s32.totalorder %s140, %s143
    %p152 = scmp.eq.s32.totalorder %s16, 29
    %p153 = por %p151, %p152
    %p154 = scmp.ne.s32.totalorder %s143, %s144
    %p155 = scmp.eq.s32.totalorder %s16, 0
    %p156 = por %p154, %p155
    %p157 = scmp.ne.s32.totalorder %s143, %s144
    %p158 = scmp.eq.s32.totalorder %s17, 29
    %p159 = por %p157, %p158
    %p161 = scmp.ne.s32.totalorder %s144, %s160
    %p162 = scmp.eq.s32.totalorder %s17, 0
    %p163 = por %p161, %p162
    %s164 = ssub.s32 %s18, %s37
    %s165 = ssub.s32 %s19, %s33
    %s166 = sor.u32 %s164, %s165
    %p167 = scmp.eq.s32.totalorder %s166, 0
    %s169 = sadd.s32 %s168, 1
    %s170 = scalar_select %p167, %s168, %s169
    %p173 = pneg %p167
    %p174 = scmp.eq.s32.totalorder %s11, 29
    %p175 = por %p173, %p174
    %p176 = scmp.ne.s32.totalorder %s168, %s171
    %p177 = scmp.eq.s32.totalorder %s11, 0
    %p178 = por %p176, %p177
    %p179 = scmp.ne.s32.totalorder %s168, %s171
    %p180 = scmp.eq.s32.totalorder %s16, 29
    %p181 = por %p179, %p180
    %p182 = scmp.ne.s32.totalorder %s171, %s172
    %p183 = scmp.eq.s32.totalorder %s16, 0
    %p184 = por %p182, %p183
    %p185 = scmp.ne.s32.totalorder %s171, %s172
    %p186 = scmp.eq.s32.totalorder %s17, 29
    %p187 = por %p185, %p186
    %p189 = scmp.ne.s32.totalorder %s172, %s188
    %p190 = scmp.eq.s32.totalorder %s17, 0
    %p191 = por %p189, %p190
    %p192 = scmp.le.s32.totalorder 1, %s11
    %p193 = scmp.lt.s32.totalorder %s11, 31
    %p194 = pnand %p192, %p193
    %p195 = pneg %p194
    // Predicated region
    $region9: #{tudu_forward.10} parent=5 // pred_check
      _
    $region10: #{tudu_forward.10} parent=5 // pred_check_branch
      %197 = sbr.rel (%p194) target = $region12
    $region11: #{tudu_forward.10} parent=5 // pred_region
      %s198 = ssub.s32 %s11, 1
      // Predicated region
      $region13: #{tudu_forward.10} parent=11 // pred_check
        %p199 = pneg %p81
      $region14: #{tudu_forward.10} parent=11 // pred_check_branch
        %201 = sbr.rel (%p199) target = $region16
      $region15: #{tudu_forward.10} parent=11 // pred_region
        _
      $region16: #{tudu_forward.10} parent=11 // pred_fallthru
        _
      // Predicated region
      $region17: #{tudu_forward.10} parent=11 // pred_check
        %p202 = pneg %p128
      $region18: #{tudu_forward.10} parent=11 // pred_check_branch
        %204 = sbr.rel (%p202) target = $region20
      $region19: #{tudu_forward.10} parent=11 // pred_region
        _
      $region20: #{tudu_forward.10} parent=11 // pred_fallthru
        _
    $region12: #{tudu_forward.10} parent=5 // pred_fallthru
      _
    %p205 = scmp.lt.s32.totalorder %s11, 30
    // Predicated region
    $region21: #{tudu_forward.10} parent=5 // pred_check
      %p206 = pneg %p205
    $region22: #{tudu_forward.10} parent=5 // pred_check_branch
      %208 = sbr.rel (%p206) target = $region24
    $region23: #{tudu_forward.10} parent=5 // pred_region
      // Predicated region
      $region25: #{tudu_forward.10} parent=23 // pred_check
        %p209 = pneg %p54
      $region26: #{tudu_forward.10} parent=23 // pred_check_branch
        %211 = sbr.rel (%p209) target = $region28
      $region27: #{tudu_forward.10} parent=23 // pred_region
        %s212 = sadd.s32 %s19, %s20
        %p213 = scmp.lt.s32.totalorder %s18, 1
        %s214 = scalar_select %p213, %s18, 1
        %p215 = scmp.lt.s32.totalorder %s212, 6
        %s216 = scalar_select %p215, %s212, 6
        %s217 = smul.addr %s214, 7
        %s218 = sadd.s32 %s216, %s217
        %s219 = smul.addr %s218, 4
        %s220 = scalar_lea.vmem %s0, %s219
        %s221 = sadd.s32 %s19, %s20
      $region28: #{tudu_forward.10} parent=23 // pred_fallthru
        _
      // Predicated region
      $region29: #{tudu_forward.10} parent=23 // pred_check
        %p222 = pneg %p101
      $region30: #{tudu_forward.10} parent=23 // pred_check_branch
        %224 = sbr.rel (%p222) target = $region32
      $region31: #{tudu_forward.10} parent=23 // pred_region
        %p225 = scmp.lt.s32.totalorder %s18, 1
        %s226 = scalar_select %p225, %s18, 1
        %s227 = scalar_lea.vmem %s2, %s226
      $region32: #{tudu_forward.10} parent=23 // pred_fallthru
        _
      // Predicated region
      $region33: #{tudu_forward.10} parent=23 // pred_check
        %p228 = pneg %p150
      $region34: #{tudu_forward.10} parent=23 // pred_check_branch
        %230 = sbr.rel (%p228) target = $region36
      $region35: #{tudu_forward.10} parent=23 // pred_region
        %p231 = scmp.lt.s32.totalorder %s18, 1
        %s232 = scalar_select %p231, %s18, 1
        %p233 = scmp.lt.s32.totalorder %s19, 4
        %s234 = scalar_select %p233, %s19, 4
        %s235 = smul.addr %s232, 5
        %s236 = sadd.s32 %s234, %s235
        %s237 = smul.addr %s236, 4
        %s238 = scalar_lea.vmem %s4, %s237
      $region36: #{tudu_forward.10} parent=23 // pred_fallthru
        _
    $region24: #{tudu_forward.10} parent=5 // pred_fallthru
      _
    %p239 = scmp.le.s32.totalorder 1, %s11
    %p240 = scmp.lt.s32.totalorder %s11, 31
    %p241 = pnand %p239, %p240
    %p242 = pneg %p241
    // Predicated region
    $region37: #{tudu_forward.10} parent=5 // pred_check
      _
    $region38: #{tudu_forward.10} parent=5 // pred_check_branch
      %244 = sbr.rel (%p241) target = $region40
    $region39: #{tudu_forward.10} parent=5 // pred_region
      %s245 = ssub.s32 %s11, 1
      %s246 = sadd.s32 %s22, %s23
      %p247 = scmp.lt.s32.totalorder %s21, 1
      %s248 = scalar_select %p247, %s21, 1
      %p249 = scmp.lt.s32.totalorder %s246, 6
      %s250 = scalar_select %p249, %s246, 6
      %s251 = smul.addr %s248, 7
      %s252 = sadd.s32 %s250, %s251
      %s253 = smul.addr %s252, 4
      %s254 = scalar_lea.vmem %s0, %s253
      %p255 = pneg %p60
      %p256 = pneg %p57
      %p257 = pneg %p81
      %p258 = pneg %p78
      %p259 = scmp.lt.s32.totalorder %s21, 1
      %s260 = scalar_select %p259, %s21, 1
      %s261 = scalar_lea.vmem %s2, %s260
      %p262 = pneg %p107
      %p263 = pneg %p104
      %p264 = pneg %p128
      %p265 = pneg %p125
      %p266 = scmp.lt.s32.totalorder %s21, 1
      %s267 = scalar_select %p266, %s21, 1
      %p268 = scmp.lt.s32.totalorder %s22, 4
      %s269 = scalar_select %p268, %s22, 4
      %s270 = smul.addr %s267, 5
      %s271 = sadd.s32 %s269, %s270
      %s272 = smul.addr %s271, 4
      %s273 = scalar_lea.vmem %s4, %s272
      %p274 = pneg %p156
      %p275 = pneg %p153
      %p276 = pneg %p184
      %p277 = pneg %p181
      %p278 = scmp.lt.s32.totalorder %s21, 1
      %s279 = scalar_select %p278, %s21, 1
      %p280 = scmp.lt.s32.totalorder %s22, 4
      %s281 = scalar_select %p280, %s22, 4
      %s282 = smul.addr %s279, 5
      %s283 = sadd.s32 %s281, %s282
      %s284 = smul.addr %s283, 4
      %s285 = scalar_lea.vmem %s5, %s284
      %s286 = sadd.s32 %s22, %s23
      %p287 = scmp.lt.s32.totalorder %s21, 1
      %s288 = scalar_select %p287, %s21, 1
      %p289 = scmp.lt.s32.totalorder %s286, 6
      %s290 = scalar_select %p289, %s286, 6
      %s291 = smul.addr %s288, 7
      %s292 = sadd.s32 %s290, %s291
      %s293 = smul.addr %s292, 4
      %s294 = scalar_lea.vmem %s0, %s293
      %s295 = sadd.s32 %s22, %s23
      %p296 = scmp.lt.s32.totalorder %s21, 1
      %s297 = scalar_select %p296, %s21, 1
      %s298 = scalar_lea.vmem %s2, %s297
      %p299 = scmp.lt.s32.totalorder %s21, 1
      %s300 = scalar_select %p299, %s21, 1
      %p301 = scmp.lt.s32.totalorder %s22, 4
      %s302 = scalar_select %p301, %s22, 4
      %s303 = smul.addr %s300, 5
      %s304 = sadd.s32 %s302, %s303
      %s305 = smul.addr %s304, 4
      %s306 = scalar_lea.vmem %s4, %s305
      %p307 = scmp.lt.s32.totalorder %s21, 1
      %s308 = scalar_select %p307, %s21, 1
      %p309 = scmp.lt.s32.totalorder %s22, 4
      %s310 = scalar_select %p309, %s22, 4
      %s311 = smul.addr %s308, 5
      %s312 = sadd.s32 %s310, %s311
      %s313 = smul.addr %s312, 4
      %s314 = scalar_lea.vmem %s5, %s313
      %p316 = scmp.eq.s32.totalorder %s23, 0
      // Predicated region
      $region41: #{tudu_forward.10} parent=39 // pred_check
        %p317 = pneg %p316
      $region42: #{tudu_forward.10} parent=39 // pred_check_branch
        %319 = sbr.rel (%p317) target = $region44
      $region43: #{tudu_forward.10} parent=39 // pred_region
        %vm320 = vcmask 520192
        %321 = vst.msk [vmem:[#allocation2] sm:$0x1f] %vm320, 0.0
      $region44: #{tudu_forward.10} parent=39 // pred_fallthru
        _
      %v322 = vld [vmem:[%s294] sm:$0xf]
      %v323 = vunpack.c.l.bf16 %v322
      %v324 = vld [vmem:[%s298] sm:$0x1]
      %v326 = vlaneseq
      %v327 = vshrl.u32 %v326, 7
      %v328 = vsub.s32 0, %v327
      %v329 = vrot.slane %v324, %v328
      %v331 = vmul.f32 %v323, %v329
      %v332 = vpack.c.bf16 %v331, %v331
      %s333 = smul.u32 %s23, 3
      %s334 = smul.u32 %s333, 8
      %s335 = smul.addr %s334, 4
      %s336 = scalar_lea.vmem %s1, %s335
      %v337 = vld [vmem:[%s336] sm:$0xf]
      %v338 = vld [vmem:[%s336 + $0x4] sm:$0xf]
      %v339 = vld [vmem:[%s336 + $0x8] sm:$0xf]
      %v340 = vld [vmem:[%s336 + $0xc] sm:$0xf]
      %v341 = vld [vmem:[%s336 + $0x10] sm:$0xf]
      %v342 = vld [vmem:[%s336 + $0x14] sm:$0xf]
      %v343 = vld [vmem:[%s336 + $0x18] sm:$0xf]
      %v344 = vld [vmem:[%s336 + $0x1c] sm:$0xf]
      %s345 = sadd.s32 %s333, 1
      %s346 = smul.u32 %s345, 8
      %s347 = smul.addr %s346, 4
      %s348 = scalar_lea.vmem %s1, %s347
      %v349 = vld [vmem:[%s348] sm:$0xf]
      %v350 = vld [vmem:[%s348 + $0x4] sm:$0xf]
      %v351 = vld [vmem:[%s348 + $0x8] sm:$0xf]
      %v352 = vld [vmem:[%s348 + $0xc] sm:$0xf]
      %v353 = vld [vmem:[%s348 + $0x10] sm:$0xf]
      %v354 = vld [vmem:[%s348 + $0x14] sm:$0xf]
      %v355 = vld [vmem:[%s348 + $0x18] sm:$0xf]
      %v356 = vld [vmem:[%s348 + $0x1c] sm:$0xf]
      %v358 = vshrl.u32 %v332, 16
      %v360 = vshll.u32 %v332, 16
      %v362 = vrot.slane %v360, 1
      %v363 = vor.u32 %v358, %v362
      %v372 = vunpack.c.l.b16 %v349
      %v373 = vunpack.c.l.b16 %v350
      %v374 = vunpack.c.l.b16 %v351
      %v375 = vunpack.c.l.b16 %v352
      %v376 = vunpack.c.l.b16 %v353
      %v377 = vunpack.c.l.b16 %v354
      %v378 = vunpack.c.l.b16 %v355
      %v379 = vunpack.c.l.b16 %v356
      %v380 = vpack.c.b16 %v373, %v372
      %v381 = vpack.c.b16 %v375, %v374
      %v382 = vpack.c.b16 %v377, %v376
      %v383 = vpack.c.b16 %v379, %v378
      %vm388 = vcmask 523264
      %v390 = vsel %vm388, %v363, 0
      %392 = vmatprep.subr.bf16.mxu0 0
      %393 = vmatpush1.bf16.msra.mxu0 0
      %394 = vmatprep.subr.bf16.mxu0 0
      %395 = vmatpush1.bf16.msra.mxu0 0
      %396 = vmatprep.subr.bf16.mxu0 0
      %397 = vmatpush1.bf16.msra.mxu0 0
      %398 = vmatprep.subr.bf16.mxu0 0
      %399 = vmatpush1.bf16.msra.mxu0 0
      %400 = vmatprep.subr.bf16.mxu0 0
      %401 = vmatpush1.bf16.msra.mxu0 %v383
      %402 = vmatprep.subr.bf16.mxu0 0
      %403 = vmatpush1.bf16.msra.mxu0 %v382
      %404 = vmatprep.subr.bf16.mxu0 0
      %405 = vmatpush1.bf16.msra.mxu0 %v381
      %406 = vmatprep.subr.bf16.mxu0 0
      %407 = vmatpush1.bf16.msra.mxu0 %v380
      %408 = vmatprep.subr.bf16.mxu0 0
      %409 = vmatpush2.bf16.msra.mxu0 0
      %410 = vmatprep.subr.bf16.mxu0 0
      %411 = vmatpush2.bf16.msra.mxu0 0
      %412 = vmatprep.subr.bf16.mxu0 0
      %413 = vmatpush2.bf16.msra.mxu0 0
      %414 = vmatprep.subr.bf16.mxu0 0
      %415 = vmatpush2.bf16.msra.mxu0 0
      %416 = vmatprep.subr.bf16.mxu0 0
      %417 = vmatpush2.bf16.msra.mxu0 0
      %418 = vmatprep.subr.bf16.mxu0 0
      %419 = vmatpush2.bf16.msra.mxu0 0
      %420 = vmatprep.subr.bf16.mxu0 0
      %421 = vmatpush2.bf16.msra.mxu0 0
      %422 = vmatprep.subr.bf16.mxu0 0
      %423 = vmatpush2.bf16.msra.mxu0 0
      %424 = vmatprep.mubr.bf16.mxu0 0
      %425 = vmatmul.mubr.bf16.gmra.mxu0 %v390
      %v426 = vpop.f32.mrf.mxu0
      %v427 = vadd.f32 0.0, %v426
      %v428 = vpop.f32.mrf.mxu0
      %v429 = vpop.f32.mrf.mxu0
      %v430 = vpop.f32.mrf.mxu0
      %431 = vdwg.mxu0
      %v440 = vunpack.c.l.b16 %v337
      %v441 = vunpack.c.l.b16 %v338
      %v442 = vunpack.c.l.b16 %v339
      %v443 = vunpack.c.l.b16 %v340
      %v444 = vunpack.c.l.b16 %v341
      %v445 = vunpack.c.l.b16 %v342
      %v446 = vunpack.c.l.b16 %v343
      %v447 = vunpack.c.l.b16 %v344
      %v448 = vpack.c.b16 %v441, %v440
      %v449 = vpack.c.b16 %v443, %v442
      %v450 = vpack.c.b16 %v445, %v444
      %v451 = vpack.c.b16 %v447, %v446
      %v456 = vsel %vm388, %v332, 0
      %458 = vmatprep.subr.bf16.mxu0 0
      %459 = vmatpush1.bf16.msra.mxu0 0
      %460 = vmatprep.subr.bf16.mxu0 0
      %461 = vmatpush1.bf16.msra.mxu0 0
      %462 = vmatprep.subr.bf16.mxu0 0
      %463 = vmatpush1.bf16.msra.mxu0 0
      %464 = vmatprep.subr.bf16.mxu0 0
      %465 = vmatpush1.bf16.msra.mxu0 0
      %466 = vmatprep.subr.bf16.mxu0 0
      %467 = vmatpush1.bf16.msra.mxu0 %v451
      %468 = vmatprep.subr.bf16.mxu0 0
      %469 = vmatpush1.bf16.msra.mxu0 %v450
      %470 = vmatprep.subr.bf16.mxu0 0
      %471 = vmatpush1.bf16.msra.mxu0 %v449
      %472 = vmatprep.subr.bf16.mxu0 0
      %473 = vmatpush1.bf16.msra.mxu0 %v448
      %474 = vmatprep.subr.bf16.mxu0 0
      %475 = vmatpush2.bf16.msra.mxu0 0
      %476 = vmatprep.subr.bf16.mxu0 0
      %477 = vmatpush2.bf16.msra.mxu0 0
      %478 = vmatprep.subr.bf16.mxu0 0
      %479 = vmatpush2.bf16.msra.mxu0 0
      %480 = vmatprep.subr.bf16.mxu0 0
      %481 = vmatpush2.bf16.msra.mxu0 0
      %482 = vmatprep.subr.bf16.mxu0 0
      %483 = vmatpush2.bf16.msra.mxu0 0
      %484 = vmatprep.subr.bf16.mxu0 0
      %485 = vmatpush2.bf16.msra.mxu0 0
      %486 = vmatprep.subr.bf16.mxu0 0
      %487 = vmatpush2.bf16.msra.mxu0 0
      %488 = vmatprep.subr.bf16.mxu0 0
      %489 = vmatpush2.bf16.msra.mxu0 0
      %490 = vmatprep.mubr.bf16.mxu0 0
      %491 = vmatmul.mubr.bf16.gmra.mxu0 %v456
      %v492 = vpop.f32.mrf.mxu0
      %v493 = vadd.f32 %v427, %v492
      %v494 = vpop.f32.mrf.mxu0
      %v495 = vpop.f32.mrf.mxu0
      %v496 = vpop.f32.mrf.mxu0
      %497 = vdwg.mxu0
      %s498 = sadd.s32 %s333, 2
      %s499 = smul.u32 %s498, 8
      %s500 = smul.addr %s499, 4
      %s501 = scalar_lea.vmem %s1, %s500
      %v502 = vld [vmem:[%s501] sm:$0xf]
      %v503 = vld [vmem:[%s501 + $0x4] sm:$0xf]
      %v504 = vld [vmem:[%s501 + $0x8] sm:$0xf]
      %v505 = vld [vmem:[%s501 + $0xc] sm:$0xf]
      %v506 = vld [vmem:[%s501 + $0x10] sm:$0xf]
      %v507 = vld [vmem:[%s501 + $0x14] sm:$0xf]
      %v508 = vld [vmem:[%s501 + $0x18] sm:$0xf]
      %v509 = vld [vmem:[%s501 + $0x1c] sm:$0xf]
      %v511 = vrot.slane %v332, 1
      %v520 = vunpack.c.l.b16 %v502
      %v521 = vunpack.c.l.b16 %v503
      %v522 = vunpack.c.l.b16 %v504
      %v523 = vunpack.c.l.b16 %v505
      %v524 = vunpack.c.l.b16 %v506
      %v525 = vunpack.c.l.b16 %v507
      %v526 = vunpack.c.l.b16 %v508
      %v527 = vunpack.c.l.b16 %v509
      %v528 = vpack.c.b16 %v521, %v520
      %v529 = vpack.c.b16 %v523, %v522
      %v530 = vpack.c.b16 %v525, %v524
      %v531 = vpack.c.b16 %v527, %v526
      %v537 = vsel %vm388, %v511, 0
      %539 = vmatprep.subr.bf16.mxu0 0
      %540 = vmatpush1.bf16.msra.mxu0 0
      %541 = vmatprep.subr.bf16.mxu0 0
      %542 = vmatpush1.bf16.msra.mxu0 0
      %543 = vmatprep.subr.bf16.mxu0 0
      %544 = vmatpush1.bf16.msra.mxu0 0
      %545 = vmatprep.subr.bf16.mxu0 0
      %546 = vmatpush1.bf16.msra.mxu0 0
      %547 = vmatprep.subr.bf16.mxu0 0
      %548 = vmatpush1.bf16.msra.mxu0 %v531
      %549 = vmatprep.subr.bf16.mxu0 0
      %550 = vmatpush1.bf16.msra.mxu0 %v530
      %551 = vmatprep.subr.bf16.mxu0 0
      %552 = vmatpush1.bf16.msra.mxu0 %v529
      %553 = vmatprep.subr.bf16.mxu0 0
      %554 = vmatpush1.bf16.msra.mxu0 %v528
      %555 = vmatprep.subr.bf16.mxu0 0
      %556 = vmatpush2.bf16.msra.mxu0 0
      %557 = vmatprep.subr.bf16.mxu0 0
      %558 = vmatpush2.bf16.msra.mxu0 0
      %559 = vmatprep.subr.bf16.mxu0 0
      %560 = vmatpush2.bf16.msra.mxu0 0
      %561 = vmatprep.subr.bf16.mxu0 0
      %562 = vmatpush2.bf16.msra.mxu0 0
      %563 = vmatprep.subr.bf16.mxu0 0
      %564 = vmatpush2.bf16.msra.mxu0 0
      %565 = vmatprep.subr.bf16.mxu0 0
      %566 = vmatpush2.bf16.msra.mxu0 0
      %567 = vmatprep.subr.bf16.mxu0 0
      %568 = vmatpush2.bf16.msra.mxu0 0
      %569 = vmatprep.subr.bf16.mxu0 0
      %570 = vmatpush2.bf16.msra.mxu0 0
      %571 = vmatprep.mubr.bf16.mxu0 0
      %572 = vmatmul.mubr.bf16.gmra.mxu0 %v537
      %v573 = vpop.f32.mrf.mxu0
      %v574 = vadd.f32 0.0, %v573
      %v575 = vpop.f32.mrf.mxu0
      %v576 = vpop.f32.mrf.mxu0
      %v577 = vpop.f32.mrf.mxu0
      %578 = vdwg.mxu0
      %v579 = vadd.f32 %v493, %v574
      %v580 = vld [vmem:[#allocation2] sm:$0x1f]
      %v581 = vadd.f32 %v580, %v579
      %vm582 = vcmask 520192
      %583 = vst.msk [vmem:[#allocation2] sm:$0x1f] %vm582, %v581
      %p584 = scmp.eq.s32.totalorder %s23, 2
      // Predicated region
      $region45: #{tudu_forward.10} parent=39 // pred_check
        %p585 = pneg %p584
      $region46: #{tudu_forward.10} parent=39 // pred_check_branch
        %587 = sbr.rel (%p585) target = $region48
      $region47: #{tudu_forward.10} parent=39 // pred_region
        %v588 = vld [vmem:[#allocation2] sm:$0x1f]
        %v589 = vld [vmem:[%s3] sm:$0x1]
        %v591 = vlaneseq
        %v592 = vshrl.u32 %v591, 7
        %v593 = vsub.s32 0, %v592
        %v594 = vrot.slane %v589, %v593
        %v596 = vadd.f32 %v588, %v594
        %v597 = vld [vmem:[%s306] sm:$0x7]
        %v598 = vunpack.c.l.bf16 %v597
        %v599 = vadd.f32 %v596, %v598
        %v600 = vmax.f32 %v599, 0.0
        %v601 = vpack.c.bf16 %v600, %v600
        %vm602 = vcmask 518144
        %vm603 = vsmask.f32 2304
        %vm604 = vmand %vm602, %vm603
        %v605 = vld [vmem:[%s314] sm:$0x7]
        %v606 = vsel %vm604, %v601, %v605
        %607 = vst [vmem:[%s314] sm:$0x7] %v606
      $region48: #{tudu_forward.10} parent=39 // pred_fallthru
        _
      %p608 = scmp.lt.s32.totalorder %s21, 1
      %s609 = scalar_select %p608, %s21, 1
      %p610 = scmp.lt.s32.totalorder %s22, 4
      %s611 = scalar_select %p610, %s22, 4
      %s612 = smul.addr %s609, 5
      %s613 = sadd.s32 %s611, %s612
      %s614 = smul.addr %s613, 4
      %s615 = scalar_lea.vmem %s5, %s614
      // Predicated region
      $region49: #{tudu_forward.10} parent=39 // pred_check
        %p616 = pneg %p181
      $region50: #{tudu_forward.10} parent=39 // pred_check_branch
        %618 = sbr.rel (%p616) target = $region52
      $region51: #{tudu_forward.10} parent=39 // pred_region
        _
      $region52: #{tudu_forward.10} parent=39 // pred_fallthru
        _
    $region40: #{tudu_forward.10} parent=5 // pred_fallthru
      _
    %p619 = scmp.le.s32.totalorder 2, %s11
    // Predicated region
    $region53: #{tudu_forward.10} parent=5 // pred_check
      %p620 = pneg %p619
    $region54: #{tudu_forward.10} parent=5 // pred_check_branch
      %622 = sbr.rel (%p620) target = $region56
    $region55: #{tudu_forward.10} parent=5 // pred_region
      %s623 = ssub.s32 %s11, 2
      // Predicated region
      $region57: #{tudu_forward.10} parent=55 // pred_check
        %p624 = pneg %p187
      $region58: #{tudu_forward.10} parent=55 // pred_check_branch
        %626 = sbr.rel (%p624) target = $region60
      $region59: #{tudu_forward.10} parent=55 // pred_region
        %p627 = scmp.lt.s32.totalorder %s24, 1
        %s628 = scalar_select %p627, %s24, 1
        %p629 = scmp.lt.s32.totalorder %s25, 4
        %s630 = scalar_select %p629, %s25, 4
        %s631 = smul.addr %s628, 5
        %s632 = sadd.s32 %s630, %s631
        %s633 = smul.addr %s632, 4
        %s634 = scalar_lea.vmem %s5, %s633
      $region60: #{tudu_forward.10} parent=55 // pred_fallthru
        _
    $region56: #{tudu_forward.10} parent=5 // pred_fallthru
      _
  $region6: #{tudu_forward.10} parent=0 // loop_footer
    %s15 = sadd.s32 1, %s11
  $region7: #{tudu_forward.10} parent=0 // loop_footer_branch
    %10 = sbr.rel target = $region3
  $region8: #{tudu_forward.10} parent=0 // loop_exit
    _

// kernel: tudu_forward.11
$region0: #{tudu_forward.11}
  #allocation0 [shape = 'u32[]', space=smem, size = 0x4, offset = 0x4, fixed_abs, tag = 'smem constant byte address 0x4 - core index']
  #allocation1 [shape = 'u32[144,128]{1,0:T(1,128)}', space=vmem, size = 0x12000, scoped, tag = 'internal scratch']
  #allocation2 [shape = 'f32[1,64]{1,0:T(1,128)}', space=vmem, size = 0x200, scoped, tag = 'scratch operand']
  #allocation3 [shape = 'f32[1,64]{1,0:T(1,128)}', space=vmem, size = 0x200, scoped, tag = 'scratch operand']
  %s0 = inlined_call_operand.vmem [shape: bf16[2,25,64], index: 0, kind: input, shape index: {}]
  %s1 = inlined_call_operand.vmem [shape: bf16[25,64], index: 1, kind: input, shape index: {}]
  %s2 = inlined_call_operand.vmem [shape: f32[64,4], index: 2, kind: input, shape index: {}]
  %s3 = inlined_call_operand.vmem [shape: f32[4,64], index: 3, kind: input, shape index: {}]
  %s4 = inlined_call_operand.vmem [shape: f32[2,1,64], index: 4, kind: output, shape index: {}]
  %s5 = sld [smem:[#allocation0]]
  $region57: #{tudu_forward.11} parent=0
    _
  %s7 = ssub.s32 1, %s5
  %s8 = scalar_select 0, %s7, %s5
  loop: start=0, step=1, limit=4
  $region2: #{tudu_forward.11} parent=0 // loop_pre_header
    _
  $region3: #{tudu_forward.11} parent=0 // loop_header
    %s10 = sphi 0, %s14
    %p11 = scmp.ge.s32.totalorder %s10, 4
    %s17 = sphi 0, %s29
    %s18 = sphi 0, %s25
    %s19 = sphi 0, %s17
    %s20 = sphi 0, %s18
    %s21 = sphi 0, %s19
    %s22 = sphi 0, %s20
    %s34 = sphi 0, %s36
    %s37 = sphi 0, %s34
    %s38 = sphi 0, %s37
    %s54 = sphi 0, %s38
    %s60 = sphi 0, %s62
    %s63 = sphi 0, %s60
    %s64 = sphi 0, %s63
    %s80 = sphi 0, %s64
    %s84 = sphi 0, %s84
    %s86 = sphi 0, %s84
    %s87 = sphi 0, %s86
    %s101 = sphi 0, %s87
    %s105 = sphi 0, %s105
    %s107 = sphi 0, %s105
    %s108 = sphi 0, %s107
    %s122 = sphi 0, %s108
    %s128 = sphi 0, %s130
    %s131 = sphi 0, %s128
    %s132 = sphi 0, %s131
    %s148 = sphi 0, %s132
  $region4: #{tudu_forward.11} parent=0 // loop_header_branch
    %13 = sbr.rel (%p11) target = $region8
  $region5: #{tudu_forward.11} parent=0 // loop_body
    %s15 = ssub.s32 %s10, 1
    %s16 = ssub.s32 %s10, 2
    %s23 = sadd.s32 1, %s18
    %p24 = scmp.ge.s32.totalorder %s23, 1
    %s25 = scalar_select %p24, 0, %s23
    %s26 = sadd.s32 1, %s17
    %s27 = scalar_select %p24, %s26, %s17
    %p28 = scmp.ge.s32.totalorder %s27, 2
    %s29 = scalar_select %p28, 0, %s27
    %s30 = ssub.s32 %s17, %s29
    %s31 = ssub.s32 %s18, %s25
    %s32 = sor.u32 %s30, %s31
    %p33 = scmp.eq.s32.totalorder %s32, 0
    %s35 = sadd.s32 %s34, 1
    %s36 = scalar_select %p33, %s34, %s35
    %p39 = pneg %p33
    %p40 = scmp.eq.s32.totalorder %s10, 1
    %p41 = por %p39, %p40
    %p42 = scmp.ne.s32.totalorder %s34, %s37
    %p43 = scmp.eq.s32.totalorder %s10, 0
    %p44 = por %p42, %p43
    %p45 = scmp.ne.s32.totalorder %s34, %s37
    %p46 = scmp.eq.s32.totalorder %s15, 1
    %p47 = por %p45, %p46
    %p48 = scmp.ne.s32.totalorder %s37, %s38
    %p49 = scmp.eq.s32.totalorder %s15, 0
    %p50 = por %p48, %p49
    %p51 = scmp.ne.s32.totalorder %s37, %s38
    %p52 = scmp.eq.s32.totalorder %s16, 1
    %p53 = por %p51, %p52
    %p55 = scmp.ne.s32.totalorder %s38, %s54
    %p56 = scmp.eq.s32.totalorder %s16, 0
    %p57 = por %p55, %p56
    %s58 = ssub.s32 %s18, %s25
    %p59 = scmp.eq.s32.totalorder %s58, 0
    %s61 = sadd.s32 %s60, 1
    %s62 = scalar_select %p59, %s60, %s61
    %p65 = pneg %p59
    %p66 = scmp.eq.s32.totalorder %s10, 1
    %p67 = por %p65, %p66
    %p68 = scmp.ne.s32.totalorder %s60, %s63
    %p69 = scmp.eq.s32.totalorder %s10, 0
    %p70 = por %p68, %p69
    %p71 = scmp.ne.s32.totalorder %s60, %s63
    %p72 = scmp.eq.s32.totalorder %s15, 1
    %p73 = por %p71, %p72
    %p74 = scmp.ne.s32.totalorder %s63, %s64
    %p75 = scmp.eq.s32.totalorder %s15, 0
    %p76 = por %p74, %p75
    %p77 = scmp.ne.s32.totalorder %s63, %s64
    %p78 = scmp.eq.s32.totalorder %s16, 1
    %p79 = por %p77, %p78
    %p81 = scmp.ne.s32.totalorder %s64, %s80
    %p82 = scmp.eq.s32.totalorder %s16, 0
    %p83 = por %p81, %p82
    %s85 = sadd.s32 %s84, 1
    %p88 = scmp.eq.s32.totalorder %s10, 1
    %p89 = scmp.ne.s32.totalorder %s84, %s86
    %p90 = scmp.eq.s32.totalorder %s10, 0
    %p91 = por %p89, %p90
    %p92 = scmp.ne.s32.totalorder %s84, %s86
    %p93 = scmp.eq.s32.totalorder %s15, 1
    %p94 = por %p92, %p93
    %p95 = scmp.ne.s32.totalorder %s86, %s87
    %p96 = scmp.eq.s32.totalorder %s15, 0
    %p97 = por %p95, %p96
    %p98 = scmp.ne.s32.totalorder %s86, %s87
    %p99 = scmp.eq.s32.totalorder %s16, 1
    %p100 = por %p98, %p99
    %p102 = scmp.ne.s32.totalorder %s87, %s101
    %p103 = scmp.eq.s32.totalorder %s16, 0
    %p104 = por %p102, %p103
    %s106 = sadd.s32 %s105, 1
    %p109 = scmp.eq.s32.totalorder %s10, 1
    %p110 = scmp.ne.s32.totalorder %s105, %s107
    %p111 = scmp.eq.s32.totalorder %s10, 0
    %p112 = por %p110, %p111
    %p113 = scmp.ne.s32.totalorder %s105, %s107
    %p114 = scmp.eq.s32.totalorder %s15, 1
    %p115 = por %p113, %p114
    %p116 = scmp.ne.s32.totalorder %s107, %s108
    %p117 = scmp.eq.s32.totalorder %s15, 0
    %p118 = por %p116, %p117
    %p119 = scmp.ne.s32.totalorder %s107, %s108
    %p120 = scmp.eq.s32.totalorder %s16, 1
    %p121 = por %p119, %p120
    %p123 = scmp.ne.s32.totalorder %s108, %s122
    %p124 = scmp.eq.s32.totalorder %s16, 0
    %p125 = por %p123, %p124
    %s126 = ssub.s32 %s17, %s29
    %p127 = scmp.eq.s32.totalorder %s126, 0
    %s129 = sadd.s32 %s128, 1
    %s130 = scalar_select %p127, %s128, %s129
    %p133 = pneg %p127
    %p134 = scmp.eq.s32.totalorder %s10, 1
    %p135 = por %p133, %p134
    %p136 = scmp.ne.s32.totalorder %s128, %s131
    %p137 = scmp.eq.s32.totalorder %s10, 0
    %p138 = por %p136, %p137
    %p139 = scmp.ne.s32.totalorder %s128, %s131
    %p140 = scmp.eq.s32.totalorder %s15, 1
    %p141 = por %p139, %p140
    %p142 = scmp.ne.s32.totalorder %s131, %s132
    %p143 = scmp.eq.s32.totalorder %s15, 0
    %p144 = por %p142, %p143
    %p145 = scmp.ne.s32.totalorder %s131, %s132
    %p146 = scmp.eq.s32.totalorder %s16, 1
    %p147 = por %p145, %p146
    %p149 = scmp.ne.s32.totalorder %s132, %s148
    %p150 = scmp.eq.s32.totalorder %s16, 0
    %p151 = por %p149, %p150
    %p152 = scmp.le.s32.totalorder 1, %s10
    %p153 = scmp.lt.s32.totalorder %s10, 3
    %p154 = pnand %p152, %p153
    %p155 = pneg %p154
    // Predicated region
    $region9: #{tudu_forward.11} parent=5 // pred_check
      _
    $region10: #{tudu_forward.11} parent=5 // pred_check_branch
      %157 = sbr.rel (%p154) target = $region12
    $region11: #{tudu_forward.11} parent=5 // pred_region
      %s158 = ssub.s32 %s10, 1
      // Predicated region
      $region13: #{tudu_forward.11} parent=11 // pred_check
        %p159 = pneg %p76
      $region14: #{tudu_forward.11} parent=11 // pred_check_branch
        %161 = sbr.rel (%p159) target = $region16
      $region15: #{tudu_forward.11} parent=11 // pred_region
        %s162 = smul.u32 4, %s20
        %p163 = scmp.lt.s32.totalorder %s162, 3
        %s164 = scalar_select %p163, %s162, 3
        %s165 = smul.addr %s164, 4
        %s166 = scalar_lea.vmem %s1, %s165
        %s167 = smul.u32 4, %s20
      $region16: #{tudu_forward.11} parent=11 // pred_fallthru
        _
      // Predicated region
      $region17: #{tudu_forward.11} parent=11 // pred_check
        %p168 = pneg %p97
      $region18: #{tudu_forward.11} parent=11 // pred_check_branch
        %170 = sbr.rel (%p168) target = $region20
      $region19: #{tudu_forward.11} parent=11 // pred_region
        _
      $region20: #{tudu_forward.11} parent=11 // pred_fallthru
        _
      // Predicated region
      $region21: #{tudu_forward.11} parent=11 // pred_check
        %p171 = pneg %p118
      $region22: #{tudu_forward.11} parent=11 // pred_check_branch
        %173 = sbr.rel (%p171) target = $region24
      $region23: #{tudu_forward.11} parent=11 // pred_region
        _
      $region24: #{tudu_forward.11} parent=11 // pred_fallthru
        _
    $region12: #{tudu_forward.11} parent=5 // pred_fallthru
      _
    %p174 = scmp.lt.s32.totalorder %s10, 2
    // Predicated region
    $region25: #{tudu_forward.11} parent=5 // pred_check
      %p175 = pneg %p174
    $region26: #{tudu_forward.11} parent=5 // pred_check_branch
      %177 = sbr.rel (%p175) target = $region28
    $region27: #{tudu_forward.11} parent=5 // pred_region
      // Predicated region
      $region29: #{tudu_forward.11} parent=27 // pred_check
        %p178 = pneg %p44
      $region30: #{tudu_forward.11} parent=27 // pred_check_branch
        %180 = sbr.rel (%p178) target = $region32
      $region31: #{tudu_forward.11} parent=27 // pred_region
        %s181 = smul.u32 4, %s18
        %p182 = scmp.lt.s32.totalorder %s17, 1
        %s183 = scalar_select %p182, %s17, 1
        %p184 = scmp.lt.s32.totalorder %s181, 3
        %s185 = scalar_select %p184, %s181, 3
        %s186 = smul.addr %s183, 4
        %s187 = sadd.s32 %s185, %s186
        %s188 = smul.addr %s187, 4
        %s189 = scalar_lea.vmem %s0, %s188
        %s190 = smul.u32 4, %s18
      $region32: #{tudu_forward.11} parent=27 // pred_fallthru
        _
    $region28: #{tudu_forward.11} parent=5 // pred_fallthru
      _
    %p191 = scmp.le.s32.totalorder 1, %s10
    %p192 = scmp.lt.s32.totalorder %s10, 3
    %p193 = pnand %p191, %p192
    %p194 = pneg %p193
    // Predicated region
    $region33: #{tudu_forward.11} parent=5 // pred_check
      _
    $region34: #{tudu_forward.11} parent=5 // pred_check_branch
      %196 = sbr.rel (%p193) target = $region36
    $region35: #{tudu_forward.11} parent=5 // pred_region
      %s197 = ssub.s32 %s10, 1
      %s198 = smul.u32 4, %s20
      %p199 = scmp.lt.s32.totalorder %s19, 1
      %s200 = scalar_select %p199, %s19, 1
      %p201 = scmp.lt.s32.totalorder %s198, 3
      %s202 = scalar_select %p201, %s198, 3
      %s203 = smul.addr %s200, 4
      %s204 = sadd.s32 %s202, %s203
      %s205 = smul.addr %s204, 4
      %s206 = scalar_lea.vmem %s0, %s205
      %p207 = pneg %p50
      %p208 = pneg %p47
      %s209 = smul.u32 4, %s20
      %p210 = scmp.lt.s32.totalorder %s209, 3
      %s211 = scalar_select %p210, %s209, 3
      %s212 = smul.addr %s211, 4
      %s213 = scalar_lea.vmem %s1, %s212
      %p214 = pneg %p76
      %p215 = pneg %p73
      %p216 = pneg %p97
      %p217 = pneg %p94
      %p218 = pneg %p118
      %p219 = pneg %p115
      %p220 = pneg %p144
      %p221 = pneg %p141
      %p222 = scmp.lt.s32.totalorder %s19, 1
      %s223 = scalar_select %p222, %s19, 1
      %s224 = scalar_lea.vmem %s4, %s223
      %s225 = smul.u32 4, %s20
      %p226 = scmp.lt.s32.totalorder %s19, 1
      %s227 = scalar_select %p226, %s19, 1
      %p228 = scmp.lt.s32.totalorder %s225, 3
      %s229 = scalar_select %p228, %s225, 3
      %s230 = smul.addr %s227, 4
      %s231 = sadd.s32 %s229, %s230
      %s232 = smul.addr %s231, 4
      %s233 = scalar_lea.vmem %s0, %s232
      %s234 = smul.u32 4, %s20
      %s235 = smul.u32 4, %s20
      %p236 = scmp.lt.s32.totalorder %s235, 3
      %s237 = scalar_select %p236, %s235, 3
      %s238 = smul.addr %s237, 4
      %s239 = scalar_lea.vmem %s1, %s238
      %s240 = smul.u32 4, %s20
      %p241 = scmp.lt.s32.totalorder %s19, 1
      %s242 = scalar_select %p241, %s19, 1
      %s243 = scalar_lea.vmem %s4, %s242
      %p244 = scmp.eq.s32.totalorder %s20, 0
      // Predicated region
      $region37: #{tudu_forward.11} parent=35 // pred_check
        %p245 = pneg %p244
      $region38: #{tudu_forward.11} parent=35 // pred_check_branch
        %247 = sbr.rel (%p245) target = $region40
      $region39: #{tudu_forward.11} parent=35 // pred_region
        %vm248 = vcmask 516096
        %249 = vst.msk [vmem:[#allocation2] sm:$0x1] %vm248, 0.0
        %250 = vst.msk [vmem:[#allocation3] sm:$0x1] %vm248, 0.0
      $region40: #{tudu_forward.11} parent=35 // pred_fallthru
        _
      %v251 = vld [vmem:[%s233] sm:$0xf]
      %v252 = vld [vmem:[%s233 + $0x4] sm:$0xf]
      %v253 = vld [vmem:[%s233 + $0x8] sm:$0xf]
      %v254 = vld [vmem:[%s233 + $0xc] sm:$0x1]
      %v255 = vunpack.c.l.bf16 %v251
      %v256 = vunpack.c.l.bf16 %v252
      %v257 = vunpack.c.l.bf16 %v253
      %v258 = vunpack.c.l.bf16 %v254
      %v259 = vld [vmem:[%s239] sm:$0xf]
      %v260 = vld [vmem:[%s239 + $0x4] sm:$0xf]
      %v261 = vld [vmem:[%s239 + $0x8] sm:$0xf]
      %v262 = vld [vmem:[%s239 + $0xc] sm:$0x1]
      %v263 = vunpack.c.l.bf16 %v259
      %v264 = vunpack.c.l.bf16 %v260
      %v265 = vunpack.c.l.bf16 %v261
      %v266 = vunpack.c.l.bf16 %v262
      %s267 = smul.u32 %s20, 25
      %v268 = vlaneseq
      %v269 = vshrl.u32 %v268, 7
      %v270 = vadd.s32 %v269, 8
      %v271 = vadd.s32 %v269, 16
      %v272 = vadd.s32 %v269, 24
      %v273 = vstv %s267
      %v274 = vadd.s32 %v273, %v269
      %v275 = vadd.s32 %v273, %v270
      %v276 = vadd.s32 %v273, %v271
      %v277 = vadd.s32 %v273, %v272
      %vm278 = vcmp.lt.s32.totalorder %v274, 25
      %vm279 = vcmp.lt.s32.totalorder %v275, 25
      %vm280 = vcmp.lt.s32.totalorder %v276, 25
      %vm281 = vcmp.lt.s32.totalorder %v277, 25
      %v282 = vld [vmem:[#allocation2] sm:$0x1]
      %v283 = vsel %vm278, 1, 0
      %v284 = vsel %vm279, 1, 0
      %v285 = vsel %vm280, 1, 0
      %v286 = vsel %vm281, 1, 0
      %vm287 = vcmp.eq.s32.totalorder %v283, 1
      %vm288 = vcmp.eq.s32.totalorder %v284, 1
      %vm289 = vcmp.eq.s32.totalorder %v285, 1
      %vm290 = vcmp.eq.s32.totalorder %v286, 1
      %v291 = vsel %vm287, %v255, 0.0
      %v292 = vsel %vm288, %v256, 0.0
      %v293 = vsel %vm289, %v257, 0.0
      %v294 = vsel %vm290, %v258, 0.0
      %vm295 = vcmask 523264
      %v296 = vsel %vm295, %v291, 0.0
      %v297 = vsel %vm295, %v292, 0.0
      %v298 = vadd.f32 %v296, %v297
      %v299 = vsel %vm295, %v293, 0.0
      %v300 = vadd.f32 %v298, %v299
      %vm301 = vcmask 516096
      %v302 = vsel %vm301, %v294, 0.0
      %v303 = vadd.f32 %v300, %v302
      %v304 = vrot.slane %v303, 4
      %v305 = vadd.f32 %v303, %v304
      %v306 = vrot.slane %v305, 2
      %v307 = vadd.f32 %v305, %v306
      %v308 = vrot.slane %v307, 1
      %v309 = vadd.f32 %v307, %v308
      %v310 = vadd.f32 %v282, %v309
      %311 = vst.msk [vmem:[#allocation2] sm:$0x1] %vm301, %v310
      %v312 = vld [vmem:[#allocation3] sm:$0x1]
      %v313 = vmul.f32 %v255, %v263
      %v314 = vmul.f32 %v256, %v264
      %v315 = vmul.f32 %v257, %v265
      %v316 = vmul.f32 %v258, %v266
      %v317 = vsel %vm287, %v313, 0.0
      %v318 = vsel %vm288, %v314, 0.0
      %v319 = vsel %vm289, %v315, 0.0
      %v320 = vsel %vm290, %v316, 0.0
      %v321 = vsel %vm295, %v317, 0.0
      %v322 = vsel %vm295, %v318, 0.0
      %v323 = vadd.f32 %v321, %v322
      %v324 = vsel %vm295, %v319, 0.0
      %v325 = vadd.f32 %v323, %v324
      %v326 = vsel %vm301, %v320, 0.0
      %v327 = vadd.f32 %v325, %v326
      %v328 = vrot.slane %v327, 4
      %v329 = vadd.f32 %v327, %v328
      %v330 = vrot.slane %v329, 2
      %v331 = vadd.f32 %v329, %v330
      %v332 = vrot.slane %v331, 1
      %v333 = vadd.f32 %v331, %v332
      %v334 = vadd.f32 %v312, %v333
      %335 = vst.msk [vmem:[#allocation3] sm:$0x1] %vm301, %v334
      // Predicated region
      $region41: #{tudu_forward.11} parent=35 // pred_check
        %p336 = pneg %p244
      $region42: #{tudu_forward.11} parent=35 // pred_check_branch
        %338 = sbr.rel (%p336) target = $region44
      $region43: #{tudu_forward.11} parent=35 // pred_region
        %v339 = vld [vmem:[#allocation2] sm:$0x1]
        %v340 = vmul.f32 %v339, 0.04
        %v341 = vld [vmem:[%s2] sm:$0xff]
        %v342 = vld [vmem:[%s2 + $0x8] sm:$0xff]
        %v343 = vld [vmem:[%s2 + $0x10] sm:$0xff]
        %v344 = vld [vmem:[%s2 + $0x18] sm:$0xff]
        %v345 = vld [vmem:[%s2 + $0x20] sm:$0xff]
        %v346 = vld [vmem:[%s2 + $0x28] sm:$0xff]
        %v347 = vld [vmem:[%s2 + $0x30] sm:$0xff]
        %v348 = vld [vmem:[%s2 + $0x38] sm:$0xff]
        %v350 = vsel %vm295, %v340, 0
        %352 = vmatprep.subr.mxu0 0.0
        %353 = vmatpush1.msra.mxu0 0.0
        %354 = vmatprep.subr.mxu0 0.0
        %355 = vmatpush1.msra.mxu0 0.0
        %356 = vmatprep.subr.mxu0 0.0
        %357 = vmatpush1.msra.mxu0 0.0
        %358 = vmatprep.subr.mxu0 0.0
        %359 = vmatpush1.msra.mxu0 0.0
        %360 = vmatprep.subr.mxu0 0.0
        %361 = vmatpush1.msra.mxu0 0.0
        %362 = vmatprep.subr.mxu0 0.0
        %363 = vmatpush1.msra.mxu0 0.0
        %364 = vmatprep.subr.mxu0 0.0
        %365 = vmatpush1.msra.mxu0 0.0
        %366 = vmatprep.subr.mxu0 0.0
        %367 = vmatpush1.msra.mxu0 0.0
        %368 = vmatprep.subr.mxu0 0.0
        %369 = vmatpush1.msra.mxu0 %v348
        %370 = vmatprep.subr.mxu0 0.0
        %371 = vmatpush1.msra.mxu0 %v347
        %372 = vmatprep.subr.mxu0 0.0
        %373 = vmatpush1.msra.mxu0 %v346
        %374 = vmatprep.subr.mxu0 0.0
        %375 = vmatpush1.msra.mxu0 %v345
        %376 = vmatprep.subr.mxu0 0.0
        %377 = vmatpush1.msra.mxu0 %v344
        %378 = vmatprep.subr.mxu0 0.0
        %379 = vmatpush1.msra.mxu0 %v343
        %380 = vmatprep.subr.mxu0 0.0
        %381 = vmatpush1.msra.mxu0 %v342
        %382 = vmatprep.subr.mxu0 0.0
        %383 = vmatpush1.msra.mxu0 %v341
        %384 = vmatprep.subr.mxu0 0.0
        %385 = vmatpush2.msra.mxu0 0.0
        %386 = vmatprep.subr.mxu0 0.0
        %387 = vmatpush2.msra.mxu0 0.0
        %388 = vmatprep.subr.mxu0 0.0
        %389 = vmatpush2.msra.mxu0 0.0
        %390 = vmatprep.subr.mxu0 0.0
        %391 = vmatpush2.msra.mxu0 0.0
        %392 = vmatprep.subr.mxu0 0.0
        %393 = vmatpush2.msra.mxu0 0.0
        %394 = vmatprep.subr.mxu0 0.0
        %395 = vmatpush2.msra.mxu0 0.0
        %396 = vmatprep.subr.mxu0 0.0
        %397 = vmatpush2.msra.mxu0 0.0
        %398 = vmatprep.subr.mxu0 0.0
        %399 = vmatpush2.msra.mxu0 0.0
        %400 = vmatprep.subr.mxu0 0.0
        %401 = vmatpush2.msra.mxu0 0.0
        %402 = vmatprep.subr.mxu0 0.0
        %403 = vmatpush2.msra.mxu0 0.0
        %404 = vmatprep.subr.mxu0 0.0
        %405 = vmatpush2.msra.mxu0 0.0
        %406 = vmatprep.subr.mxu0 0.0
        %407 = vmatpush2.msra.mxu0 0.0
        %408 = vmatprep.subr.mxu0 0.0
        %409 = vmatpush2.msra.mxu0 0.0
        %410 = vmatprep.subr.mxu0 0.0
        %411 = vmatpush2.msra.mxu0 0.0
        %412 = vmatprep.subr.mxu0 0.0
        %413 = vmatpush2.msra.mxu0 0.0
        %414 = vmatprep.subr.mxu0 0.0
        %415 = vmatpush2.msra.mxu0 0.0
        %416 = vmatprep.mubr.f32.mxu0 0.0
        %417 = vmatmul.mubr.f32.gmra.mxu0 %v350
        %v418 = vpop.f32.mrf.mxu0
        %v419 = vadd.f32 0.0, %v418
        %v420 = vpop.f32.mrf.mxu0
        %421 = vdwg.mxu0
        %v422 = vmax.f32 %v419, 0.0
        %v423 = vld [vmem:[%s3] sm:$0xf]
        %vm424 = vcmask 31744
        %v426 = vsel %vm424, %v422, 0
        %vm428 = vcmask 1043456
        %v430 = vsel %vm428, %v423, 0
        %432 = vmatprep.subr.mxu0 0.0
        %433 = vmatpush1.msra.mxu0 0.0
        %434 = vmatprep.subr.mxu0 0.0
        %435 = vmatpush1.msra.mxu0 0.0
        %436 = vmatprep.subr.mxu0 0.0
        %437 = vmatpush1.msra.mxu0 0.0
        %438 = vmatprep.subr.mxu0 0.0
        %439 = vmatpush1.msra.mxu0 0.0
        %440 = vmatprep.subr.mxu0 0.0
        %441 = vmatpush1.msra.mxu0 0.0
        %442 = vmatprep.subr.mxu0 0.0
        %443 = vmatpush1.msra.mxu0 0.0
        %444 = vmatprep.subr.mxu0 0.0
        %445 = vmatpush1.msra.mxu0 0.0
        %446 = vmatprep.subr.mxu0 0.0
        %447 = vmatpush1.msra.mxu0 0.0
        %448 = vmatprep.subr.mxu0 0.0
        %449 = vmatpush1.msra.mxu0 0.0
        %450 = vmatprep.subr.mxu0 0.0
        %451 = vmatpush1.msra.mxu0 0.0
        %452 = vmatprep.subr.mxu0 0.0
        %453 = vmatpush1.msra.mxu0 0.0
        %454 = vmatprep.subr.mxu0 0.0
        %455 = vmatpush1.msra.mxu0 0.0
        %456 = vmatprep.subr.mxu0 0.0
        %457 = vmatpush1.msra.mxu0 0.0
        %458 = vmatprep.subr.mxu0 0.0
        %459 = vmatpush1.msra.mxu0 0.0
        %460 = vmatprep.subr.mxu0 0.0
        %461 = vmatpush1.msra.mxu0 0.0
        %462 = vmatprep.subr.mxu0 0.0
        %463 = vmatpush1.msra.mxu0 %v430
        %464 = vmatprep.subr.mxu0 0.0
        %465 = vmatpush2.msra.mxu0 0.0
        %466 = vmatprep.subr.mxu0 0.0
        %467 = vmatpush2.msra.mxu0 0.0
        %468 = vmatprep.subr.mxu0 0.0
        %469 = vmatpush2.msra.mxu0 0.0
        %470 = vmatprep.subr.mxu0 0.0
        %471 = vmatpush2.msra.mxu0 0.0
        %472 = vmatprep.subr.mxu0 0.0
        %473 = vmatpush2.msra.mxu0 0.0
        %474 = vmatprep.subr.mxu0 0.0
        %475 = vmatpush2.msra.mxu0 0.0
        %476 = vmatprep.subr.mxu0 0.0
        %477 = vmatpush2.msra.mxu0 0.0
        %478 = vmatprep.subr.mxu0 0.0
        %479 = vmatpush2.msra.mxu0 0.0
        %480 = vmatprep.subr.mxu0 0.0
        %481 = vmatpush2.msra.mxu0 0.0
        %482 = vmatprep.subr.mxu0 0.0
        %483 = vmatpush2.msra.mxu0 0.0
        %484 = vmatprep.subr.mxu0 0.0
        %485 = vmatpush2.msra.mxu0 0.0
        %486 = vmatprep.subr.mxu0 0.0
        %487 = vmatpush2.msra.mxu0 0.0
        %488 = vmatprep.subr.mxu0 0.0
        %489 = vmatpush2.msra.mxu0 0.0
        %490 = vmatprep.subr.mxu0 0.0
        %491 = vmatpush2.msra.mxu0 0.0
        %492 = vmatprep.subr.mxu0 0.0
        %493 = vmatpush2.msra.mxu0 0.0
        %494 = vmatprep.subr.mxu0 0.0
        %495 = vmatpush2.msra.mxu0 0.0
        %496 = vmatprep.mubr.f32.mxu0 0.0
        %497 = vmatmul.mubr.f32.gmra.mxu0 %v426
        %v498 = vpop.f32.mrf.mxu0
        %v499 = vadd.f32 0.0, %v498
        %v500 = vpop.f32.mrf.mxu0
        %501 = vdwg.mxu0
        %v502 = vxor.u32 %v499, 2147483648
        %v503 = vmul.f32 %v502, 1.442695
        %v504 = vpow.pop %v503
        %v505 = vadd.f32 %v504, 1.0
        %v506 = vrcp.pop %v505
        %v507 = vmul.f32 1.0, %v506
        %v508 = vld [vmem:[#allocation3] sm:$0x1]
        %v509 = vmul.f32 %v508, %v507
        %510 = vst.msk [vmem:[%s243] sm:$0x1] %vm301, %v509
      $region44: #{tudu_forward.11} parent=35 // pred_fallthru
        _
      %p511 = scmp.lt.s32.totalorder %s19, 1
      %s512 = scalar_select %p511, %s19, 1
      %s513 = scalar_lea.vmem %s4, %s512
      // Predicated region
      $region45: #{tudu_forward.11} parent=35 // pred_check
        %p514 = pneg %p141
      $region46: #{tudu_forward.11} parent=35 // pred_check_branch
        %516 = sbr.rel (%p514) target = $region48
      $region47: #{tudu_forward.11} parent=35 // pred_region
        _
      $region48: #{tudu_forward.11} parent=35 // pred_fallthru
        _
    $region36: #{tudu_forward.11} parent=5 // pred_fallthru
      _
    %p517 = scmp.le.s32.totalorder 2, %s10
    // Predicated region
    $region49: #{tudu_forward.11} parent=5 // pred_check
      %p518 = pneg %p517
    $region50: #{tudu_forward.11} parent=5 // pred_check_branch
      %520 = sbr.rel (%p518) target = $region52
    $region51: #{tudu_forward.11} parent=5 // pred_region
      %s521 = ssub.s32 %s10, 2
      // Predicated region
      $region53: #{tudu_forward.11} parent=51 // pred_check
        %p522 = pneg %p147
      $region54: #{tudu_forward.11} parent=51 // pred_check_branch
        %524 = sbr.rel (%p522) target = $region56
      $region55: #{tudu_forward.11} parent=51 // pred_region
        %p525 = scmp.lt.s32.totalorder %s21, 1
        %s526 = scalar_select %p525, %s21, 1
        %s527 = scalar_lea.vmem %s4, %s526
      $region56: #{tudu_forward.11} parent=51 // pred_fallthru
        _
    $region52: #{tudu_forward.11} parent=5 // pred_fallthru
      _
  $region6: #{tudu_forward.11} parent=0 // loop_footer
    %s14 = sadd.s32 1, %s10
  $region7: #{tudu_forward.11} parent=0 // loop_footer_branch
    %9 = sbr.rel target = $region3
  $region8: #{tudu_forward.11} parent=0 // loop_exit
    _

</llo_original>
